<compile_context>
chip_gen: v5e
topology: v5e:2x2
jax: 0.10.0
libtpu: 0.0.40
codegen_flags: <defaults>
</compile_context>

<pallas_src>
import functools

import jax
import jax.numpy as jnp
from jax.experimental import pallas as pl
from jax.experimental.pallas import tpu as pltpu

_HP = jax.lax.Precision.HIGHEST


# ----------------------------------------------------------------------------
# Fused kernel: both LSTM layers + FC head, single invocation, no grid.
# ----------------------------------------------------------------------------
def _stock_lstm_kernel(*refs, num_layers, hidden, seq_len, batch):
    # refs layout: x_tm, (w_ih_t, w_hh_t, b) * num_layers, w_fc_t, b_fc, out
    x_ref = refs[0]
    wfc_ref = refs[1 + 3 * num_layers]
    bfc_ref = refs[2 + 3 * num_layers]
    out_ref = refs[3 + 3 * num_layers]

    B, H, T = batch, hidden, seq_len

    # Hoisted (constant across all layers/steps) activation helpers:
    # lanes [2H, 3H) are the g gate (tanh); all other lanes are sigmoid,
    # computed as sigmoid(z) = 0.5 * (1 + tanh(z/2))  ->  single tanh pass.
    lane = jax.lax.broadcasted_iota(jnp.int32, (B, 4 * H), 1)
    g_mask = (lane >= 2 * H) & (lane < 3 * H)
    pre_scale = jnp.where(g_mask, jnp.float32(1.0), jnp.float32(0.5))  # (B, 4H)

    # layer_in: time-major rows, row t*B + b  ==  (time t, batch b)
    layer_in = x_ref[...]  # (T*B, D_in) — whole sequence, VMEM-resident

    outs = []
    for l in range(num_layers):
        w_ih = refs[1 + 3 * l][...]   # (D_in, 4H)  == W_ih^T
        w_hh = refs[2 + 3 * l][...]   # (H,    4H)  == W_hh^T
        b = refs[3 + 3 * l][...]      # (1,    4H)  == b_ih + b_hh

        # Hoisted input projection: ONE matmul for all T steps, bias folded.
        xproj = jnp.dot(layer_in, w_ih,
                        preferred_element_type=jnp.float32,
                        precision=_HP) + b                     # (T*B, 4H)

        h = jnp.zeros((B, H), jnp.float32)
        c = jnp.zeros((B, H), jnp.float32)
        outs = []
        # T is small & static: full unroll keeps all indices static and lets
        # the scheduler overlap MXU / EUP / VPU work across steps.
        # (For large T: write h_t into a pltpu.VMEM((T*B, H)) scratch and use
        #  lax.fori_loop to bound vreg live ranges.)
        for t in range(T):
            gates = xproj[t * B:(t + 1) * B, :] + jnp.dot(
                h, w_hh, preferred_element_type=jnp.float32, precision=_HP)
            # Single transcendental pass over the packed (B, 4H) gate vreg.
            th = jnp.tanh(gates * pre_scale)
            acts = jnp.where(g_mask, th, 0.5 * (th + 1.0))
            i_g = acts[:, 0 * H:1 * H]
            f_g = acts[:, 1 * H:2 * H]
            g_g = acts[:, 2 * H:3 * H]
            o_g = acts[:, 3 * H:4 * H]
            c = f_g * c + i_g * g_g
            h = o_g * jnp.tanh(c)
            outs.append(h)

        if l + 1 < num_layers:
            # Next layer consumes this layer's full h sequence (stays in VMEM);
            # time-major stack so its hoisted projection is one aligned matmul.
            layer_in = jnp.concatenate(outs, axis=0)           # (T*B, H)

    # FC head on the last time step of the top layer.
    h_last = outs[-1]                                          # (B, H)
    logits = jnp.dot(h_last, wfc_ref[...],
                     preferred_element_type=jnp.float32,
                     precision=_HP) + bfc_ref[...]             # (B, O)
    col = jax.lax.broadcasted_iota(jnp.int32, logits.shape, 1)
    # column 0 -> sigmoid(prob logit), column 1 -> raw change; one dense store.
    out_ref[...] = jnp.where(col == 0, jax.nn.sigmoid(logits), logits)


# ----------------------------------------------------------------------------
# Parameters (PyTorch-style init, pre-transposed for the fused kernel)
# ----------------------------------------------------------------------------
def init_params(key, input_size, hidden_size, num_layers, output_size):
    bound = 1.0 / jnp.sqrt(jnp.float32(hidden_size))
    params = {"layers": []}
    for layer in range(num_layers):
        d_in = input_size if layer == 0 else hidden_size
        key, k1, k2, k3, k4 = jax.random.split(key, 5)
        w_ih = jax.random.uniform(k1, (4 * hidden_size, d_in), jnp.float32, -bound, bound)
        w_hh = jax.random.uniform(k2, (4 * hidden_size, hidden_size), jnp.float32, -bound, bound)
        b_ih = jax.random.uniform(k3, (4 * hidden_size,), jnp.float32, -bound, bound)
        b_hh = jax.random.uniform(k4, (4 * hidden_size,), jnp.float32, -bound, bound)
        params["layers"].append({
            "w_ih_t": w_ih.T,                 # (D_in, 4H)
            "w_hh_t": w_hh.T,                 # (H,    4H)
            "b": (b_ih + b_hh)[None, :],      # (1,    4H)
        })
    key, k5, k6 = jax.random.split(key, 3)
    w_fc = jax.random.uniform(k5, (output_size, hidden_size), jnp.float32, -bound, bound)
    b_fc = jax.random.uniform(k6, (output_size,), jnp.float32, -bound, bound)
    params["w_fc_t"] = w_fc.T                 # (H, O)
    params["b_fc"] = b_fc[None, :]            # (1, O)
    return params


# ----------------------------------------------------------------------------
# Wrapper
# ----------------------------------------------------------------------------
@jax.jit
def stock_lstm_forward(x, params):
    """x: (B, T, input_size), batch_first (same as the PyTorch module)."""
    B, T, D = x.shape
    layers = params["layers"]
    num_layers = len(layers)
    H = layers[0]["w_hh_t"].shape[0]
    O = params["w_fc_t"].shape[1]

    # Time-major flat slab: row t*B + b.  Feeds the hoisted projection as one
    # aligned MXU operand; per-step gate rows are contiguous sublane slices.
    x_tm = jnp.transpose(x.astype(jnp.float32), (1, 0, 2)).reshape(T * B, D)

    flat_inputs = [x_tm]
    for lp in layers:
        flat_inputs += [lp["w_ih_t"], lp["w_hh_t"], lp["b"]]
    flat_inputs += [params["w_fc_t"], params["b_fc"]]

    vmem = pl.BlockSpec(memory_space=pltpu.MemorySpace.VMEM)
    out = pl.pallas_call(
        functools.partial(_stock_lstm_kernel,
                          num_layers=num_layers, hidden=H, seq_len=T, batch=B),
        out_shape=jax.ShapeDtypeStruct((B, O), jnp.float32),
        in_specs=[vmem] * len(flat_inputs),
        out_specs=vmem,
    )(*flat_inputs)

    prob = out[:, 0]
    change = out[:, 1]
    return prob, change


# ----------------------------------------------------------------------------
# Pure-JAX reference (for correctness check)
# ----------------------------------------------------------------------------
def _reference_forward(x, params):
    B, T, _ = x.shape
    H = params["layers"][0]["w_hh_t"].shape[0]
    inputs = [x[:, t, :].astype(jnp.float32) for t in range(T)]
    for lp in params["layers"]:
        h = jnp.zeros((B, H), jnp.float32)
        c = jnp.zeros((B, H), jnp.float32)
        outs = []
        for t in range(T):
            gates = (jnp.dot(inputs[t], lp["w_ih_t"], precision=_HP)
                     + jnp.dot(h, lp["w_hh_t"], precision=_HP) + lp["b"])
            i_g = jax.nn.sigmoid(gates[:, 0 * H:1 * H])
            f_g = jax.nn.sigmoid(gates[:, 1 * H:2 * H])
            g_g = jnp.tanh(gates[:, 2 * H:3 * H])
            o_g = jax.nn.sigmoid(gates[:, 3 * H:4 * H])
            c = f_g * c + i_g * g_g
            h = o_g * jnp.tanh(c)
            outs.append(h)
        inputs = outs
    logits = jnp.dot(inputs[-1], params["w_fc_t"], precision=_HP) + params["b_fc"]
    return jax.nn.sigmoid(logits[:, 0]), logits[:, 1]


# ----------------------------------------------------------------------------
if __name__ == "__main__":
    input_size = 8
    hidden_size = 32
    num_layers = 2
    output_size = 2
    batch = 8
    seq = 8

    key = jax.random.PRNGKey(0)
    key_x, key_p = jax.random.split(key)
    x = jax.random.normal(key_x, (batch, seq, input_size), jnp.float32)
    params = init_params(key_p, input_size, hidden_size, num_layers, output_size)

    prob, change = stock_lstm_forward(x, params)
    jax.block_until_ready((prob, change))

    # shape / sanity checks
    assert prob.shape == (batch,) and change.shape == (batch,)
    assert bool(jnp.all(jnp.isfinite(prob))) and bool(jnp.all(jnp.isfinite(change)))
    assert bool(jnp.all((prob >= 0.0) & (prob <= 1.0)))

    # numerical check against pure-JAX reference
    prob_ref, change_ref = _reference_forward(x, params)
    assert bool(jnp.allclose(prob, prob_ref, atol=1e-4, rtol=1e-4))
    assert bool(jnp.allclose(change, change_ref, atol=1e-4, rtol=1e-4))

    print("KERNEL_OK")
</pallas_src>

<mosaic_0001>
module attributes {stable_mosaic.version = 11 : i64} {
  func.func @_stock_lstm_kernel(%arg0: memref<64x8xf32, #tpu.memory_space<vmem>>, %arg1: memref<8x128xf32, #tpu.memory_space<vmem>>, %arg2: memref<32x128xf32, #tpu.memory_space<vmem>>, %arg3: memref<1x128xf32, #tpu.memory_space<vmem>>, %arg4: memref<32x128xf32, #tpu.memory_space<vmem>>, %arg5: memref<32x128xf32, #tpu.memory_space<vmem>>, %arg6: memref<1x128xf32, #tpu.memory_space<vmem>>, %arg7: memref<32x2xf32, #tpu.memory_space<vmem>>, %arg8: memref<1x2xf32, #tpu.memory_space<vmem>>, %arg9: memref<8x2xf32, #tpu.memory_space<vmem>>) attributes {dimension_semantics = [], scalar_prefetch = 0 : i64, scratch_operands = 0 : i64, tpu.core_type = #tpu.core_type<tc>} {
    %0 = tpu.iota {dimensions = array<i32: 1>} : vector<8x128xi32>
    %c64_i32 = arith.constant 64 : i32
    %1 = vector.broadcast %c64_i32 : i32 to vector<8x128xi32>
    %2 = arith.cmpi sge, %0, %1 : vector<8x128xi32>
    %c96_i32 = arith.constant 96 : i32
    %3 = vector.broadcast %c96_i32 : i32 to vector<8x128xi32>
    %4 = arith.cmpi slt, %0, %3 : vector<8x128xi32>
    %5 = arith.andi %2, %4 : vector<8x128xi1>
    %cst = arith.constant 1.000000e+00 : f32
    %cst_0 = arith.constant 5.000000e-01 : f32
    %6 = vector.broadcast %cst : f32 to vector<8x128xf32>
    %7 = vector.broadcast %cst_0 : f32 to vector<8x128xf32>
    %8 = arith.select %5, %6, %7 : vector<8x128xi1>, vector<8x128xf32>
    %c0 = arith.constant 0 : index
    %c0_1 = arith.constant 0 : index
    %9 = vector.load %arg0[%c0, %c0_1] : memref<64x8xf32, #tpu.memory_space<vmem>>, vector<64x8xf32>
    %c0_2 = arith.constant 0 : index
    %c0_3 = arith.constant 0 : index
    %10 = vector.load %arg1[%c0_2, %c0_3] : memref<8x128xf32, #tpu.memory_space<vmem>>, vector<8x128xf32>
    %c0_4 = arith.constant 0 : index
    %c0_5 = arith.constant 0 : index
    %11 = vector.load %arg2[%c0_4, %c0_5] : memref<32x128xf32, #tpu.memory_space<vmem>>, vector<32x128xf32>
    %c0_6 = arith.constant 0 : index
    %c0_7 = arith.constant 0 : index
    %12 = vector.load %arg3[%c0_6, %c0_7] : memref<1x128xf32, #tpu.memory_space<vmem>>, vector<1x128xf32>
    %cst_8 = arith.constant dense<0.000000e+00> : vector<64x128xf32>
    %13 = tpu.matmul %9, %10, %cst_8 {dimension_numbers = #tpu.dot_dimension_numbers<[1], [0], [0], [1], [0, 0, 1, 1], [], []>, precision = #tpu.contract_precision<fp32>} : vector<64x8xf32>, vector<8x128xf32>, vector<64x128xf32> -> vector<64x128xf32>
    %14 = vector.broadcast %12 : vector<1x128xf32> to vector<64x128xf32>
    %15 = arith.addf %13, %14 : vector<64x128xf32>
    %cst_9 = arith.constant 0.000000e+00 : f32
    %16 = vector.broadcast %cst_9 : f32 to vector<8x32xf32>
    %cst_10 = arith.constant 0.000000e+00 : f32
    %17 = vector.broadcast %cst_10 : f32 to vector<8x32xf32>
    %18 = vector.extract_strided_slice %15 {offsets = [0, 0], sizes = [8, 128], strides = [1, 1]} : vector<64x128xf32> to vector<8x128xf32>
    %cst_11 = arith.constant dense<0.000000e+00> : vector<8x128xf32>
    %19 = tpu.matmul %16, %11, %cst_11 {dimension_numbers = #tpu.dot_dimension_numbers<[1], [0], [0], [1], [0, 0, 1, 1], [], []>, precision = #tpu.contract_precision<fp32>} : vector<8x32xf32>, vector<32x128xf32>, vector<8x128xf32> -> vector<8x128xf32>
    %20 = arith.addf %18, %19 : vector<8x128xf32>
    %21 = arith.mulf %20, %8 : vector<8x128xf32>
    %22 = math.tanh %21 : vector<8x128xf32>
    %cst_12 = arith.constant 1.000000e+00 : f32
    %23 = vector.broadcast %cst_12 : f32 to vector<8x128xf32>
    %24 = arith.addf %22, %23 : vector<8x128xf32>
    %cst_13 = arith.constant 5.000000e-01 : f32
    %25 = vector.broadcast %cst_13 : f32 to vector<8x128xf32>
    %26 = arith.mulf %25, %24 : vector<8x128xf32>
    %27 = arith.select %5, %22, %26 : vector<8x128xi1>, vector<8x128xf32>
    %28 = vector.extract_strided_slice %27 {offsets = [0, 0], sizes = [8, 32], strides = [1, 1]} : vector<8x128xf32> to vector<8x32xf32>
    %29 = vector.extract_strided_slice %27 {offsets = [0, 32], sizes = [8, 32], strides = [1, 1]} : vector<8x128xf32> to vector<8x32xf32>
    %30 = vector.extract_strided_slice %27 {offsets = [0, 64], sizes = [8, 32], strides = [1, 1]} : vector<8x128xf32> to vector<8x32xf32>
    %31 = vector.extract_strided_slice %27 {offsets = [0, 96], sizes = [8, 32], strides = [1, 1]} : vector<8x128xf32> to vector<8x32xf32>
    %32 = arith.mulf %29, %17 : vector<8x32xf32>
    %33 = arith.mulf %28, %30 : vector<8x32xf32>
    %34 = arith.addf %32, %33 : vector<8x32xf32>
    %35 = math.tanh %34 : vector<8x32xf32>
    %36 = arith.mulf %31, %35 : vector<8x32xf32>
    %37 = vector.extract_strided_slice %15 {offsets = [8, 0], sizes = [8, 128], strides = [1, 1]} : vector<64x128xf32> to vector<8x128xf32>
    %cst_14 = arith.constant dense<0.000000e+00> : vector<8x128xf32>
    %38 = tpu.matmul %36, %11, %cst_14 {dimension_numbers = #tpu.dot_dimension_numbers<[1], [0], [0], [1], [0, 0, 1, 1], [], []>, precision = #tpu.contract_precision<fp32>} : vector<8x32xf32>, vector<32x128xf32>, vector<8x128xf32> -> vector<8x128xf32>
    %39 = arith.addf %37, %38 : vector<8x128xf32>
    %40 = arith.mulf %39, %8 : vector<8x128xf32>
    %41 = math.tanh %40 : vector<8x128xf32>
    %cst_15 = arith.constant 1.000000e+00 : f32
    %42 = vector.broadcast %cst_15 : f32 to vector<8x128xf32>
    %43 = arith.addf %41, %42 : vector<8x128xf32>
    %cst_16 = arith.constant 5.000000e-01 : f32
    %44 = vector.broadcast %cst_16 : f32 to vector<8x128xf32>
    %45 = arith.mulf %44, %43 : vector<8x128xf32>
    %46 = arith.select %5, %41, %45 : vector<8x128xi1>, vector<8x128xf32>
    %47 = vector.extract_strided_slice %46 {offsets = [0, 0], sizes = [8, 32], strides = [1, 1]} : vector<8x128xf32> to vector<8x32xf32>
    %48 = vector.extract_strided_slice %46 {offsets = [0, 32], sizes = [8, 32], strides = [1, 1]} : vector<8x128xf32> to vector<8x32xf32>
    %49 = vector.extract_strided_slice %46 {offsets = [0, 64], sizes = [8, 32], strides = [1, 1]} : vector<8x128xf32> to vector<8x32xf32>
    %50 = vector.extract_strided_slice %46 {offsets = [0, 96], sizes = [8, 32], strides = [1, 1]} : vector<8x128xf32> to vector<8x32xf32>
    %51 = arith.mulf %48, %34 : vector<8x32xf32>
    %52 = arith.mulf %47, %49 : vector<8x32xf32>
    %53 = arith.addf %51, %52 : vector<8x32xf32>
    %54 = math.tanh %53 : vector<8x32xf32>
    %55 = arith.mulf %50, %54 : vector<8x32xf32>
    %56 = vector.extract_strided_slice %15 {offsets = [16, 0], sizes = [8, 128], strides = [1, 1]} : vector<64x128xf32> to vector<8x128xf32>
    %cst_17 = arith.constant dense<0.000000e+00> : vector<8x128xf32>
    %57 = tpu.matmul %55, %11, %cst_17 {dimension_numbers = #tpu.dot_dimension_numbers<[1], [0], [0], [1], [0, 0, 1, 1], [], []>, precision = #tpu.contract_precision<fp32>} : vector<8x32xf32>, vector<32x128xf32>, vector<8x128xf32> -> vector<8x128xf32>
    %58 = arith.addf %56, %57 : vector<8x128xf32>
    %59 = arith.mulf %58, %8 : vector<8x128xf32>
    %60 = math.tanh %59 : vector<8x128xf32>
    %cst_18 = arith.constant 1.000000e+00 : f32
    %61 = vector.broadcast %cst_18 : f32 to vector<8x128xf32>
    %62 = arith.addf %60, %61 : vector<8x128xf32>
    %cst_19 = arith.constant 5.000000e-01 : f32
    %63 = vector.broadcast %cst_19 : f32 to vector<8x128xf32>
    %64 = arith.mulf %63, %62 : vector<8x128xf32>
    %65 = arith.select %5, %60, %64 : vector<8x128xi1>, vector<8x128xf32>
    %66 = vector.extract_strided_slice %65 {offsets = [0, 0], sizes = [8, 32], strides = [1, 1]} : vector<8x128xf32> to vector<8x32xf32>
    %67 = vector.extract_strided_slice %65 {offsets = [0, 32], sizes = [8, 32], strides = [1, 1]} : vector<8x128xf32> to vector<8x32xf32>
    %68 = vector.extract_strided_slice %65 {offsets = [0, 64], sizes = [8, 32], strides = [1, 1]} : vector<8x128xf32> to vector<8x32xf32>
    %69 = vector.extract_strided_slice %65 {offsets = [0, 96], sizes = [8, 32], strides = [1, 1]} : vector<8x128xf32> to vector<8x32xf32>
    %70 = arith.mulf %67, %53 : vector<8x32xf32>
    %71 = arith.mulf %66, %68 : vector<8x32xf32>
    %72 = arith.addf %70, %71 : vector<8x32xf32>
    %73 = math.tanh %72 : vector<8x32xf32>
    %74 = arith.mulf %69, %73 : vector<8x32xf32>
    %75 = vector.extract_strided_slice %15 {offsets = [24, 0], sizes = [8, 128], strides = [1, 1]} : vector<64x128xf32> to vector<8x128xf32>
    %cst_20 = arith.constant dense<0.000000e+00> : vector<8x128xf32>
    %76 = tpu.matmul %74, %11, %cst_20 {dimension_numbers = #tpu.dot_dimension_numbers<[1], [0], [0], [1], [0, 0, 1, 1], [], []>, precision = #tpu.contract_precision<fp32>} : vector<8x32xf32>, vector<32x128xf32>, vector<8x128xf32> -> vector<8x128xf32>
    %77 = arith.addf %75, %76 : vector<8x128xf32>
    %78 = arith.mulf %77, %8 : vector<8x128xf32>
    %79 = math.tanh %78 : vector<8x128xf32>
    %cst_21 = arith.constant 1.000000e+00 : f32
    %80 = vector.broadcast %cst_21 : f32 to vector<8x128xf32>
    %81 = arith.addf %79, %80 : vector<8x128xf32>
    %cst_22 = arith.constant 5.000000e-01 : f32
    %82 = vector.broadcast %cst_22 : f32 to vector<8x128xf32>
    %83 = arith.mulf %82, %81 : vector<8x128xf32>
    %84 = arith.select %5, %79, %83 : vector<8x128xi1>, vector<8x128xf32>
    %85 = vector.extract_strided_slice %84 {offsets = [0, 0], sizes = [8, 32], strides = [1, 1]} : vector<8x128xf32> to vector<8x32xf32>
    %86 = vector.extract_strided_slice %84 {offsets = [0, 32], sizes = [8, 32], strides = [1, 1]} : vector<8x128xf32> to vector<8x32xf32>
    %87 = vector.extract_strided_slice %84 {offsets = [0, 64], sizes = [8, 32], strides = [1, 1]} : vector<8x128xf32> to vector<8x32xf32>
    %88 = vector.extract_strided_slice %84 {offsets = [0, 96], sizes = [8, 32], strides = [1, 1]} : vector<8x128xf32> to vector<8x32xf32>
    %89 = arith.mulf %86, %72 : vector<8x32xf32>
    %90 = arith.mulf %85, %87 : vector<8x32xf32>
    %91 = arith.addf %89, %90 : vector<8x32xf32>
    %92 = math.tanh %91 : vector<8x32xf32>
    %93 = arith.mulf %88, %92 : vector<8x32xf32>
    %94 = vector.extract_strided_slice %15 {offsets = [32, 0], sizes = [8, 128], strides = [1, 1]} : vector<64x128xf32> to vector<8x128xf32>
    %cst_23 = arith.constant dense<0.000000e+00> : vector<8x128xf32>
    %95 = tpu.matmul %93, %11, %cst_23 {dimension_numbers = #tpu.dot_dimension_numbers<[1], [0], [0], [1], [0, 0, 1, 1], [], []>, precision = #tpu.contract_precision<fp32>} : vector<8x32xf32>, vector<32x128xf32>, vector<8x128xf32> -> vector<8x128xf32>
    %96 = arith.addf %94, %95 : vector<8x128xf32>
    %97 = arith.mulf %96, %8 : vector<8x128xf32>
    %98 = math.tanh %97 : vector<8x128xf32>
    %cst_24 = arith.constant 1.000000e+00 : f32
    %99 = vector.broadcast %cst_24 : f32 to vector<8x128xf32>
    %100 = arith.addf %98, %99 : vector<8x128xf32>
    %cst_25 = arith.constant 5.000000e-01 : f32
    %101 = vector.broadcast %cst_25 : f32 to vector<8x128xf32>
    %102 = arith.mulf %101, %100 : vector<8x128xf32>
    %103 = arith.select %5, %98, %102 : vector<8x128xi1>, vector<8x128xf32>
    %104 = vector.extract_strided_slice %103 {offsets = [0, 0], sizes = [8, 32], strides = [1, 1]} : vector<8x128xf32> to vector<8x32xf32>
    %105 = vector.extract_strided_slice %103 {offsets = [0, 32], sizes = [8, 32], strides = [1, 1]} : vector<8x128xf32> to vector<8x32xf32>
    %106 = vector.extract_strided_slice %103 {offsets = [0, 64], sizes = [8, 32], strides = [1, 1]} : vector<8x128xf32> to vector<8x32xf32>
    %107 = vector.extract_strided_slice %103 {offsets = [0, 96], sizes = [8, 32], strides = [1, 1]} : vector<8x128xf32> to vector<8x32xf32>
    %108 = arith.mulf %105, %91 : vector<8x32xf32>
    %109 = arith.mulf %104, %106 : vector<8x32xf32>
    %110 = arith.addf %108, %109 : vector<8x32xf32>
    %111 = math.tanh %110 : vector<8x32xf32>
    %112 = arith.mulf %107, %111 : vector<8x32xf32>
    %113 = vector.extract_strided_slice %15 {offsets = [40, 0], sizes = [8, 128], strides = [1, 1]} : vector<64x128xf32> to vector<8x128xf32>
    %cst_26 = arith.constant dense<0.000000e+00> : vector<8x128xf32>
    %114 = tpu.matmul %112, %11, %cst_26 {dimension_numbers = #tpu.dot_dimension_numbers<[1], [0], [0], [1], [0, 0, 1, 1], [], []>, precision = #tpu.contract_precision<fp32>} : vector<8x32xf32>, vector<32x128xf32>, vector<8x128xf32> -> vector<8x128xf32>
    %115 = arith.addf %113, %114 : vector<8x128xf32>
    %116 = arith.mulf %115, %8 : vector<8x128xf32>
    %117 = math.tanh %116 : vector<8x128xf32>
    %cst_27 = arith.constant 1.000000e+00 : f32
    %118 = vector.broadcast %cst_27 : f32 to vector<8x128xf32>
    %119 = arith.addf %117, %118 : vector<8x128xf32>
    %cst_28 = arith.constant 5.000000e-01 : f32
    %120 = vector.broadcast %cst_28 : f32 to vector<8x128xf32>
    %121 = arith.mulf %120, %119 : vector<8x128xf32>
    %122 = arith.select %5, %117, %121 : vector<8x128xi1>, vector<8x128xf32>
    %123 = vector.extract_strided_slice %122 {offsets = [0, 0], sizes = [8, 32], strides = [1, 1]} : vector<8x128xf32> to vector<8x32xf32>
    %124 = vector.extract_strided_slice %122 {offsets = [0, 32], sizes = [8, 32], strides = [1, 1]} : vector<8x128xf32> to vector<8x32xf32>
    %125 = vector.extract_strided_slice %122 {offsets = [0, 64], sizes = [8, 32], strides = [1, 1]} : vector<8x128xf32> to vector<8x32xf32>
    %126 = vector.extract_strided_slice %122 {offsets = [0, 96], sizes = [8, 32], strides = [1, 1]} : vector<8x128xf32> to vector<8x32xf32>
    %127 = arith.mulf %124, %110 : vector<8x32xf32>
    %128 = arith.mulf %123, %125 : vector<8x32xf32>
    %129 = arith.addf %127, %128 : vector<8x32xf32>
    %130 = math.tanh %129 : vector<8x32xf32>
    %131 = arith.mulf %126, %130 : vector<8x32xf32>
    %132 = vector.extract_strided_slice %15 {offsets = [48, 0], sizes = [8, 128], strides = [1, 1]} : vector<64x128xf32> to vector<8x128xf32>
    %cst_29 = arith.constant dense<0.000000e+00> : vector<8x128xf32>
    %133 = tpu.matmul %131, %11, %cst_29 {dimension_numbers = #tpu.dot_dimension_numbers<[1], [0], [0], [1], [0, 0, 1, 1], [], []>, precision = #tpu.contract_precision<fp32>} : vector<8x32xf32>, vector<32x128xf32>, vector<8x128xf32> -> vector<8x128xf32>
    %134 = arith.addf %132, %133 : vector<8x128xf32>
    %135 = arith.mulf %134, %8 : vector<8x128xf32>
    %136 = math.tanh %135 : vector<8x128xf32>
    %cst_30 = arith.constant 1.000000e+00 : f32
    %137 = vector.broadcast %cst_30 : f32 to vector<8x128xf32>
    %138 = arith.addf %136, %137 : vector<8x128xf32>
    %cst_31 = arith.constant 5.000000e-01 : f32
    %139 = vector.broadcast %cst_31 : f32 to vector<8x128xf32>
    %140 = arith.mulf %139, %138 : vector<8x128xf32>
    %141 = arith.select %5, %136, %140 : vector<8x128xi1>, vector<8x128xf32>
    %142 = vector.extract_strided_slice %141 {offsets = [0, 0], sizes = [8, 32], strides = [1, 1]} : vector<8x128xf32> to vector<8x32xf32>
    %143 = vector.extract_strided_slice %141 {offsets = [0, 32], sizes = [8, 32], strides = [1, 1]} : vector<8x128xf32> to vector<8x32xf32>
    %144 = vector.extract_strided_slice %141 {offsets = [0, 64], sizes = [8, 32], strides = [1, 1]} : vector<8x128xf32> to vector<8x32xf32>
    %145 = vector.extract_strided_slice %141 {offsets = [0, 96], sizes = [8, 32], strides = [1, 1]} : vector<8x128xf32> to vector<8x32xf32>
    %146 = arith.mulf %143, %129 : vector<8x32xf32>
    %147 = arith.mulf %142, %144 : vector<8x32xf32>
    %148 = arith.addf %146, %147 : vector<8x32xf32>
    %149 = math.tanh %148 : vector<8x32xf32>
    %150 = arith.mulf %145, %149 : vector<8x32xf32>
    %151 = vector.extract_strided_slice %15 {offsets = [56, 0], sizes = [8, 128], strides = [1, 1]} : vector<64x128xf32> to vector<8x128xf32>
    %cst_32 = arith.constant dense<0.000000e+00> : vector<8x128xf32>
    %152 = tpu.matmul %150, %11, %cst_32 {dimension_numbers = #tpu.dot_dimension_numbers<[1], [0], [0], [1], [0, 0, 1, 1], [], []>, precision = #tpu.contract_precision<fp32>} : vector<8x32xf32>, vector<32x128xf32>, vector<8x128xf32> -> vector<8x128xf32>
    %153 = arith.addf %151, %152 : vector<8x128xf32>
    %154 = arith.mulf %153, %8 : vector<8x128xf32>
    %155 = math.tanh %154 : vector<8x128xf32>
    %cst_33 = arith.constant 1.000000e+00 : f32
    %156 = vector.broadcast %cst_33 : f32 to vector<8x128xf32>
    %157 = arith.addf %155, %156 : vector<8x128xf32>
    %cst_34 = arith.constant 5.000000e-01 : f32
    %158 = vector.broadcast %cst_34 : f32 to vector<8x128xf32>
    %159 = arith.mulf %158, %157 : vector<8x128xf32>
    %160 = arith.select %5, %155, %159 : vector<8x128xi1>, vector<8x128xf32>
    %161 = vector.extract_strided_slice %160 {offsets = [0, 0], sizes = [8, 32], strides = [1, 1]} : vector<8x128xf32> to vector<8x32xf32>
    %162 = vector.extract_strided_slice %160 {offsets = [0, 32], sizes = [8, 32], strides = [1, 1]} : vector<8x128xf32> to vector<8x32xf32>
    %163 = vector.extract_strided_slice %160 {offsets = [0, 64], sizes = [8, 32], strides = [1, 1]} : vector<8x128xf32> to vector<8x32xf32>
    %164 = vector.extract_strided_slice %160 {offsets = [0, 96], sizes = [8, 32], strides = [1, 1]} : vector<8x128xf32> to vector<8x32xf32>
    %165 = arith.mulf %162, %148 : vector<8x32xf32>
    %166 = arith.mulf %161, %163 : vector<8x32xf32>
    %167 = arith.addf %165, %166 : vector<8x32xf32>
    %168 = math.tanh %167 : vector<8x32xf32>
    %169 = arith.mulf %164, %168 : vector<8x32xf32>
    %170 = tpu.concatenate %36, %55, %74, %93, %112, %131, %150, %169 in 0 : vector<8x32xf32>, vector<8x32xf32>, vector<8x32xf32>, vector<8x32xf32>, vector<8x32xf32>, vector<8x32xf32>, vector<8x32xf32>, vector<8x32xf32> -> vector<64x32xf32>
    %c0_35 = arith.constant 0 : index
    %c0_36 = arith.constant 0 : index
    %171 = vector.load %arg4[%c0_35, %c0_36] : memref<32x128xf32, #tpu.memory_space<vmem>>, vector<32x128xf32>
    %c0_37 = arith.constant 0 : index
    %c0_38 = arith.constant 0 : index
    %172 = vector.load %arg5[%c0_37, %c0_38] : memref<32x128xf32, #tpu.memory_space<vmem>>, vector<32x128xf32>
    %c0_39 = arith.constant 0 : index
    %c0_40 = arith.constant 0 : index
    %173 = vector.load %arg6[%c0_39, %c0_40] : memref<1x128xf32, #tpu.memory_space<vmem>>, vector<1x128xf32>
    %cst_41 = arith.constant dense<0.000000e+00> : vector<64x128xf32>
    %174 = tpu.matmul %170, %171, %cst_41 {dimension_numbers = #tpu.dot_dimension_numbers<[1], [0], [0], [1], [0, 0, 1, 1], [], []>, precision = #tpu.contract_precision<fp32>} : vector<64x32xf32>, vector<32x128xf32>, vector<64x128xf32> -> vector<64x128xf32>
    %175 = vector.broadcast %173 : vector<1x128xf32> to vector<64x128xf32>
    %176 = arith.addf %174, %175 : vector<64x128xf32>
    %cst_42 = arith.constant 0.000000e+00 : f32
    %177 = vector.broadcast %cst_42 : f32 to vector<8x32xf32>
    %cst_43 = arith.constant 0.000000e+00 : f32
    %178 = vector.broadcast %cst_43 : f32 to vector<8x32xf32>
    %179 = vector.extract_strided_slice %176 {offsets = [0, 0], sizes = [8, 128], strides = [1, 1]} : vector<64x128xf32> to vector<8x128xf32>
    %cst_44 = arith.constant dense<0.000000e+00> : vector<8x128xf32>
    %180 = tpu.matmul %177, %172, %cst_44 {dimension_numbers = #tpu.dot_dimension_numbers<[1], [0], [0], [1], [0, 0, 1, 1], [], []>, precision = #tpu.contract_precision<fp32>} : vector<8x32xf32>, vector<32x128xf32>, vector<8x128xf32> -> vector<8x128xf32>
    %181 = arith.addf %179, %180 : vector<8x128xf32>
    %182 = arith.mulf %181, %8 : vector<8x128xf32>
    %183 = math.tanh %182 : vector<8x128xf32>
    %cst_45 = arith.constant 1.000000e+00 : f32
    %184 = vector.broadcast %cst_45 : f32 to vector<8x128xf32>
    %185 = arith.addf %183, %184 : vector<8x128xf32>
    %cst_46 = arith.constant 5.000000e-01 : f32
    %186 = vector.broadcast %cst_46 : f32 to vector<8x128xf32>
    %187 = arith.mulf %186, %185 : vector<8x128xf32>
    %188 = arith.select %5, %183, %187 : vector<8x128xi1>, vector<8x128xf32>
    %189 = vector.extract_strided_slice %188 {offsets = [0, 0], sizes = [8, 32], strides = [1, 1]} : vector<8x128xf32> to vector<8x32xf32>
    %190 = vector.extract_strided_slice %188 {offsets = [0, 32], sizes = [8, 32], strides = [1, 1]} : vector<8x128xf32> to vector<8x32xf32>
    %191 = vector.extract_strided_slice %188 {offsets = [0, 64], sizes = [8, 32], strides = [1, 1]} : vector<8x128xf32> to vector<8x32xf32>
    %192 = vector.extract_strided_slice %188 {offsets = [0, 96], sizes = [8, 32], strides = [1, 1]} : vector<8x128xf32> to vector<8x32xf32>
    %193 = arith.mulf %190, %178 : vector<8x32xf32>
    %194 = arith.mulf %189, %191 : vector<8x32xf32>
    %195 = arith.addf %193, %194 : vector<8x32xf32>
    %196 = math.tanh %195 : vector<8x32xf32>
    %197 = arith.mulf %192, %196 : vector<8x32xf32>
    %198 = vector.extract_strided_slice %176 {offsets = [8, 0], sizes = [8, 128], strides = [1, 1]} : vector<64x128xf32> to vector<8x128xf32>
    %cst_47 = arith.constant dense<0.000000e+00> : vector<8x128xf32>
    %199 = tpu.matmul %197, %172, %cst_47 {dimension_numbers = #tpu.dot_dimension_numbers<[1], [0], [0], [1], [0, 0, 1, 1], [], []>, precision = #tpu.contract_precision<fp32>} : vector<8x32xf32>, vector<32x128xf32>, vector<8x128xf32> -> vector<8x128xf32>
    %200 = arith.addf %198, %199 : vector<8x128xf32>
    %201 = arith.mulf %200, %8 : vector<8x128xf32>
    %202 = math.tanh %201 : vector<8x128xf32>
    %cst_48 = arith.constant 1.000000e+00 : f32
    %203 = vector.broadcast %cst_48 : f32 to vector<8x128xf32>
    %204 = arith.addf %202, %203 : vector<8x128xf32>
    %cst_49 = arith.constant 5.000000e-01 : f32
    %205 = vector.broadcast %cst_49 : f32 to vector<8x128xf32>
    %206 = arith.mulf %205, %204 : vector<8x128xf32>
    %207 = arith.select %5, %202, %206 : vector<8x128xi1>, vector<8x128xf32>
    %208 = vector.extract_strided_slice %207 {offsets = [0, 0], sizes = [8, 32], strides = [1, 1]} : vector<8x128xf32> to vector<8x32xf32>
    %209 = vector.extract_strided_slice %207 {offsets = [0, 32], sizes = [8, 32], strides = [1, 1]} : vector<8x128xf32> to vector<8x32xf32>
    %210 = vector.extract_strided_slice %207 {offsets = [0, 64], sizes = [8, 32], strides = [1, 1]} : vector<8x128xf32> to vector<8x32xf32>
    %211 = vector.extract_strided_slice %207 {offsets = [0, 96], sizes = [8, 32], strides = [1, 1]} : vector<8x128xf32> to vector<8x32xf32>
    %212 = arith.mulf %209, %195 : vector<8x32xf32>
    %213 = arith.mulf %208, %210 : vector<8x32xf32>
    %214 = arith.addf %212, %213 : vector<8x32xf32>
    %215 = math.tanh %214 : vector<8x32xf32>
    %216 = arith.mulf %211, %215 : vector<8x32xf32>
    %217 = vector.extract_strided_slice %176 {offsets = [16, 0], sizes = [8, 128], strides = [1, 1]} : vector<64x128xf32> to vector<8x128xf32>
    %cst_50 = arith.constant dense<0.000000e+00> : vector<8x128xf32>
    %218 = tpu.matmul %216, %172, %cst_50 {dimension_numbers = #tpu.dot_dimension_numbers<[1], [0], [0], [1], [0, 0, 1, 1], [], []>, precision = #tpu.contract_precision<fp32>} : vector<8x32xf32>, vector<32x128xf32>, vector<8x128xf32> -> vector<8x128xf32>
    %219 = arith.addf %217, %218 : vector<8x128xf32>
    %220 = arith.mulf %219, %8 : vector<8x128xf32>
    %221 = math.tanh %220 : vector<8x128xf32>
    %cst_51 = arith.constant 1.000000e+00 : f32
    %222 = vector.broadcast %cst_51 : f32 to vector<8x128xf32>
    %223 = arith.addf %221, %222 : vector<8x128xf32>
    %cst_52 = arith.constant 5.000000e-01 : f32
    %224 = vector.broadcast %cst_52 : f32 to vector<8x128xf32>
    %225 = arith.mulf %224, %223 : vector<8x128xf32>
    %226 = arith.select %5, %221, %225 : vector<8x128xi1>, vector<8x128xf32>
    %227 = vector.extract_strided_slice %226 {offsets = [0, 0], sizes = [8, 32], strides = [1, 1]} : vector<8x128xf32> to vector<8x32xf32>
    %228 = vector.extract_strided_slice %226 {offsets = [0, 32], sizes = [8, 32], strides = [1, 1]} : vector<8x128xf32> to vector<8x32xf32>
    %229 = vector.extract_strided_slice %226 {offsets = [0, 64], sizes = [8, 32], strides = [1, 1]} : vector<8x128xf32> to vector<8x32xf32>
    %230 = vector.extract_strided_slice %226 {offsets = [0, 96], sizes = [8, 32], strides = [1, 1]} : vector<8x128xf32> to vector<8x32xf32>
    %231 = arith.mulf %228, %214 : vector<8x32xf32>
    %232 = arith.mulf %227, %229 : vector<8x32xf32>
    %233 = arith.addf %231, %232 : vector<8x32xf32>
    %234 = math.tanh %233 : vector<8x32xf32>
    %235 = arith.mulf %230, %234 : vector<8x32xf32>
    %236 = vector.extract_strided_slice %176 {offsets = [24, 0], sizes = [8, 128], strides = [1, 1]} : vector<64x128xf32> to vector<8x128xf32>
    %cst_53 = arith.constant dense<0.000000e+00> : vector<8x128xf32>
    %237 = tpu.matmul %235, %172, %cst_53 {dimension_numbers = #tpu.dot_dimension_numbers<[1], [0], [0], [1], [0, 0, 1, 1], [], []>, precision = #tpu.contract_precision<fp32>} : vector<8x32xf32>, vector<32x128xf32>, vector<8x128xf32> -> vector<8x128xf32>
    %238 = arith.addf %236, %237 : vector<8x128xf32>
    %239 = arith.mulf %238, %8 : vector<8x128xf32>
    %240 = math.tanh %239 : vector<8x128xf32>
    %cst_54 = arith.constant 1.000000e+00 : f32
    %241 = vector.broadcast %cst_54 : f32 to vector<8x128xf32>
    %242 = arith.addf %240, %241 : vector<8x128xf32>
    %cst_55 = arith.constant 5.000000e-01 : f32
    %243 = vector.broadcast %cst_55 : f32 to vector<8x128xf32>
    %244 = arith.mulf %243, %242 : vector<8x128xf32>
    %245 = arith.select %5, %240, %244 : vector<8x128xi1>, vector<8x128xf32>
    %246 = vector.extract_strided_slice %245 {offsets = [0, 0], sizes = [8, 32], strides = [1, 1]} : vector<8x128xf32> to vector<8x32xf32>
    %247 = vector.extract_strided_slice %245 {offsets = [0, 32], sizes = [8, 32], strides = [1, 1]} : vector<8x128xf32> to vector<8x32xf32>
    %248 = vector.extract_strided_slice %245 {offsets = [0, 64], sizes = [8, 32], strides = [1, 1]} : vector<8x128xf32> to vector<8x32xf32>
    %249 = vector.extract_strided_slice %245 {offsets = [0, 96], sizes = [8, 32], strides = [1, 1]} : vector<8x128xf32> to vector<8x32xf32>
    %250 = arith.mulf %247, %233 : vector<8x32xf32>
    %251 = arith.mulf %246, %248 : vector<8x32xf32>
    %252 = arith.addf %250, %251 : vector<8x32xf32>
    %253 = math.tanh %252 : vector<8x32xf32>
    %254 = arith.mulf %249, %253 : vector<8x32xf32>
    %255 = vector.extract_strided_slice %176 {offsets = [32, 0], sizes = [8, 128], strides = [1, 1]} : vector<64x128xf32> to vector<8x128xf32>
    %cst_56 = arith.constant dense<0.000000e+00> : vector<8x128xf32>
    %256 = tpu.matmul %254, %172, %cst_56 {dimension_numbers = #tpu.dot_dimension_numbers<[1], [0], [0], [1], [0, 0, 1, 1], [], []>, precision = #tpu.contract_precision<fp32>} : vector<8x32xf32>, vector<32x128xf32>, vector<8x128xf32> -> vector<8x128xf32>
    %257 = arith.addf %255, %256 : vector<8x128xf32>
    %258 = arith.mulf %257, %8 : vector<8x128xf32>
    %259 = math.tanh %258 : vector<8x128xf32>
    %cst_57 = arith.constant 1.000000e+00 : f32
    %260 = vector.broadcast %cst_57 : f32 to vector<8x128xf32>
    %261 = arith.addf %259, %260 : vector<8x128xf32>
    %cst_58 = arith.constant 5.000000e-01 : f32
    %262 = vector.broadcast %cst_58 : f32 to vector<8x128xf32>
    %263 = arith.mulf %262, %261 : vector<8x128xf32>
    %264 = arith.select %5, %259, %263 : vector<8x128xi1>, vector<8x128xf32>
    %265 = vector.extract_strided_slice %264 {offsets = [0, 0], sizes = [8, 32], strides = [1, 1]} : vector<8x128xf32> to vector<8x32xf32>
    %266 = vector.extract_strided_slice %264 {offsets = [0, 32], sizes = [8, 32], strides = [1, 1]} : vector<8x128xf32> to vector<8x32xf32>
    %267 = vector.extract_strided_slice %264 {offsets = [0, 64], sizes = [8, 32], strides = [1, 1]} : vector<8x128xf32> to vector<8x32xf32>
    %268 = vector.extract_strided_slice %264 {offsets = [0, 96], sizes = [8, 32], strides = [1, 1]} : vector<8x128xf32> to vector<8x32xf32>
    %269 = arith.mulf %266, %252 : vector<8x32xf32>
    %270 = arith.mulf %265, %267 : vector<8x32xf32>
    %271 = arith.addf %269, %270 : vector<8x32xf32>
    %272 = math.tanh %271 : vector<8x32xf32>
    %273 = arith.mulf %268, %272 : vector<8x32xf32>
    %274 = vector.extract_strided_slice %176 {offsets = [40, 0], sizes = [8, 128], strides = [1, 1]} : vector<64x128xf32> to vector<8x128xf32>
    %cst_59 = arith.constant dense<0.000000e+00> : vector<8x128xf32>
    %275 = tpu.matmul %273, %172, %cst_59 {dimension_numbers = #tpu.dot_dimension_numbers<[1], [0], [0], [1], [0, 0, 1, 1], [], []>, precision = #tpu.contract_precision<fp32>} : vector<8x32xf32>, vector<32x128xf32>, vector<8x128xf32> -> vector<8x128xf32>
    %276 = arith.addf %274, %275 : vector<8x128xf32>
    %277 = arith.mulf %276, %8 : vector<8x128xf32>
    %278 = math.tanh %277 : vector<8x128xf32>
    %cst_60 = arith.constant 1.000000e+00 : f32
    %279 = vector.broadcast %cst_60 : f32 to vector<8x128xf32>
    %280 = arith.addf %278, %279 : vector<8x128xf32>
    %cst_61 = arith.constant 5.000000e-01 : f32
    %281 = vector.broadcast %cst_61 : f32 to vector<8x128xf32>
    %282 = arith.mulf %281, %280 : vector<8x128xf32>
    %283 = arith.select %5, %278, %282 : vector<8x128xi1>, vector<8x128xf32>
    %284 = vector.extract_strided_slice %283 {offsets = [0, 0], sizes = [8, 32], strides = [1, 1]} : vector<8x128xf32> to vector<8x32xf32>
    %285 = vector.extract_strided_slice %283 {offsets = [0, 32], sizes = [8, 32], strides = [1, 1]} : vector<8x128xf32> to vector<8x32xf32>
    %286 = vector.extract_strided_slice %283 {offsets = [0, 64], sizes = [8, 32], strides = [1, 1]} : vector<8x128xf32> to vector<8x32xf32>
    %287 = vector.extract_strided_slice %283 {offsets = [0, 96], sizes = [8, 32], strides = [1, 1]} : vector<8x128xf32> to vector<8x32xf32>
    %288 = arith.mulf %285, %271 : vector<8x32xf32>
    %289 = arith.mulf %284, %286 : vector<8x32xf32>
    %290 = arith.addf %288, %289 : vector<8x32xf32>
    %291 = math.tanh %290 : vector<8x32xf32>
    %292 = arith.mulf %287, %291 : vector<8x32xf32>
    %293 = vector.extract_strided_slice %176 {offsets = [48, 0], sizes = [8, 128], strides = [1, 1]} : vector<64x128xf32> to vector<8x128xf32>
    %cst_62 = arith.constant dense<0.000000e+00> : vector<8x128xf32>
    %294 = tpu.matmul %292, %172, %cst_62 {dimension_numbers = #tpu.dot_dimension_numbers<[1], [0], [0], [1], [0, 0, 1, 1], [], []>, precision = #tpu.contract_precision<fp32>} : vector<8x32xf32>, vector<32x128xf32>, vector<8x128xf32> -> vector<8x128xf32>
    %295 = arith.addf %293, %294 : vector<8x128xf32>
    %296 = arith.mulf %295, %8 : vector<8x128xf32>
    %297 = math.tanh %296 : vector<8x128xf32>
    %cst_63 = arith.constant 1.000000e+00 : f32
    %298 = vector.broadcast %cst_63 : f32 to vector<8x128xf32>
    %299 = arith.addf %297, %298 : vector<8x128xf32>
    %cst_64 = arith.constant 5.000000e-01 : f32
    %300 = vector.broadcast %cst_64 : f32 to vector<8x128xf32>
    %301 = arith.mulf %300, %299 : vector<8x128xf32>
    %302 = arith.select %5, %297, %301 : vector<8x128xi1>, vector<8x128xf32>
    %303 = vector.extract_strided_slice %302 {offsets = [0, 0], sizes = [8, 32], strides = [1, 1]} : vector<8x128xf32> to vector<8x32xf32>
    %304 = vector.extract_strided_slice %302 {offsets = [0, 32], sizes = [8, 32], strides = [1, 1]} : vector<8x128xf32> to vector<8x32xf32>
    %305 = vector.extract_strided_slice %302 {offsets = [0, 64], sizes = [8, 32], strides = [1, 1]} : vector<8x128xf32> to vector<8x32xf32>
    %306 = vector.extract_strided_slice %302 {offsets = [0, 96], sizes = [8, 32], strides = [1, 1]} : vector<8x128xf32> to vector<8x32xf32>
    %307 = arith.mulf %304, %290 : vector<8x32xf32>
    %308 = arith.mulf %303, %305 : vector<8x32xf32>
    %309 = arith.addf %307, %308 : vector<8x32xf32>
    %310 = math.tanh %309 : vector<8x32xf32>
    %311 = arith.mulf %306, %310 : vector<8x32xf32>
    %312 = vector.extract_strided_slice %176 {offsets = [56, 0], sizes = [8, 128], strides = [1, 1]} : vector<64x128xf32> to vector<8x128xf32>
    %cst_65 = arith.constant dense<0.000000e+00> : vector<8x128xf32>
    %313 = tpu.matmul %311, %172, %cst_65 {dimension_numbers = #tpu.dot_dimension_numbers<[1], [0], [0], [1], [0, 0, 1, 1], [], []>, precision = #tpu.contract_precision<fp32>} : vector<8x32xf32>, vector<32x128xf32>, vector<8x128xf32> -> vector<8x128xf32>
    %314 = arith.addf %312, %313 : vector<8x128xf32>
    %315 = arith.mulf %314, %8 : vector<8x128xf32>
    %316 = math.tanh %315 : vector<8x128xf32>
    %cst_66 = arith.constant 1.000000e+00 : f32
    %317 = vector.broadcast %cst_66 : f32 to vector<8x128xf32>
    %318 = arith.addf %316, %317 : vector<8x128xf32>
    %cst_67 = arith.constant 5.000000e-01 : f32
    %319 = vector.broadcast %cst_67 : f32 to vector<8x128xf32>
    %320 = arith.mulf %319, %318 : vector<8x128xf32>
    %321 = arith.select %5, %316, %320 : vector<8x128xi1>, vector<8x128xf32>
    %322 = vector.extract_strided_slice %321 {offsets = [0, 0], sizes = [8, 32], strides = [1, 1]} : vector<8x128xf32> to vector<8x32xf32>
    %323 = vector.extract_strided_slice %321 {offsets = [0, 32], sizes = [8, 32], strides = [1, 1]} : vector<8x128xf32> to vector<8x32xf32>
    %324 = vector.extract_strided_slice %321 {offsets = [0, 64], sizes = [8, 32], strides = [1, 1]} : vector<8x128xf32> to vector<8x32xf32>
    %325 = vector.extract_strided_slice %321 {offsets = [0, 96], sizes = [8, 32], strides = [1, 1]} : vector<8x128xf32> to vector<8x32xf32>
    %326 = arith.mulf %323, %309 : vector<8x32xf32>
    %327 = arith.mulf %322, %324 : vector<8x32xf32>
    %328 = arith.addf %326, %327 : vector<8x32xf32>
    %329 = math.tanh %328 : vector<8x32xf32>
    %330 = arith.mulf %325, %329 : vector<8x32xf32>
    %c0_68 = arith.constant 0 : index
    %c0_69 = arith.constant 0 : index
    %331 = vector.load %arg7[%c0_68, %c0_69] : memref<32x2xf32, #tpu.memory_space<vmem>>, vector<32x2xf32>
    %cst_70 = arith.constant dense<0.000000e+00> : vector<8x2xf32>
    %332 = tpu.matmul %330, %331, %cst_70 {dimension_numbers = #tpu.dot_dimension_numbers<[1], [0], [0], [1], [0, 0, 1, 1], [], []>, precision = #tpu.contract_precision<fp32>} : vector<8x32xf32>, vector<32x2xf32>, vector<8x2xf32> -> vector<8x2xf32>
    %c0_71 = arith.constant 0 : index
    %c0_72 = arith.constant 0 : index
    %333 = vector.load %arg8[%c0_71, %c0_72] : memref<1x2xf32, #tpu.memory_space<vmem>>, vector<1x2xf32>
    %334 = vector.broadcast %333 : vector<1x2xf32> to vector<8x2xf32>
    %335 = arith.addf %332, %334 : vector<8x2xf32>
    %336 = tpu.iota {dimensions = array<i32: 1>} : vector<8x2xi32>
    %c0_i32 = arith.constant 0 : i32
    %337 = vector.broadcast %c0_i32 : i32 to vector<8x2xi32>
    %338 = arith.cmpi eq, %336, %337 : vector<8x2xi32>
    %339 = arith.negf %335 : vector<8x2xf32>
    %340 = math.exp %339 : vector<8x2xf32>
    %cst_73 = arith.constant 1.000000e+00 : f32
    %341 = vector.broadcast %cst_73 : f32 to vector<8x2xf32>
    %342 = arith.addf %341, %340 : vector<8x2xf32>
    %343 = arith.divf %341, %342 : vector<8x2xf32>
    %344 = arith.select %338, %343, %335 : vector<8x2xi1>, vector<8x2xf32>
    %c0_74 = arith.constant 0 : index
    %c0_75 = arith.constant 0 : index
    %345 = vector.load %arg9[%c0_74, %c0_75] : memref<8x2xf32, #tpu.memory_space<vmem>>, vector<8x2xf32>
    tpu.vector_store %arg9[%c0_74, %c0_75], %344 {strides = array<i32>} : memref<8x2xf32, #tpu.memory_space<vmem>>, vector<8x2xf32>,
    return
  }
}

</mosaic_0001>

<llo_original>
// kernel: stock_lstm_forward.1
$region0: #{stock_lstm_forward.1}
  #allocation0 [shape = 'u32[]', space=smem, size = 0x4, offset = 0x4, fixed_abs, tag = 'smem constant byte address 0x4 - core index']
  #allocation1 [shape = 'u32[72,128]{1,0:T(1,128)}', space=vmem, size = 0x9000, scoped, tag = 'internal scratch']
  %s0 = inlined_call_operand.vmem [shape: f32[64,8], index: 0, kind: input, shape index: {}]
  %s1 = inlined_call_operand.vmem [shape: f32[8,128], index: 1, kind: input, shape index: {}]
  %s2 = inlined_call_operand.vmem [shape: f32[32,128], index: 2, kind: input, shape index: {}]
  %s3 = inlined_call_operand.vmem [shape: f32[1,128], index: 3, kind: input, shape index: {}]
  %s4 = inlined_call_operand.vmem [shape: f32[32,128], index: 4, kind: input, shape index: {}]
  %s5 = inlined_call_operand.vmem [shape: f32[32,128], index: 5, kind: input, shape index: {}]
  %s6 = inlined_call_operand.vmem [shape: f32[1,128], index: 6, kind: input, shape index: {}]
  %s7 = inlined_call_operand.vmem [shape: f32[32,2], index: 7, kind: input, shape index: {}]
  %s8 = inlined_call_operand.vmem [shape: f32[1,2], index: 8, kind: input, shape index: {}]
  %s9 = inlined_call_operand.vmem [shape: f32[8,2], index: 9, kind: output, shape index: {}]
  %s10 = sld [smem:[#allocation0]]
  $region46: #{stock_lstm_forward.1} parent=0
    _
  %s12 = ssub.s32 1, %s10
  %s13 = scalar_select 0, %s12, %s10
  // Predicated region
  $region2: #{stock_lstm_forward.1} parent=0 // pred_check
    _
  $region3: #{stock_lstm_forward.1} parent=0 // pred_check_branch
    %15 = sbr.rel (0) target = $region5
  $region4: #{stock_lstm_forward.1} parent=0 // pred_region
    _
  $region5: #{stock_lstm_forward.1} parent=0 // pred_fallthru
    _
  // Predicated region
  $region6: #{stock_lstm_forward.1} parent=0 // pred_check
    _
  $region7: #{stock_lstm_forward.1} parent=0 // pred_check_branch
    %17 = sbr.rel (0) target = $region9
  $region8: #{stock_lstm_forward.1} parent=0 // pred_region
    _
  $region9: #{stock_lstm_forward.1} parent=0 // pred_fallthru
    _
  // Predicated region
  $region10: #{stock_lstm_forward.1} parent=0 // pred_check
    _
  $region11: #{stock_lstm_forward.1} parent=0 // pred_check_branch
    %19 = sbr.rel (0) target = $region13
  $region12: #{stock_lstm_forward.1} parent=0 // pred_region
    _
  $region13: #{stock_lstm_forward.1} parent=0 // pred_fallthru
    _
  // Predicated region
  $region14: #{stock_lstm_forward.1} parent=0 // pred_check
    _
  $region15: #{stock_lstm_forward.1} parent=0 // pred_check_branch
    %21 = sbr.rel (0) target = $region17
  $region16: #{stock_lstm_forward.1} parent=0 // pred_region
    _
  $region17: #{stock_lstm_forward.1} parent=0 // pred_fallthru
    _
  // Predicated region
  $region18: #{stock_lstm_forward.1} parent=0 // pred_check
    _
  $region19: #{stock_lstm_forward.1} parent=0 // pred_check_branch
    %23 = sbr.rel (0) target = $region21
  $region20: #{stock_lstm_forward.1} parent=0 // pred_region
    _
  $region21: #{stock_lstm_forward.1} parent=0 // pred_fallthru
    _
  // Predicated region
  $region22: #{stock_lstm_forward.1} parent=0 // pred_check
    _
  $region23: #{stock_lstm_forward.1} parent=0 // pred_check_branch
    %25 = sbr.rel (0) target = $region25
  $region24: #{stock_lstm_forward.1} parent=0 // pred_region
    _
  $region25: #{stock_lstm_forward.1} parent=0 // pred_fallthru
    _
  // Predicated region
  $region26: #{stock_lstm_forward.1} parent=0 // pred_check
    _
  $region27: #{stock_lstm_forward.1} parent=0 // pred_check_branch
    %27 = sbr.rel (0) target = $region29
  $region28: #{stock_lstm_forward.1} parent=0 // pred_region
    _
  $region29: #{stock_lstm_forward.1} parent=0 // pred_fallthru
    _
  // Predicated region
  $region30: #{stock_lstm_forward.1} parent=0 // pred_check
    _
  $region31: #{stock_lstm_forward.1} parent=0 // pred_check_branch
    %29 = sbr.rel (0) target = $region33
  $region32: #{stock_lstm_forward.1} parent=0 // pred_region
    _
  $region33: #{stock_lstm_forward.1} parent=0 // pred_fallthru
    _
  // Predicated region
  $region34: #{stock_lstm_forward.1} parent=0 // pred_check
    _
  $region35: #{stock_lstm_forward.1} parent=0 // pred_check_branch
    %31 = sbr.rel (0) target = $region37
  $region36: #{stock_lstm_forward.1} parent=0 // pred_region
    _
  $region37: #{stock_lstm_forward.1} parent=0 // pred_fallthru
    _
  %v32 = vlaneseq
  %v33 = vand.u32 %v32, 127
  %vm34 = vcmp.ge.s32.totalorder %v33, 64
  %vm35 = vcmp.lt.s32.totalorder %v33, 96
  %vm36 = vmand %vm34, %vm35
  %v37 = vsel %vm36, 1.0, 0.5
  %v38 = vld [vmem:[%s0] sm:$0xff]
  %v39 = vld [vmem:[%s0 + $0x8] sm:$0xff]
  %v40 = vld [vmem:[%s0 + $0x10] sm:$0xff]
  %v41 = vld [vmem:[%s0 + $0x18] sm:$0xff]
  %v42 = vld [vmem:[%s0 + $0x20] sm:$0xff]
  %v43 = vld [vmem:[%s0 + $0x28] sm:$0xff]
  %v44 = vld [vmem:[%s0 + $0x30] sm:$0xff]
  %v45 = vld [vmem:[%s0 + $0x38] sm:$0xff]
  %v46 = vld [vmem:[%s1] sm:$0xff]
  %v47 = vld [vmem:[%s2] sm:$0xff]
  %v48 = vld [vmem:[%s2 + $0x8] sm:$0xff]
  %v49 = vld [vmem:[%s2 + $0x10] sm:$0xff]
  %v50 = vld [vmem:[%s2 + $0x18] sm:$0xff]
  %v51 = vld [vmem:[%s3] sm:$0x1]
  %v53 = vperm.slane %v51, 0
  %vm55 = vcmask 64512
  %v57 = vsel %vm55, %v38, 0
  %v60 = vsel %vm55, %v39, 0
  %v63 = vsel %vm55, %v40, 0
  %v66 = vsel %vm55, %v41, 0
  %v69 = vsel %vm55, %v42, 0
  %v72 = vsel %vm55, %v43, 0
  %v75 = vsel %vm55, %v44, 0
  %v78 = vsel %vm55, %v45, 0
  %80 = vmatpush.msra.mxu0 0.0
  %81 = vmatpush.msra.mxu0 0.0
  %82 = vmatpush.msra.mxu0 0.0
  %83 = vmatpush.msra.mxu0 0.0
  %84 = vmatpush.msra.mxu0 0.0
  %85 = vmatpush.msra.mxu0 0.0
  %86 = vmatpush.msra.mxu0 0.0
  %87 = vmatpush.msra.mxu0 0.0
  %88 = vmatpush.msra.mxu0 0.0
  %89 = vmatpush.msra.mxu0 0.0
  %90 = vmatpush.msra.mxu0 0.0
  %91 = vmatpush.msra.mxu0 0.0
  %92 = vmatpush.msra.mxu0 0.0
  %93 = vmatpush.msra.mxu0 0.0
  %94 = vmatpush.msra.mxu0 0.0
  %v95 = vand.u32 %v46, 4294901760
  %96 = vmatpush.msra.mxu0 %v95
  %v97 = vand.u32 %v57, 4294901760
  %v98 = vsub.f32 %v57, %v97
  %v99 = vand.u32 %v98, 4294901760
  %v100 = vsub.f32 %v98, %v99
  %v101 = vand.u32 %v100, 4294901760
  %102 = vmatmul.f32.gmra.mxu0 %v101
  %v103 = vpop.f32.mrf.mxu0
  %v104 = vadd.f32 %v53, %v103
  %v105 = vand.u32 %v60, 4294901760
  %v106 = vsub.f32 %v60, %v105
  %v107 = vand.u32 %v106, 4294901760
  %v108 = vsub.f32 %v106, %v107
  %v109 = vand.u32 %v108, 4294901760
  %110 = vmatmul.f32.gmra.mxu0 %v109
  %v111 = vpop.f32.mrf.mxu0
  %v112 = vadd.f32 %v53, %v111
  %v113 = vand.u32 %v63, 4294901760
  %v114 = vsub.f32 %v63, %v113
  %v115 = vand.u32 %v114, 4294901760
  %v116 = vsub.f32 %v114, %v115
  %v117 = vand.u32 %v116, 4294901760
  %118 = vmatmul.f32.gmra.mxu0 %v117
  %v119 = vpop.f32.mrf.mxu0
  %v120 = vadd.f32 %v53, %v119
  %v121 = vand.u32 %v66, 4294901760
  %v122 = vsub.f32 %v66, %v121
  %v123 = vand.u32 %v122, 4294901760
  %v124 = vsub.f32 %v122, %v123
  %v125 = vand.u32 %v124, 4294901760
  %126 = vmatmul.f32.gmra.mxu0 %v125
  %v127 = vpop.f32.mrf.mxu0
  %v128 = vadd.f32 %v53, %v127
  %v129 = vand.u32 %v69, 4294901760
  %v130 = vsub.f32 %v69, %v129
  %v131 = vand.u32 %v130, 4294901760
  %v132 = vsub.f32 %v130, %v131
  %v133 = vand.u32 %v132, 4294901760
  %134 = vmatmul.f32.gmra.mxu0 %v133
  %v135 = vpop.f32.mrf.mxu0
  %v136 = vadd.f32 %v53, %v135
  %v137 = vand.u32 %v72, 4294901760
  %v138 = vsub.f32 %v72, %v137
  %v139 = vand.u32 %v138, 4294901760
  %v140 = vsub.f32 %v138, %v139
  %v141 = vand.u32 %v140, 4294901760
  %142 = vmatmul.f32.gmra.mxu0 %v141
  %v143 = vpop.f32.mrf.mxu0
  %v144 = vadd.f32 %v53, %v143
  %v145 = vand.u32 %v75, 4294901760
  %v146 = vsub.f32 %v75, %v145
  %v147 = vand.u32 %v146, 4294901760
  %v148 = vsub.f32 %v146, %v147
  %v149 = vand.u32 %v148, 4294901760
  %150 = vmatmul.f32.gmra.mxu0 %v149
  %v151 = vpop.f32.mrf.mxu0
  %v152 = vadd.f32 %v53, %v151
  %v153 = vand.u32 %v78, 4294901760
  %v154 = vsub.f32 %v78, %v153
  %v155 = vand.u32 %v154, 4294901760
  %v156 = vsub.f32 %v154, %v155
  %v157 = vand.u32 %v156, 4294901760
  %158 = vmatmul.f32.gmra.mxu0 %v157
  %v159 = vpop.f32.mrf.mxu0
  %v160 = vadd.f32 %v53, %v159
  %161 = vdwg.mxu0
  %162 = vmatpush.msra.mxu0 0.0
  %163 = vmatpush.msra.mxu0 0.0
  %164 = vmatpush.msra.mxu0 0.0
  %165 = vmatpush.msra.mxu0 0.0
  %166 = vmatpush.msra.mxu0 0.0
  %167 = vmatpush.msra.mxu0 0.0
  %168 = vmatpush.msra.mxu0 0.0
  %169 = vmatpush.msra.mxu0 0.0
  %170 = vmatpush.msra.mxu0 0.0
  %171 = vmatpush.msra.mxu0 0.0
  %172 = vmatpush.msra.mxu0 0.0
  %173 = vmatpush.msra.mxu0 0.0
  %174 = vmatpush.msra.mxu0 0.0
  %175 = vmatpush.msra.mxu0 0.0
  %176 = vmatpush.msra.mxu0 0.0
  %v177 = vand.u32 %v46, 4294901760
  %v178 = vsub.f32 %v46, %v177
  %v179 = vand.u32 %v178, 4294901760
  %v180 = vsub.f32 %v178, %v179
  %v181 = vand.u32 %v180, 4294901760
  %182 = vmatpush.msra.mxu0 %v181
  %v183 = vand.u32 %v57, 4294901760
  %184 = vmatmul.f32.gmra.mxu0 %v183
  %v185 = vpop.f32.mrf.mxu0
  %v186 = vadd.f32 %v104, %v185
  %v187 = vand.u32 %v60, 4294901760
  %188 = vmatmul.f32.gmra.mxu0 %v187
  %v189 = vpop.f32.mrf.mxu0
  %v190 = vadd.f32 %v112, %v189
  %v191 = vand.u32 %v63, 4294901760
  %192 = vmatmul.f32.gmra.mxu0 %v191
  %v193 = vpop.f32.mrf.mxu0
  %v194 = vadd.f32 %v120, %v193
  %v195 = vand.u32 %v66, 4294901760
  %196 = vmatmul.f32.gmra.mxu0 %v195
  %v197 = vpop.f32.mrf.mxu0
  %v198 = vadd.f32 %v128, %v197
  %v199 = vand.u32 %v69, 4294901760
  %200 = vmatmul.f32.gmra.mxu0 %v199
  %v201 = vpop.f32.mrf.mxu0
  %v202 = vadd.f32 %v136, %v201
  %v203 = vand.u32 %v72, 4294901760
  %204 = vmatmul.f32.gmra.mxu0 %v203
  %v205 = vpop.f32.mrf.mxu0
  %v206 = vadd.f32 %v144, %v205
  %v207 = vand.u32 %v75, 4294901760
  %208 = vmatmul.f32.gmra.mxu0 %v207
  %v209 = vpop.f32.mrf.mxu0
  %v210 = vadd.f32 %v152, %v209
  %v211 = vand.u32 %v78, 4294901760
  %212 = vmatmul.f32.gmra.mxu0 %v211
  %v213 = vpop.f32.mrf.mxu0
  %v214 = vadd.f32 %v160, %v213
  %215 = vdwg.mxu0
  %216 = vmatpush.msra.mxu0 0.0
  %217 = vmatpush.msra.mxu0 0.0
  %218 = vmatpush.msra.mxu0 0.0
  %219 = vmatpush.msra.mxu0 0.0
  %220 = vmatpush.msra.mxu0 0.0
  %221 = vmatpush.msra.mxu0 0.0
  %222 = vmatpush.msra.mxu0 0.0
  %223 = vmatpush.msra.mxu0 0.0
  %224 = vmatpush.msra.mxu0 0.0
  %225 = vmatpush.msra.mxu0 0.0
  %226 = vmatpush.msra.mxu0 0.0
  %227 = vmatpush.msra.mxu0 0.0
  %228 = vmatpush.msra.mxu0 0.0
  %229 = vmatpush.msra.mxu0 0.0
  %230 = vmatpush.msra.mxu0 0.0
  %v231 = vand.u32 %v46, 4294901760
  %v232 = vsub.f32 %v46, %v231
  %233 = vmatpush.msra.mxu0 %v232
  %v234 = vand.u32 %v57, 4294901760
  %v235 = vsub.f32 %v57, %v234
  %236 = vmatmul.f32.gmra.mxu0 %v235
  %v237 = vpop.f32.mrf.mxu0
  %v238 = vadd.f32 %v186, %v237
  %v239 = vand.u32 %v60, 4294901760
  %v240 = vsub.f32 %v60, %v239
  %241 = vmatmul.f32.gmra.mxu0 %v240
  %v242 = vpop.f32.mrf.mxu0
  %v243 = vadd.f32 %v190, %v242
  %v244 = vand.u32 %v63, 4294901760
  %v245 = vsub.f32 %v63, %v244
  %246 = vmatmul.f32.gmra.mxu0 %v245
  %v247 = vpop.f32.mrf.mxu0
  %v248 = vadd.f32 %v194, %v247
  %v249 = vand.u32 %v66, 4294901760
  %v250 = vsub.f32 %v66, %v249
  %251 = vmatmul.f32.gmra.mxu0 %v250
  %v252 = vpop.f32.mrf.mxu0
  %v253 = vadd.f32 %v198, %v252
  %v254 = vand.u32 %v69, 4294901760
  %v255 = vsub.f32 %v69, %v254
  %256 = vmatmul.f32.gmra.mxu0 %v255
  %v257 = vpop.f32.mrf.mxu0
  %v258 = vadd.f32 %v202, %v257
  %v259 = vand.u32 %v72, 4294901760
  %v260 = vsub.f32 %v72, %v259
  %261 = vmatmul.f32.gmra.mxu0 %v260
  %v262 = vpop.f32.mrf.mxu0
  %v263 = vadd.f32 %v206, %v262
  %v264 = vand.u32 %v75, 4294901760
  %v265 = vsub.f32 %v75, %v264
  %266 = vmatmul.f32.gmra.mxu0 %v265
  %v267 = vpop.f32.mrf.mxu0
  %v268 = vadd.f32 %v210, %v267
  %v269 = vand.u32 %v78, 4294901760
  %v270 = vsub.f32 %v78, %v269
  %271 = vmatmul.f32.gmra.mxu0 %v270
  %v272 = vpop.f32.mrf.mxu0
  %v273 = vadd.f32 %v214, %v272
  %274 = vdwg.mxu0
  %275 = vmatpush.msra.mxu0 0.0
  %276 = vmatpush.msra.mxu0 0.0
  %277 = vmatpush.msra.mxu0 0.0
  %278 = vmatpush.msra.mxu0 0.0
  %279 = vmatpush.msra.mxu0 0.0
  %280 = vmatpush.msra.mxu0 0.0
  %281 = vmatpush.msra.mxu0 0.0
  %282 = vmatpush.msra.mxu0 0.0
  %283 = vmatpush.msra.mxu0 0.0
  %284 = vmatpush.msra.mxu0 0.0
  %285 = vmatpush.msra.mxu0 0.0
  %286 = vmatpush.msra.mxu0 0.0
  %287 = vmatpush.msra.mxu0 0.0
  %288 = vmatpush.msra.mxu0 0.0
  %289 = vmatpush.msra.mxu0 0.0
  %v290 = vand.u32 %v46, 4294901760
  %291 = vmatpush.msra.mxu0 %v290
  %v292 = vand.u32 %v57, 4294901760
  %v293 = vsub.f32 %v57, %v292
  %v294 = vand.u32 %v293, 4294901760
  %295 = vmatmul.f32.gmra.mxu0 %v294
  %v296 = vpop.f32.mrf.mxu0
  %v297 = vadd.f32 %v238, %v296
  %v298 = vand.u32 %v60, 4294901760
  %v299 = vsub.f32 %v60, %v298
  %v300 = vand.u32 %v299, 4294901760
  %301 = vmatmul.f32.gmra.mxu0 %v300
  %v302 = vpop.f32.mrf.mxu0
  %v303 = vadd.f32 %v243, %v302
  %v304 = vand.u32 %v63, 4294901760
  %v305 = vsub.f32 %v63, %v304
  %v306 = vand.u32 %v305, 4294901760
  %307 = vmatmul.f32.gmra.mxu0 %v306
  %v308 = vpop.f32.mrf.mxu0
  %v309 = vadd.f32 %v248, %v308
  %v310 = vand.u32 %v66, 4294901760
  %v311 = vsub.f32 %v66, %v310
  %v312 = vand.u32 %v311, 4294901760
  %313 = vmatmul.f32.gmra.mxu0 %v312
  %v314 = vpop.f32.mrf.mxu0
  %v315 = vadd.f32 %v253, %v314
  %v316 = vand.u32 %v69, 4294901760
  %v317 = vsub.f32 %v69, %v316
  %v318 = vand.u32 %v317, 4294901760
  %319 = vmatmul.f32.gmra.mxu0 %v318
  %v320 = vpop.f32.mrf.mxu0
  %v321 = vadd.f32 %v258, %v320
  %v322 = vand.u32 %v72, 4294901760
  %v323 = vsub.f32 %v72, %v322
  %v324 = vand.u32 %v323, 4294901760
  %325 = vmatmul.f32.gmra.mxu0 %v324
  %v326 = vpop.f32.mrf.mxu0
  %v327 = vadd.f32 %v263, %v326
  %v328 = vand.u32 %v75, 4294901760
  %v329 = vsub.f32 %v75, %v328
  %v330 = vand.u32 %v329, 4294901760
  %331 = vmatmul.f32.gmra.mxu0 %v330
  %v332 = vpop.f32.mrf.mxu0
  %v333 = vadd.f32 %v268, %v332
  %v334 = vand.u32 %v78, 4294901760
  %v335 = vsub.f32 %v78, %v334
  %v336 = vand.u32 %v335, 4294901760
  %337 = vmatmul.f32.gmra.mxu0 %v336
  %v338 = vpop.f32.mrf.mxu0
  %v339 = vadd.f32 %v273, %v338
  %340 = vdwg.mxu0
  %341 = vmatpush.msra.mxu0 0.0
  %342 = vmatpush.msra.mxu0 0.0
  %343 = vmatpush.msra.mxu0 0.0
  %344 = vmatpush.msra.mxu0 0.0
  %345 = vmatpush.msra.mxu0 0.0
  %346 = vmatpush.msra.mxu0 0.0
  %347 = vmatpush.msra.mxu0 0.0
  %348 = vmatpush.msra.mxu0 0.0
  %349 = vmatpush.msra.mxu0 0.0
  %350 = vmatpush.msra.mxu0 0.0
  %351 = vmatpush.msra.mxu0 0.0
  %352 = vmatpush.msra.mxu0 0.0
  %353 = vmatpush.msra.mxu0 0.0
  %354 = vmatpush.msra.mxu0 0.0
  %355 = vmatpush.msra.mxu0 0.0
  %v356 = vand.u32 %v46, 4294901760
  %v357 = vsub.f32 %v46, %v356
  %v358 = vand.u32 %v357, 4294901760
  %359 = vmatpush.msra.mxu0 %v358
  %v360 = vand.u32 %v57, 4294901760
  %361 = vmatmul.f32.gmra.mxu0 %v360
  %v362 = vpop.f32.mrf.mxu0
  %v363 = vadd.f32 %v297, %v362
  %v364 = vand.u32 %v60, 4294901760
  %365 = vmatmul.f32.gmra.mxu0 %v364
  %v366 = vpop.f32.mrf.mxu0
  %v367 = vadd.f32 %v303, %v366
  %v368 = vand.u32 %v63, 4294901760
  %369 = vmatmul.f32.gmra.mxu0 %v368
  %v370 = vpop.f32.mrf.mxu0
  %v371 = vadd.f32 %v309, %v370
  %v372 = vand.u32 %v66, 4294901760
  %373 = vmatmul.f32.gmra.mxu0 %v372
  %v374 = vpop.f32.mrf.mxu0
  %v375 = vadd.f32 %v315, %v374
  %v376 = vand.u32 %v69, 4294901760
  %377 = vmatmul.f32.gmra.mxu0 %v376
  %v378 = vpop.f32.mrf.mxu0
  %v379 = vadd.f32 %v321, %v378
  %v380 = vand.u32 %v72, 4294901760
  %381 = vmatmul.f32.gmra.mxu0 %v380
  %v382 = vpop.f32.mrf.mxu0
  %v383 = vadd.f32 %v327, %v382
  %v384 = vand.u32 %v75, 4294901760
  %385 = vmatmul.f32.gmra.mxu0 %v384
  %v386 = vpop.f32.mrf.mxu0
  %v387 = vadd.f32 %v333, %v386
  %v388 = vand.u32 %v78, 4294901760
  %389 = vmatmul.f32.gmra.mxu0 %v388
  %v390 = vpop.f32.mrf.mxu0
  %v391 = vadd.f32 %v339, %v390
  %392 = vdwg.mxu0
  %393 = vmatpush.msra.mxu0 0.0
  %394 = vmatpush.msra.mxu0 0.0
  %395 = vmatpush.msra.mxu0 0.0
  %396 = vmatpush.msra.mxu0 0.0
  %397 = vmatpush.msra.mxu0 0.0
  %398 = vmatpush.msra.mxu0 0.0
  %399 = vmatpush.msra.mxu0 0.0
  %400 = vmatpush.msra.mxu0 0.0
  %401 = vmatpush.msra.mxu0 0.0
  %402 = vmatpush.msra.mxu0 0.0
  %403 = vmatpush.msra.mxu0 0.0
  %404 = vmatpush.msra.mxu0 0.0
  %405 = vmatpush.msra.mxu0 0.0
  %406 = vmatpush.msra.mxu0 0.0
  %407 = vmatpush.msra.mxu0 0.0
  %v408 = vand.u32 %v46, 4294901760
  %409 = vmatpush.msra.mxu0 %v408
  %v410 = vand.u32 %v57, 4294901760
  %411 = vmatmul.f32.gmra.mxu0 %v410
  %v412 = vpop.f32.mrf.mxu0
  %v413 = vadd.f32 %v363, %v412
  %v414 = vand.u32 %v60, 4294901760
  %415 = vmatmul.f32.gmra.mxu0 %v414
  %v416 = vpop.f32.mrf.mxu0
  %v417 = vadd.f32 %v367, %v416
  %v418 = vand.u32 %v63, 4294901760
  %419 = vmatmul.f32.gmra.mxu0 %v418
  %v420 = vpop.f32.mrf.mxu0
  %v421 = vadd.f32 %v371, %v420
  %v422 = vand.u32 %v66, 4294901760
  %423 = vmatmul.f32.gmra.mxu0 %v422
  %v424 = vpop.f32.mrf.mxu0
  %v425 = vadd.f32 %v375, %v424
  %v426 = vand.u32 %v69, 4294901760
  %427 = vmatmul.f32.gmra.mxu0 %v426
  %v428 = vpop.f32.mrf.mxu0
  %v429 = vadd.f32 %v379, %v428
  %v430 = vand.u32 %v72, 4294901760
  %431 = vmatmul.f32.gmra.mxu0 %v430
  %v432 = vpop.f32.mrf.mxu0
  %v433 = vadd.f32 %v383, %v432
  %v434 = vand.u32 %v75, 4294901760
  %435 = vmatmul.f32.gmra.mxu0 %v434
  %v436 = vpop.f32.mrf.mxu0
  %v437 = vadd.f32 %v387, %v436
  %v438 = vand.u32 %v78, 4294901760
  %439 = vmatmul.f32.gmra.mxu0 %v438
  %v440 = vpop.f32.mrf.mxu0
  %v441 = vadd.f32 %v391, %v440
  %442 = vdwg.mxu0
  %vm443 = vcmask 261120
  %v445 = vsel %vm443, 0.0, 0
  %447 = vmatpush.msra.mxu0 0.0
  %448 = vmatpush.msra.mxu0 0.0
  %449 = vmatpush.msra.mxu0 0.0
  %450 = vmatpush.msra.mxu0 0.0
  %451 = vmatpush.msra.mxu0 0.0
  %452 = vmatpush.msra.mxu0 0.0
  %453 = vmatpush.msra.mxu0 0.0
  %454 = vmatpush.msra.mxu0 0.0
  %455 = vmatpush.msra.mxu0 0.0
  %456 = vmatpush.msra.mxu0 0.0
  %457 = vmatpush.msra.mxu0 0.0
  %458 = vmatpush.msra.mxu0 0.0
  %v459 = vand.u32 %v50, 4294901760
  %460 = vmatpush.msra.mxu0 %v459
  %v461 = vand.u32 %v49, 4294901760
  %462 = vmatpush.msra.mxu0 %v461
  %v463 = vand.u32 %v48, 4294901760
  %464 = vmatpush.msra.mxu0 %v463
  %v465 = vand.u32 %v47, 4294901760
  %466 = vmatpush.msra.mxu0 %v465
  %v467 = vand.u32 %v445, 4294901760
  %v468 = vsub.f32 %v445, %v467
  %v469 = vand.u32 %v468, 4294901760
  %v470 = vsub.f32 %v468, %v469
  %v471 = vand.u32 %v470, 4294901760
  %472 = vmatmul.f32.gmra.mxu0 %v471
  %v473 = vpop.f32.mrf.mxu0
  %v474 = vadd.f32 0.0, %v473
  %475 = vdwg.mxu0
  %476 = vmatpush.msra.mxu0 0.0
  %477 = vmatpush.msra.mxu0 0.0
  %478 = vmatpush.msra.mxu0 0.0
  %479 = vmatpush.msra.mxu0 0.0
  %480 = vmatpush.msra.mxu0 0.0
  %481 = vmatpush.msra.mxu0 0.0
  %482 = vmatpush.msra.mxu0 0.0
  %483 = vmatpush.msra.mxu0 0.0
  %484 = vmatpush.msra.mxu0 0.0
  %485 = vmatpush.msra.mxu0 0.0
  %486 = vmatpush.msra.mxu0 0.0
  %487 = vmatpush.msra.mxu0 0.0
  %v488 = vand.u32 %v50, 4294901760
  %v489 = vsub.f32 %v50, %v488
  %v490 = vand.u32 %v489, 4294901760
  %v491 = vsub.f32 %v489, %v490
  %v492 = vand.u32 %v491, 4294901760
  %493 = vmatpush.msra.mxu0 %v492
  %v494 = vand.u32 %v49, 4294901760
  %v495 = vsub.f32 %v49, %v494
  %v496 = vand.u32 %v495, 4294901760
  %v497 = vsub.f32 %v495, %v496
  %v498 = vand.u32 %v497, 4294901760
  %499 = vmatpush.msra.mxu0 %v498
  %v500 = vand.u32 %v48, 4294901760
  %v501 = vsub.f32 %v48, %v500
  %v502 = vand.u32 %v501, 4294901760
  %v503 = vsub.f32 %v501, %v502
  %v504 = vand.u32 %v503, 4294901760
  %505 = vmatpush.msra.mxu0 %v504
  %v506 = vand.u32 %v47, 4294901760
  %v507 = vsub.f32 %v47, %v506
  %v508 = vand.u32 %v507, 4294901760
  %v509 = vsub.f32 %v507, %v508
  %v510 = vand.u32 %v509, 4294901760
  %511 = vmatpush.msra.mxu0 %v510
  %v512 = vand.u32 %v445, 4294901760
  %513 = vmatmul.f32.gmra.mxu0 %v512
  %v514 = vpop.f32.mrf.mxu0
  %v515 = vadd.f32 %v474, %v514
  %516 = vdwg.mxu0
  %517 = vmatpush.msra.mxu0 0.0
  %518 = vmatpush.msra.mxu0 0.0
  %519 = vmatpush.msra.mxu0 0.0
  %520 = vmatpush.msra.mxu0 0.0
  %521 = vmatpush.msra.mxu0 0.0
  %522 = vmatpush.msra.mxu0 0.0
  %523 = vmatpush.msra.mxu0 0.0
  %524 = vmatpush.msra.mxu0 0.0
  %525 = vmatpush.msra.mxu0 0.0
  %526 = vmatpush.msra.mxu0 0.0
  %527 = vmatpush.msra.mxu0 0.0
  %528 = vmatpush.msra.mxu0 0.0
  %v529 = vand.u32 %v50, 4294901760
  %v530 = vsub.f32 %v50, %v529
  %531 = vmatpush.msra.mxu0 %v530
  %v532 = vand.u32 %v49, 4294901760
  %v533 = vsub.f32 %v49, %v532
  %534 = vmatpush.msra.mxu0 %v533
  %v535 = vand.u32 %v48, 4294901760
  %v536 = vsub.f32 %v48, %v535
  %537 = vmatpush.msra.mxu0 %v536
  %v538 = vand.u32 %v47, 4294901760
  %v539 = vsub.f32 %v47, %v538
  %540 = vmatpush.msra.mxu0 %v539
  %v541 = vand.u32 %v445, 4294901760
  %v542 = vsub.f32 %v445, %v541
  %543 = vmatmul.f32.gmra.mxu0 %v542
  %v544 = vpop.f32.mrf.mxu0
  %v545 = vadd.f32 %v515, %v544
  %546 = vdwg.mxu0
  %547 = vmatpush.msra.mxu0 0.0
  %548 = vmatpush.msra.mxu0 0.0
  %549 = vmatpush.msra.mxu0 0.0
  %550 = vmatpush.msra.mxu0 0.0
  %551 = vmatpush.msra.mxu0 0.0
  %552 = vmatpush.msra.mxu0 0.0
  %553 = vmatpush.msra.mxu0 0.0
  %554 = vmatpush.msra.mxu0 0.0
  %555 = vmatpush.msra.mxu0 0.0
  %556 = vmatpush.msra.mxu0 0.0
  %557 = vmatpush.msra.mxu0 0.0
  %558 = vmatpush.msra.mxu0 0.0
  %v559 = vand.u32 %v50, 4294901760
  %560 = vmatpush.msra.mxu0 %v559
  %v561 = vand.u32 %v49, 4294901760
  %562 = vmatpush.msra.mxu0 %v561
  %v563 = vand.u32 %v48, 4294901760
  %564 = vmatpush.msra.mxu0 %v563
  %v565 = vand.u32 %v47, 4294901760
  %566 = vmatpush.msra.mxu0 %v565
  %v567 = vand.u32 %v445, 4294901760
  %v568 = vsub.f32 %v445, %v567
  %v569 = vand.u32 %v568, 4294901760
  %570 = vmatmul.f32.gmra.mxu0 %v569
  %v571 = vpop.f32.mrf.mxu0
  %v572 = vadd.f32 %v545, %v571
  %573 = vdwg.mxu0
  %574 = vmatpush.msra.mxu0 0.0
  %575 = vmatpush.msra.mxu0 0.0
  %576 = vmatpush.msra.mxu0 0.0
  %577 = vmatpush.msra.mxu0 0.0
  %578 = vmatpush.msra.mxu0 0.0
  %579 = vmatpush.msra.mxu0 0.0
  %580 = vmatpush.msra.mxu0 0.0
  %581 = vmatpush.msra.mxu0 0.0
  %582 = vmatpush.msra.mxu0 0.0
  %583 = vmatpush.msra.mxu0 0.0
  %584 = vmatpush.msra.mxu0 0.0
  %585 = vmatpush.msra.mxu0 0.0
  %v586 = vand.u32 %v50, 4294901760
  %v587 = vsub.f32 %v50, %v586
  %v588 = vand.u32 %v587, 4294901760
  %589 = vmatpush.msra.mxu0 %v588
  %v590 = vand.u32 %v49, 4294901760
  %v591 = vsub.f32 %v49, %v590
  %v592 = vand.u32 %v591, 4294901760
  %593 = vmatpush.msra.mxu0 %v592
  %v594 = vand.u32 %v48, 4294901760
  %v595 = vsub.f32 %v48, %v594
  %v596 = vand.u32 %v595, 4294901760
  %597 = vmatpush.msra.mxu0 %v596
  %v598 = vand.u32 %v47, 4294901760
  %v599 = vsub.f32 %v47, %v598
  %v600 = vand.u32 %v599, 4294901760
  %601 = vmatpush.msra.mxu0 %v600
  %v602 = vand.u32 %v445, 4294901760
  %603 = vmatmul.f32.gmra.mxu0 %v602
  %v604 = vpop.f32.mrf.mxu0
  %v605 = vadd.f32 %v572, %v604
  %606 = vdwg.mxu0
  %607 = vmatpush.msra.mxu0 0.0
  %608 = vmatpush.msra.mxu0 0.0
  %609 = vmatpush.msra.mxu0 0.0
  %610 = vmatpush.msra.mxu0 0.0
  %611 = vmatpush.msra.mxu0 0.0
  %612 = vmatpush.msra.mxu0 0.0
  %613 = vmatpush.msra.mxu0 0.0
  %614 = vmatpush.msra.mxu0 0.0
  %615 = vmatpush.msra.mxu0 0.0
  %616 = vmatpush.msra.mxu0 0.0
  %617 = vmatpush.msra.mxu0 0.0
  %618 = vmatpush.msra.mxu0 0.0
  %v619 = vand.u32 %v50, 4294901760
  %620 = vmatpush.msra.mxu0 %v619
  %v621 = vand.u32 %v49, 4294901760
  %622 = vmatpush.msra.mxu0 %v621
  %v623 = vand.u32 %v48, 4294901760
  %624 = vmatpush.msra.mxu0 %v623
  %v625 = vand.u32 %v47, 4294901760
  %626 = vmatpush.msra.mxu0 %v625
  %v627 = vand.u32 %v445, 4294901760
  %628 = vmatmul.f32.gmra.mxu0 %v627
  %v629 = vpop.f32.mrf.mxu0
  %v630 = vadd.f32 %v605, %v629
  %631 = vdwg.mxu0
  %v632 = vadd.f32 %v413, %v630
  %v633 = vmul.f32 %v632, %v37
  %v634 = vtanh.pop %v633
  %v635 = vadd.f32 %v634, 1.0
  %v636 = vmul.f32 %v635, 0.5
  %v637 = vsel %vm36, %v634, %v636
  %v638 = vmul.f32 %v637, 0.0
  %640 = vrot.lane.b32.xlu0 %v637, 64
  %v641 = vpop.permute.xlu0 %640
  %v643 = vmul.f32 %v637, %v641
  %645 = vrot.lane.b32.xlu0 %v643, 32
  %v646 = vpop.permute.xlu0 %645
  %v648 = vadd.f32 %v638, %v646
  %v649 = vtanh.pop %v648
  %651 = vrot.lane.b32.xlu0 %v649, 64
  %v652 = vpop.permute.xlu0 %651
  %v654 = vmul.f32 %v637, %v652
  %656 = vrot.lane.b32.xlu0 %v654, 32
  %v657 = vpop.permute.xlu0 %656
  %v658 = vsel %vm443, %v657, 0
  %660 = vmatpush.msra.mxu0 0.0
  %661 = vmatpush.msra.mxu0 0.0
  %662 = vmatpush.msra.mxu0 0.0
  %663 = vmatpush.msra.mxu0 0.0
  %664 = vmatpush.msra.mxu0 0.0
  %665 = vmatpush.msra.mxu0 0.0
  %666 = vmatpush.msra.mxu0 0.0
  %667 = vmatpush.msra.mxu0 0.0
  %668 = vmatpush.msra.mxu0 0.0
  %669 = vmatpush.msra.mxu0 0.0
  %670 = vmatpush.msra.mxu0 0.0
  %671 = vmatpush.msra.mxu0 0.0
  %v672 = vand.u32 %v50, 4294901760
  %673 = vmatpush.msra.mxu0 %v672
  %v674 = vand.u32 %v49, 4294901760
  %675 = vmatpush.msra.mxu0 %v674
  %v676 = vand.u32 %v48, 4294901760
  %677 = vmatpush.msra.mxu0 %v676
  %v678 = vand.u32 %v47, 4294901760
  %679 = vmatpush.msra.mxu0 %v678
  %v680 = vand.u32 %v658, 4294901760
  %v681 = vsub.f32 %v658, %v680
  %v682 = vand.u32 %v681, 4294901760
  %v683 = vsub.f32 %v681, %v682
  %v684 = vand.u32 %v683, 4294901760
  %685 = vmatmul.f32.gmra.mxu0 %v684
  %v686 = vpop.f32.mrf.mxu0
  %v687 = vadd.f32 0.0, %v686
  %688 = vdwg.mxu0
  %689 = vmatpush.msra.mxu0 0.0
  %690 = vmatpush.msra.mxu0 0.0
  %691 = vmatpush.msra.mxu0 0.0
  %692 = vmatpush.msra.mxu0 0.0
  %693 = vmatpush.msra.mxu0 0.0
  %694 = vmatpush.msra.mxu0 0.0
  %695 = vmatpush.msra.mxu0 0.0
  %696 = vmatpush.msra.mxu0 0.0
  %697 = vmatpush.msra.mxu0 0.0
  %698 = vmatpush.msra.mxu0 0.0
  %699 = vmatpush.msra.mxu0 0.0
  %700 = vmatpush.msra.mxu0 0.0
  %v701 = vand.u32 %v50, 4294901760
  %v702 = vsub.f32 %v50, %v701
  %v703 = vand.u32 %v702, 4294901760
  %v704 = vsub.f32 %v702, %v703
  %v705 = vand.u32 %v704, 4294901760
  %706 = vmatpush.msra.mxu0 %v705
  %v707 = vand.u32 %v49, 4294901760
  %v708 = vsub.f32 %v49, %v707
  %v709 = vand.u32 %v708, 4294901760
  %v710 = vsub.f32 %v708, %v709
  %v711 = vand.u32 %v710, 4294901760
  %712 = vmatpush.msra.mxu0 %v711
  %v713 = vand.u32 %v48, 4294901760
  %v714 = vsub.f32 %v48, %v713
  %v715 = vand.u32 %v714, 4294901760
  %v716 = vsub.f32 %v714, %v715
  %v717 = vand.u32 %v716, 4294901760
  %718 = vmatpush.msra.mxu0 %v717
  %v719 = vand.u32 %v47, 4294901760
  %v720 = vsub.f32 %v47, %v719
  %v721 = vand.u32 %v720, 4294901760
  %v722 = vsub.f32 %v720, %v721
  %v723 = vand.u32 %v722, 4294901760
  %724 = vmatpush.msra.mxu0 %v723
  %v725 = vand.u32 %v658, 4294901760
  %726 = vmatmul.f32.gmra.mxu0 %v725
  %v727 = vpop.f32.mrf.mxu0
  %v728 = vadd.f32 %v687, %v727
  %729 = vdwg.mxu0
  %730 = vmatpush.msra.mxu0 0.0
  %731 = vmatpush.msra.mxu0 0.0
  %732 = vmatpush.msra.mxu0 0.0
  %733 = vmatpush.msra.mxu0 0.0
  %734 = vmatpush.msra.mxu0 0.0
  %735 = vmatpush.msra.mxu0 0.0
  %736 = vmatpush.msra.mxu0 0.0
  %737 = vmatpush.msra.mxu0 0.0
  %738 = vmatpush.msra.mxu0 0.0
  %739 = vmatpush.msra.mxu0 0.0
  %740 = vmatpush.msra.mxu0 0.0
  %741 = vmatpush.msra.mxu0 0.0
  %v742 = vand.u32 %v50, 4294901760
  %v743 = vsub.f32 %v50, %v742
  %744 = vmatpush.msra.mxu0 %v743
  %v745 = vand.u32 %v49, 4294901760
  %v746 = vsub.f32 %v49, %v745
  %747 = vmatpush.msra.mxu0 %v746
  %v748 = vand.u32 %v48, 4294901760
  %v749 = vsub.f32 %v48, %v748
  %750 = vmatpush.msra.mxu0 %v749
  %v751 = vand.u32 %v47, 4294901760
  %v752 = vsub.f32 %v47, %v751
  %753 = vmatpush.msra.mxu0 %v752
  %v754 = vand.u32 %v658, 4294901760
  %v755 = vsub.f32 %v658, %v754
  %756 = vmatmul.f32.gmra.mxu0 %v755
  %v757 = vpop.f32.mrf.mxu0
  %v758 = vadd.f32 %v728, %v757
  %759 = vdwg.mxu0
  %760 = vmatpush.msra.mxu0 0.0
  %761 = vmatpush.msra.mxu0 0.0
  %762 = vmatpush.msra.mxu0 0.0
  %763 = vmatpush.msra.mxu0 0.0
  %764 = vmatpush.msra.mxu0 0.0
  %765 = vmatpush.msra.mxu0 0.0
  %766 = vmatpush.msra.mxu0 0.0
  %767 = vmatpush.msra.mxu0 0.0
  %768 = vmatpush.msra.mxu0 0.0
  %769 = vmatpush.msra.mxu0 0.0
  %770 = vmatpush.msra.mxu0 0.0
  %771 = vmatpush.msra.mxu0 0.0
  %v772 = vand.u32 %v50, 4294901760
  %773 = vmatpush.msra.mxu0 %v772
  %v774 = vand.u32 %v49, 4294901760
  %775 = vmatpush.msra.mxu0 %v774
  %v776 = vand.u32 %v48, 4294901760
  %777 = vmatpush.msra.mxu0 %v776
  %v778 = vand.u32 %v47, 4294901760
  %779 = vmatpush.msra.mxu0 %v778
  %v780 = vand.u32 %v658, 4294901760
  %v781 = vsub.f32 %v658, %v780
  %v782 = vand.u32 %v781, 4294901760
  %783 = vmatmul.f32.gmra.mxu0 %v782
  %v784 = vpop.f32.mrf.mxu0
  %v785 = vadd.f32 %v758, %v784
  %786 = vdwg.mxu0
  %787 = vmatpush.msra.mxu0 0.0
  %788 = vmatpush.msra.mxu0 0.0
  %789 = vmatpush.msra.mxu0 0.0
  %790 = vmatpush.msra.mxu0 0.0
  %791 = vmatpush.msra.mxu0 0.0
  %792 = vmatpush.msra.mxu0 0.0
  %793 = vmatpush.msra.mxu0 0.0
  %794 = vmatpush.msra.mxu0 0.0
  %795 = vmatpush.msra.mxu0 0.0
  %796 = vmatpush.msra.mxu0 0.0
  %797 = vmatpush.msra.mxu0 0.0
  %798 = vmatpush.msra.mxu0 0.0
  %v799 = vand.u32 %v50, 4294901760
  %v800 = vsub.f32 %v50, %v799
  %v801 = vand.u32 %v800, 4294901760
  %802 = vmatpush.msra.mxu0 %v801
  %v803 = vand.u32 %v49, 4294901760
  %v804 = vsub.f32 %v49, %v803
  %v805 = vand.u32 %v804, 4294901760
  %806 = vmatpush.msra.mxu0 %v805
  %v807 = vand.u32 %v48, 4294901760
  %v808 = vsub.f32 %v48, %v807
  %v809 = vand.u32 %v808, 4294901760
  %810 = vmatpush.msra.mxu0 %v809
  %v811 = vand.u32 %v47, 4294901760
  %v812 = vsub.f32 %v47, %v811
  %v813 = vand.u32 %v812, 4294901760
  %814 = vmatpush.msra.mxu0 %v813
  %v815 = vand.u32 %v658, 4294901760
  %816 = vmatmul.f32.gmra.mxu0 %v815
  %v817 = vpop.f32.mrf.mxu0
  %v818 = vadd.f32 %v785, %v817
  %819 = vdwg.mxu0
  %820 = vmatpush.msra.mxu0 0.0
  %821 = vmatpush.msra.mxu0 0.0
  %822 = vmatpush.msra.mxu0 0.0
  %823 = vmatpush.msra.mxu0 0.0
  %824 = vmatpush.msra.mxu0 0.0
  %825 = vmatpush.msra.mxu0 0.0
  %826 = vmatpush.msra.mxu0 0.0
  %827 = vmatpush.msra.mxu0 0.0
  %828 = vmatpush.msra.mxu0 0.0
  %829 = vmatpush.msra.mxu0 0.0
  %830 = vmatpush.msra.mxu0 0.0
  %831 = vmatpush.msra.mxu0 0.0
  %v832 = vand.u32 %v50, 4294901760
  %833 = vmatpush.msra.mxu0 %v832
  %v834 = vand.u32 %v49, 4294901760
  %835 = vmatpush.msra.mxu0 %v834
  %v836 = vand.u32 %v48, 4294901760
  %837 = vmatpush.msra.mxu0 %v836
  %v838 = vand.u32 %v47, 4294901760
  %839 = vmatpush.msra.mxu0 %v838
  %v840 = vand.u32 %v658, 4294901760
  %841 = vmatmul.f32.gmra.mxu0 %v840
  %v842 = vpop.f32.mrf.mxu0
  %v843 = vadd.f32 %v818, %v842
  %844 = vdwg.mxu0
  %v845 = vadd.f32 %v417, %v843
  %v846 = vmul.f32 %v845, %v37
  %v847 = vtanh.pop %v846
  %v848 = vadd.f32 %v847, 1.0
  %v849 = vmul.f32 %v848, 0.5
  %v850 = vsel %vm36, %v847, %v849
  %v851 = vmul.f32 %v850, %v648
  %853 = vrot.lane.b32.xlu0 %v850, 64
  %v854 = vpop.permute.xlu0 %853
  %v856 = vmul.f32 %v850, %v854
  %858 = vrot.lane.b32.xlu0 %v856, 32
  %v859 = vpop.permute.xlu0 %858
  %v861 = vadd.f32 %v851, %v859
  %v862 = vtanh.pop %v861
  %864 = vrot.lane.b32.xlu0 %v862, 64
  %v865 = vpop.permute.xlu0 %864
  %v867 = vmul.f32 %v850, %v865
  %869 = vrot.lane.b32.xlu0 %v867, 32
  %v870 = vpop.permute.xlu0 %869
  %v871 = vsel %vm443, %v870, 0
  %873 = vmatpush.msra.mxu0 0.0
  %874 = vmatpush.msra.mxu0 0.0
  %875 = vmatpush.msra.mxu0 0.0
  %876 = vmatpush.msra.mxu0 0.0
  %877 = vmatpush.msra.mxu0 0.0
  %878 = vmatpush.msra.mxu0 0.0
  %879 = vmatpush.msra.mxu0 0.0
  %880 = vmatpush.msra.mxu0 0.0
  %881 = vmatpush.msra.mxu0 0.0
  %882 = vmatpush.msra.mxu0 0.0
  %883 = vmatpush.msra.mxu0 0.0
  %884 = vmatpush.msra.mxu0 0.0
  %v885 = vand.u32 %v50, 4294901760
  %886 = vmatpush.msra.mxu0 %v885
  %v887 = vand.u32 %v49, 4294901760
  %888 = vmatpush.msra.mxu0 %v887
  %v889 = vand.u32 %v48, 4294901760
  %890 = vmatpush.msra.mxu0 %v889
  %v891 = vand.u32 %v47, 4294901760
  %892 = vmatpush.msra.mxu0 %v891
  %v893 = vand.u32 %v871, 4294901760
  %v894 = vsub.f32 %v871, %v893
  %v895 = vand.u32 %v894, 4294901760
  %v896 = vsub.f32 %v894, %v895
  %v897 = vand.u32 %v896, 4294901760
  %898 = vmatmul.f32.gmra.mxu0 %v897
  %v899 = vpop.f32.mrf.mxu0
  %v900 = vadd.f32 0.0, %v899
  %901 = vdwg.mxu0
  %902 = vmatpush.msra.mxu0 0.0
  %903 = vmatpush.msra.mxu0 0.0
  %904 = vmatpush.msra.mxu0 0.0
  %905 = vmatpush.msra.mxu0 0.0
  %906 = vmatpush.msra.mxu0 0.0
  %907 = vmatpush.msra.mxu0 0.0
  %908 = vmatpush.msra.mxu0 0.0
  %909 = vmatpush.msra.mxu0 0.0
  %910 = vmatpush.msra.mxu0 0.0
  %911 = vmatpush.msra.mxu0 0.0
  %912 = vmatpush.msra.mxu0 0.0
  %913 = vmatpush.msra.mxu0 0.0
  %v914 = vand.u32 %v50, 4294901760
  %v915 = vsub.f32 %v50, %v914
  %v916 = vand.u32 %v915, 4294901760
  %v917 = vsub.f32 %v915, %v916
  %v918 = vand.u32 %v917, 4294901760
  %919 = vmatpush.msra.mxu0 %v918
  %v920 = vand.u32 %v49, 4294901760
  %v921 = vsub.f32 %v49, %v920
  %v922 = vand.u32 %v921, 4294901760
  %v923 = vsub.f32 %v921, %v922
  %v924 = vand.u32 %v923, 4294901760
  %925 = vmatpush.msra.mxu0 %v924
  %v926 = vand.u32 %v48, 4294901760
  %v927 = vsub.f32 %v48, %v926
  %v928 = vand.u32 %v927, 4294901760
  %v929 = vsub.f32 %v927, %v928
  %v930 = vand.u32 %v929, 4294901760
  %931 = vmatpush.msra.mxu0 %v930
  %v932 = vand.u32 %v47, 4294901760
  %v933 = vsub.f32 %v47, %v932
  %v934 = vand.u32 %v933, 4294901760
  %v935 = vsub.f32 %v933, %v934
  %v936 = vand.u32 %v935, 4294901760
  %937 = vmatpush.msra.mxu0 %v936
  %v938 = vand.u32 %v871, 4294901760
  %939 = vmatmul.f32.gmra.mxu0 %v938
  %v940 = vpop.f32.mrf.mxu0
  %v941 = vadd.f32 %v900, %v940
  %942 = vdwg.mxu0
  %943 = vmatpush.msra.mxu0 0.0
  %944 = vmatpush.msra.mxu0 0.0
  %945 = vmatpush.msra.mxu0 0.0
  %946 = vmatpush.msra.mxu0 0.0
  %947 = vmatpush.msra.mxu0 0.0
  %948 = vmatpush.msra.mxu0 0.0
  %949 = vmatpush.msra.mxu0 0.0
  %950 = vmatpush.msra.mxu0 0.0
  %951 = vmatpush.msra.mxu0 0.0
  %952 = vmatpush.msra.mxu0 0.0
  %953 = vmatpush.msra.mxu0 0.0
  %954 = vmatpush.msra.mxu0 0.0
  %v955 = vand.u32 %v50, 4294901760
  %v956 = vsub.f32 %v50, %v955
  %957 = vmatpush.msra.mxu0 %v956
  %v958 = vand.u32 %v49, 4294901760
  %v959 = vsub.f32 %v49, %v958
  %960 = vmatpush.msra.mxu0 %v959
  %v961 = vand.u32 %v48, 4294901760
  %v962 = vsub.f32 %v48, %v961
  %963 = vmatpush.msra.mxu0 %v962
  %v964 = vand.u32 %v47, 4294901760
  %v965 = vsub.f32 %v47, %v964
  %966 = vmatpush.msra.mxu0 %v965
  %v967 = vand.u32 %v871, 4294901760
  %v968 = vsub.f32 %v871, %v967
  %969 = vmatmul.f32.gmra.mxu0 %v968
  %v970 = vpop.f32.mrf.mxu0
  %v971 = vadd.f32 %v941, %v970
  %972 = vdwg.mxu0
  %973 = vmatpush.msra.mxu0 0.0
  %974 = vmatpush.msra.mxu0 0.0
  %975 = vmatpush.msra.mxu0 0.0
  %976 = vmatpush.msra.mxu0 0.0
  %977 = vmatpush.msra.mxu0 0.0
  %978 = vmatpush.msra.mxu0 0.0
  %979 = vmatpush.msra.mxu0 0.0
  %980 = vmatpush.msra.mxu0 0.0
  %981 = vmatpush.msra.mxu0 0.0
  %982 = vmatpush.msra.mxu0 0.0
  %983 = vmatpush.msra.mxu0 0.0
  %984 = vmatpush.msra.mxu0 0.0
  %v985 = vand.u32 %v50, 4294901760
  %986 = vmatpush.msra.mxu0 %v985
  %v987 = vand.u32 %v49, 4294901760
  %988 = vmatpush.msra.mxu0 %v987
  %v989 = vand.u32 %v48, 4294901760
  %990 = vmatpush.msra.mxu0 %v989
  %v991 = vand.u32 %v47, 4294901760
  %992 = vmatpush.msra.mxu0 %v991
  %v993 = vand.u32 %v871, 4294901760
  %v994 = vsub.f32 %v871, %v993
  %v995 = vand.u32 %v994, 4294901760
  %996 = vmatmul.f32.gmra.mxu0 %v995
  %v997 = vpop.f32.mrf.mxu0
  %v998 = vadd.f32 %v971, %v997
  %999 = vdwg.mxu0
  %1000 = vmatpush.msra.mxu0 0.0
  %1001 = vmatpush.msra.mxu0 0.0
  %1002 = vmatpush.msra.mxu0 0.0
  %1003 = vmatpush.msra.mxu0 0.0
  %1004 = vmatpush.msra.mxu0 0.0
  %1005 = vmatpush.msra.mxu0 0.0
  %1006 = vmatpush.msra.mxu0 0.0
  %1007 = vmatpush.msra.mxu0 0.0
  %1008 = vmatpush.msra.mxu0 0.0
  %1009 = vmatpush.msra.mxu0 0.0
  %1010 = vmatpush.msra.mxu0 0.0
  %1011 = vmatpush.msra.mxu0 0.0
  %v1012 = vand.u32 %v50, 4294901760
  %v1013 = vsub.f32 %v50, %v1012
  %v1014 = vand.u32 %v1013, 4294901760
  %1015 = vmatpush.msra.mxu0 %v1014
  %v1016 = vand.u32 %v49, 4294901760
  %v1017 = vsub.f32 %v49, %v1016
  %v1018 = vand.u32 %v1017, 4294901760
  %1019 = vmatpush.msra.mxu0 %v1018
  %v1020 = vand.u32 %v48, 4294901760
  %v1021 = vsub.f32 %v48, %v1020
  %v1022 = vand.u32 %v1021, 4294901760
  %1023 = vmatpush.msra.mxu0 %v1022
  %v1024 = vand.u32 %v47, 4294901760
  %v1025 = vsub.f32 %v47, %v1024
  %v1026 = vand.u32 %v1025, 4294901760
  %1027 = vmatpush.msra.mxu0 %v1026
  %v1028 = vand.u32 %v871, 4294901760
  %1029 = vmatmul.f32.gmra.mxu0 %v1028
  %v1030 = vpop.f32.mrf.mxu0
  %v1031 = vadd.f32 %v998, %v1030
  %1032 = vdwg.mxu0
  %1033 = vmatpush.msra.mxu0 0.0
  %1034 = vmatpush.msra.mxu0 0.0
  %1035 = vmatpush.msra.mxu0 0.0
  %1036 = vmatpush.msra.mxu0 0.0
  %1037 = vmatpush.msra.mxu0 0.0
  %1038 = vmatpush.msra.mxu0 0.0
  %1039 = vmatpush.msra.mxu0 0.0
  %1040 = vmatpush.msra.mxu0 0.0
  %1041 = vmatpush.msra.mxu0 0.0
  %1042 = vmatpush.msra.mxu0 0.0
  %1043 = vmatpush.msra.mxu0 0.0
  %1044 = vmatpush.msra.mxu0 0.0
  %v1045 = vand.u32 %v50, 4294901760
  %1046 = vmatpush.msra.mxu0 %v1045
  %v1047 = vand.u32 %v49, 4294901760
  %1048 = vmatpush.msra.mxu0 %v1047
  %v1049 = vand.u32 %v48, 4294901760
  %1050 = vmatpush.msra.mxu0 %v1049
  %v1051 = vand.u32 %v47, 4294901760
  %1052 = vmatpush.msra.mxu0 %v1051
  %v1053 = vand.u32 %v871, 4294901760
  %1054 = vmatmul.f32.gmra.mxu0 %v1053
  %v1055 = vpop.f32.mrf.mxu0
  %v1056 = vadd.f32 %v1031, %v1055
  %1057 = vdwg.mxu0
  %v1058 = vadd.f32 %v421, %v1056
  %v1059 = vmul.f32 %v1058, %v37
  %v1060 = vtanh.pop %v1059
  %v1061 = vadd.f32 %v1060, 1.0
  %v1062 = vmul.f32 %v1061, 0.5
  %v1063 = vsel %vm36, %v1060, %v1062
  %v1064 = vmul.f32 %v1063, %v861
  %1066 = vrot.lane.b32.xlu0 %v1063, 64
  %v1067 = vpop.permute.xlu0 %1066
  %v1069 = vmul.f32 %v1063, %v1067
  %1071 = vrot.lane.b32.xlu0 %v1069, 32
  %v1072 = vpop.permute.xlu0 %1071
  %v1074 = vadd.f32 %v1064, %v1072
  %v1075 = vtanh.pop %v1074
  %1077 = vrot.lane.b32.xlu0 %v1075, 64
  %v1078 = vpop.permute.xlu0 %1077
  %v1080 = vmul.f32 %v1063, %v1078
  %1082 = vrot.lane.b32.xlu0 %v1080, 32
  %v1083 = vpop.permute.xlu0 %1082
  %v1084 = vsel %vm443, %v1083, 0
  %1086 = vmatpush.msra.mxu0 0.0
  %1087 = vmatpush.msra.mxu0 0.0
  %1088 = vmatpush.msra.mxu0 0.0
  %1089 = vmatpush.msra.mxu0 0.0
  %1090 = vmatpush.msra.mxu0 0.0
  %1091 = vmatpush.msra.mxu0 0.0
  %1092 = vmatpush.msra.mxu0 0.0
  %1093 = vmatpush.msra.mxu0 0.0
  %1094 = vmatpush.msra.mxu0 0.0
  %1095 = vmatpush.msra.mxu0 0.0
  %1096 = vmatpush.msra.mxu0 0.0
  %1097 = vmatpush.msra.mxu0 0.0
  %v1098 = vand.u32 %v50, 4294901760
  %1099 = vmatpush.msra.mxu0 %v1098
  %v1100 = vand.u32 %v49, 4294901760
  %1101 = vmatpush.msra.mxu0 %v1100
  %v1102 = vand.u32 %v48, 4294901760
  %1103 = vmatpush.msra.mxu0 %v1102
  %v1104 = vand.u32 %v47, 4294901760
  %1105 = vmatpush.msra.mxu0 %v1104
  %v1106 = vand.u32 %v1084, 4294901760
  %v1107 = vsub.f32 %v1084, %v1106
  %v1108 = vand.u32 %v1107, 4294901760
  %v1109 = vsub.f32 %v1107, %v1108
  %v1110 = vand.u32 %v1109, 4294901760
  %1111 = vmatmul.f32.gmra.mxu0 %v1110
  %v1112 = vpop.f32.mrf.mxu0
  %v1113 = vadd.f32 0.0, %v1112
  %1114 = vdwg.mxu0
  %1115 = vmatpush.msra.mxu0 0.0
  %1116 = vmatpush.msra.mxu0 0.0
  %1117 = vmatpush.msra.mxu0 0.0
  %1118 = vmatpush.msra.mxu0 0.0
  %1119 = vmatpush.msra.mxu0 0.0
  %1120 = vmatpush.msra.mxu0 0.0
  %1121 = vmatpush.msra.mxu0 0.0
  %1122 = vmatpush.msra.mxu0 0.0
  %1123 = vmatpush.msra.mxu0 0.0
  %1124 = vmatpush.msra.mxu0 0.0
  %1125 = vmatpush.msra.mxu0 0.0
  %1126 = vmatpush.msra.mxu0 0.0
  %v1127 = vand.u32 %v50, 4294901760
  %v1128 = vsub.f32 %v50, %v1127
  %v1129 = vand.u32 %v1128, 4294901760
  %v1130 = vsub.f32 %v1128, %v1129
  %v1131 = vand.u32 %v1130, 4294901760
  %1132 = vmatpush.msra.mxu0 %v1131
  %v1133 = vand.u32 %v49, 4294901760
  %v1134 = vsub.f32 %v49, %v1133
  %v1135 = vand.u32 %v1134, 4294901760
  %v1136 = vsub.f32 %v1134, %v1135
  %v1137 = vand.u32 %v1136, 4294901760
  %1138 = vmatpush.msra.mxu0 %v1137
  %v1139 = vand.u32 %v48, 4294901760
  %v1140 = vsub.f32 %v48, %v1139
  %v1141 = vand.u32 %v1140, 4294901760
  %v1142 = vsub.f32 %v1140, %v1141
  %v1143 = vand.u32 %v1142, 4294901760
  %1144 = vmatpush.msra.mxu0 %v1143
  %v1145 = vand.u32 %v47, 4294901760
  %v1146 = vsub.f32 %v47, %v1145
  %v1147 = vand.u32 %v1146, 4294901760
  %v1148 = vsub.f32 %v1146, %v1147
  %v1149 = vand.u32 %v1148, 4294901760
  %1150 = vmatpush.msra.mxu0 %v1149
  %v1151 = vand.u32 %v1084, 4294901760
  %1152 = vmatmul.f32.gmra.mxu0 %v1151
  %v1153 = vpop.f32.mrf.mxu0
  %v1154 = vadd.f32 %v1113, %v1153
  %1155 = vdwg.mxu0
  %1156 = vmatpush.msra.mxu0 0.0
  %1157 = vmatpush.msra.mxu0 0.0
  %1158 = vmatpush.msra.mxu0 0.0
  %1159 = vmatpush.msra.mxu0 0.0
  %1160 = vmatpush.msra.mxu0 0.0
  %1161 = vmatpush.msra.mxu0 0.0
  %1162 = vmatpush.msra.mxu0 0.0
  %1163 = vmatpush.msra.mxu0 0.0
  %1164 = vmatpush.msra.mxu0 0.0
  %1165 = vmatpush.msra.mxu0 0.0
  %1166 = vmatpush.msra.mxu0 0.0
  %1167 = vmatpush.msra.mxu0 0.0
  %v1168 = vand.u32 %v50, 4294901760
  %v1169 = vsub.f32 %v50, %v1168
  %1170 = vmatpush.msra.mxu0 %v1169
  %v1171 = vand.u32 %v49, 4294901760
  %v1172 = vsub.f32 %v49, %v1171
  %1173 = vmatpush.msra.mxu0 %v1172
  %v1174 = vand.u32 %v48, 4294901760
  %v1175 = vsub.f32 %v48, %v1174
  %1176 = vmatpush.msra.mxu0 %v1175
  %v1177 = vand.u32 %v47, 4294901760
  %v1178 = vsub.f32 %v47, %v1177
  %1179 = vmatpush.msra.mxu0 %v1178
  %v1180 = vand.u32 %v1084, 4294901760
  %v1181 = vsub.f32 %v1084, %v1180
  %1182 = vmatmul.f32.gmra.mxu0 %v1181
  %v1183 = vpop.f32.mrf.mxu0
  %v1184 = vadd.f32 %v1154, %v1183
  %1185 = vdwg.mxu0
  %1186 = vmatpush.msra.mxu0 0.0
  %1187 = vmatpush.msra.mxu0 0.0
  %1188 = vmatpush.msra.mxu0 0.0
  %1189 = vmatpush.msra.mxu0 0.0
  %1190 = vmatpush.msra.mxu0 0.0
  %1191 = vmatpush.msra.mxu0 0.0
  %1192 = vmatpush.msra.mxu0 0.0
  %1193 = vmatpush.msra.mxu0 0.0
  %1194 = vmatpush.msra.mxu0 0.0
  %1195 = vmatpush.msra.mxu0 0.0
  %1196 = vmatpush.msra.mxu0 0.0
  %1197 = vmatpush.msra.mxu0 0.0
  %v1198 = vand.u32 %v50, 4294901760
  %1199 = vmatpush.msra.mxu0 %v1198
  %v1200 = vand.u32 %v49, 4294901760
  %1201 = vmatpush.msra.mxu0 %v1200
  %v1202 = vand.u32 %v48, 4294901760
  %1203 = vmatpush.msra.mxu0 %v1202
  %v1204 = vand.u32 %v47, 4294901760
  %1205 = vmatpush.msra.mxu0 %v1204
  %v1206 = vand.u32 %v1084, 4294901760
  %v1207 = vsub.f32 %v1084, %v1206
  %v1208 = vand.u32 %v1207, 4294901760
  %1209 = vmatmul.f32.gmra.mxu0 %v1208
  %v1210 = vpop.f32.mrf.mxu0
  %v1211 = vadd.f32 %v1184, %v1210
  %1212 = vdwg.mxu0
  %1213 = vmatpush.msra.mxu0 0.0
  %1214 = vmatpush.msra.mxu0 0.0
  %1215 = vmatpush.msra.mxu0 0.0
  %1216 = vmatpush.msra.mxu0 0.0
  %1217 = vmatpush.msra.mxu0 0.0
  %1218 = vmatpush.msra.mxu0 0.0
  %1219 = vmatpush.msra.mxu0 0.0
  %1220 = vmatpush.msra.mxu0 0.0
  %1221 = vmatpush.msra.mxu0 0.0
  %1222 = vmatpush.msra.mxu0 0.0
  %1223 = vmatpush.msra.mxu0 0.0
  %1224 = vmatpush.msra.mxu0 0.0
  %v1225 = vand.u32 %v50, 4294901760
  %v1226 = vsub.f32 %v50, %v1225
  %v1227 = vand.u32 %v1226, 4294901760
  %1228 = vmatpush.msra.mxu0 %v1227
  %v1229 = vand.u32 %v49, 4294901760
  %v1230 = vsub.f32 %v49, %v1229
  %v1231 = vand.u32 %v1230, 4294901760
  %1232 = vmatpush.msra.mxu0 %v1231
  %v1233 = vand.u32 %v48, 4294901760
  %v1234 = vsub.f32 %v48, %v1233
  %v1235 = vand.u32 %v1234, 4294901760
  %1236 = vmatpush.msra.mxu0 %v1235
  %v1237 = vand.u32 %v47, 4294901760
  %v1238 = vsub.f32 %v47, %v1237
  %v1239 = vand.u32 %v1238, 4294901760
  %1240 = vmatpush.msra.mxu0 %v1239
  %v1241 = vand.u32 %v1084, 4294901760
  %1242 = vmatmul.f32.gmra.mxu0 %v1241
  %v1243 = vpop.f32.mrf.mxu0
  %v1244 = vadd.f32 %v1211, %v1243
  %1245 = vdwg.mxu0
  %1246 = vmatpush.msra.mxu0 0.0
  %1247 = vmatpush.msra.mxu0 0.0
  %1248 = vmatpush.msra.mxu0 0.0
  %1249 = vmatpush.msra.mxu0 0.0
  %1250 = vmatpush.msra.mxu0 0.0
  %1251 = vmatpush.msra.mxu0 0.0
  %1252 = vmatpush.msra.mxu0 0.0
  %1253 = vmatpush.msra.mxu0 0.0
  %1254 = vmatpush.msra.mxu0 0.0
  %1255 = vmatpush.msra.mxu0 0.0
  %1256 = vmatpush.msra.mxu0 0.0
  %1257 = vmatpush.msra.mxu0 0.0
  %v1258 = vand.u32 %v50, 4294901760
  %1259 = vmatpush.msra.mxu0 %v1258
  %v1260 = vand.u32 %v49, 4294901760
  %1261 = vmatpush.msra.mxu0 %v1260
  %v1262 = vand.u32 %v48, 4294901760
  %1263 = vmatpush.msra.mxu0 %v1262
  %v1264 = vand.u32 %v47, 4294901760
  %1265 = vmatpush.msra.mxu0 %v1264
  %v1266 = vand.u32 %v1084, 4294901760
  %1267 = vmatmul.f32.gmra.mxu0 %v1266
  %v1268 = vpop.f32.mrf.mxu0
  %v1269 = vadd.f32 %v1244, %v1268
  %1270 = vdwg.mxu0
  %v1271 = vadd.f32 %v425, %v1269
  %v1272 = vmul.f32 %v1271, %v37
  %v1273 = vtanh.pop %v1272
  %v1274 = vadd.f32 %v1273, 1.0
  %v1275 = vmul.f32 %v1274, 0.5
  %v1276 = vsel %vm36, %v1273, %v1275
  %v1277 = vmul.f32 %v1276, %v1074
  %1279 = vrot.lane.b32.xlu0 %v1276, 64
  %v1280 = vpop.permute.xlu0 %1279
  %v1282 = vmul.f32 %v1276, %v1280
  %1284 = vrot.lane.b32.xlu0 %v1282, 32
  %v1285 = vpop.permute.xlu0 %1284
  %v1287 = vadd.f32 %v1277, %v1285
  %v1288 = vtanh.pop %v1287
  %1290 = vrot.lane.b32.xlu0 %v1288, 64
  %v1291 = vpop.permute.xlu0 %1290
  %v1293 = vmul.f32 %v1276, %v1291
  %1295 = vrot.lane.b32.xlu0 %v1293, 32
  %v1296 = vpop.permute.xlu0 %1295
  %v1297 = vsel %vm443, %v1296, 0
  %1299 = vmatpush.msra.mxu0 0.0
  %1300 = vmatpush.msra.mxu0 0.0
  %1301 = vmatpush.msra.mxu0 0.0
  %1302 = vmatpush.msra.mxu0 0.0
  %1303 = vmatpush.msra.mxu0 0.0
  %1304 = vmatpush.msra.mxu0 0.0
  %1305 = vmatpush.msra.mxu0 0.0
  %1306 = vmatpush.msra.mxu0 0.0
  %1307 = vmatpush.msra.mxu0 0.0
  %1308 = vmatpush.msra.mxu0 0.0
  %1309 = vmatpush.msra.mxu0 0.0
  %1310 = vmatpush.msra.mxu0 0.0
  %v1311 = vand.u32 %v50, 4294901760
  %1312 = vmatpush.msra.mxu0 %v1311
  %v1313 = vand.u32 %v49, 4294901760
  %1314 = vmatpush.msra.mxu0 %v1313
  %v1315 = vand.u32 %v48, 4294901760
  %1316 = vmatpush.msra.mxu0 %v1315
  %v1317 = vand.u32 %v47, 4294901760
  %1318 = vmatpush.msra.mxu0 %v1317
  %v1319 = vand.u32 %v1297, 4294901760
  %v1320 = vsub.f32 %v1297, %v1319
  %v1321 = vand.u32 %v1320, 4294901760
  %v1322 = vsub.f32 %v1320, %v1321
  %v1323 = vand.u32 %v1322, 4294901760
  %1324 = vmatmul.f32.gmra.mxu0 %v1323
  %v1325 = vpop.f32.mrf.mxu0
  %v1326 = vadd.f32 0.0, %v1325
  %1327 = vdwg.mxu0
  %1328 = vmatpush.msra.mxu0 0.0
  %1329 = vmatpush.msra.mxu0 0.0
  %1330 = vmatpush.msra.mxu0 0.0
  %1331 = vmatpush.msra.mxu0 0.0
  %1332 = vmatpush.msra.mxu0 0.0
  %1333 = vmatpush.msra.mxu0 0.0
  %1334 = vmatpush.msra.mxu0 0.0
  %1335 = vmatpush.msra.mxu0 0.0
  %1336 = vmatpush.msra.mxu0 0.0
  %1337 = vmatpush.msra.mxu0 0.0
  %1338 = vmatpush.msra.mxu0 0.0
  %1339 = vmatpush.msra.mxu0 0.0
  %v1340 = vand.u32 %v50, 4294901760
  %v1341 = vsub.f32 %v50, %v1340
  %v1342 = vand.u32 %v1341, 4294901760
  %v1343 = vsub.f32 %v1341, %v1342
  %v1344 = vand.u32 %v1343, 4294901760
  %1345 = vmatpush.msra.mxu0 %v1344
  %v1346 = vand.u32 %v49, 4294901760
  %v1347 = vsub.f32 %v49, %v1346
  %v1348 = vand.u32 %v1347, 4294901760
  %v1349 = vsub.f32 %v1347, %v1348
  %v1350 = vand.u32 %v1349, 4294901760
  %1351 = vmatpush.msra.mxu0 %v1350
  %v1352 = vand.u32 %v48, 4294901760
  %v1353 = vsub.f32 %v48, %v1352
  %v1354 = vand.u32 %v1353, 4294901760
  %v1355 = vsub.f32 %v1353, %v1354
  %v1356 = vand.u32 %v1355, 4294901760
  %1357 = vmatpush.msra.mxu0 %v1356
  %v1358 = vand.u32 %v47, 4294901760
  %v1359 = vsub.f32 %v47, %v1358
  %v1360 = vand.u32 %v1359, 4294901760
  %v1361 = vsub.f32 %v1359, %v1360
  %v1362 = vand.u32 %v1361, 4294901760
  %1363 = vmatpush.msra.mxu0 %v1362
  %v1364 = vand.u32 %v1297, 4294901760
  %1365 = vmatmul.f32.gmra.mxu0 %v1364
  %v1366 = vpop.f32.mrf.mxu0
  %v1367 = vadd.f32 %v1326, %v1366
  %1368 = vdwg.mxu0
  %1369 = vmatpush.msra.mxu0 0.0
  %1370 = vmatpush.msra.mxu0 0.0
  %1371 = vmatpush.msra.mxu0 0.0
  %1372 = vmatpush.msra.mxu0 0.0
  %1373 = vmatpush.msra.mxu0 0.0
  %1374 = vmatpush.msra.mxu0 0.0
  %1375 = vmatpush.msra.mxu0 0.0
  %1376 = vmatpush.msra.mxu0 0.0
  %1377 = vmatpush.msra.mxu0 0.0
  %1378 = vmatpush.msra.mxu0 0.0
  %1379 = vmatpush.msra.mxu0 0.0
  %1380 = vmatpush.msra.mxu0 0.0
  %v1381 = vand.u32 %v50, 4294901760
  %v1382 = vsub.f32 %v50, %v1381
  %1383 = vmatpush.msra.mxu0 %v1382
  %v1384 = vand.u32 %v49, 4294901760
  %v1385 = vsub.f32 %v49, %v1384
  %1386 = vmatpush.msra.mxu0 %v1385
  %v1387 = vand.u32 %v48, 4294901760
  %v1388 = vsub.f32 %v48, %v1387
  %1389 = vmatpush.msra.mxu0 %v1388
  %v1390 = vand.u32 %v47, 4294901760
  %v1391 = vsub.f32 %v47, %v1390
  %1392 = vmatpush.msra.mxu0 %v1391
  %v1393 = vand.u32 %v1297, 4294901760
  %v1394 = vsub.f32 %v1297, %v1393
  %1395 = vmatmul.f32.gmra.mxu0 %v1394
  %v1396 = vpop.f32.mrf.mxu0
  %v1397 = vadd.f32 %v1367, %v1396
  %1398 = vdwg.mxu0
  %1399 = vmatpush.msra.mxu0 0.0
  %1400 = vmatpush.msra.mxu0 0.0
  %1401 = vmatpush.msra.mxu0 0.0
  %1402 = vmatpush.msra.mxu0 0.0
  %1403 = vmatpush.msra.mxu0 0.0
  %1404 = vmatpush.msra.mxu0 0.0
  %1405 = vmatpush.msra.mxu0 0.0
  %1406 = vmatpush.msra.mxu0 0.0
  %1407 = vmatpush.msra.mxu0 0.0
  %1408 = vmatpush.msra.mxu0 0.0
  %1409 = vmatpush.msra.mxu0 0.0
  %1410 = vmatpush.msra.mxu0 0.0
  %v1411 = vand.u32 %v50, 4294901760
  %1412 = vmatpush.msra.mxu0 %v1411
  %v1413 = vand.u32 %v49, 4294901760
  %1414 = vmatpush.msra.mxu0 %v1413
  %v1415 = vand.u32 %v48, 4294901760
  %1416 = vmatpush.msra.mxu0 %v1415
  %v1417 = vand.u32 %v47, 4294901760
  %1418 = vmatpush.msra.mxu0 %v1417
  %v1419 = vand.u32 %v1297, 4294901760
  %v1420 = vsub.f32 %v1297, %v1419
  %v1421 = vand.u32 %v1420, 4294901760
  %1422 = vmatmul.f32.gmra.mxu0 %v1421
  %v1423 = vpop.f32.mrf.mxu0
  %v1424 = vadd.f32 %v1397, %v1423
  %1425 = vdwg.mxu0
  %1426 = vmatpush.msra.mxu0 0.0
  %1427 = vmatpush.msra.mxu0 0.0
  %1428 = vmatpush.msra.mxu0 0.0
  %1429 = vmatpush.msra.mxu0 0.0
  %1430 = vmatpush.msra.mxu0 0.0
  %1431 = vmatpush.msra.mxu0 0.0
  %1432 = vmatpush.msra.mxu0 0.0
  %1433 = vmatpush.msra.mxu0 0.0
  %1434 = vmatpush.msra.mxu0 0.0
  %1435 = vmatpush.msra.mxu0 0.0
  %1436 = vmatpush.msra.mxu0 0.0
  %1437 = vmatpush.msra.mxu0 0.0
  %v1438 = vand.u32 %v50, 4294901760
  %v1439 = vsub.f32 %v50, %v1438
  %v1440 = vand.u32 %v1439, 4294901760
  %1441 = vmatpush.msra.mxu0 %v1440
  %v1442 = vand.u32 %v49, 4294901760
  %v1443 = vsub.f32 %v49, %v1442
  %v1444 = vand.u32 %v1443, 4294901760
  %1445 = vmatpush.msra.mxu0 %v1444
  %v1446 = vand.u32 %v48, 4294901760
  %v1447 = vsub.f32 %v48, %v1446
  %v1448 = vand.u32 %v1447, 4294901760
  %1449 = vmatpush.msra.mxu0 %v1448
  %v1450 = vand.u32 %v47, 4294901760
  %v1451 = vsub.f32 %v47, %v1450
  %v1452 = vand.u32 %v1451, 4294901760
  %1453 = vmatpush.msra.mxu0 %v1452
  %v1454 = vand.u32 %v1297, 4294901760
  %1455 = vmatmul.f32.gmra.mxu0 %v1454
  %v1456 = vpop.f32.mrf.mxu0
  %v1457 = vadd.f32 %v1424, %v1456
  %1458 = vdwg.mxu0
  %1459 = vmatpush.msra.mxu0 0.0
  %1460 = vmatpush.msra.mxu0 0.0
  %1461 = vmatpush.msra.mxu0 0.0
  %1462 = vmatpush.msra.mxu0 0.0
  %1463 = vmatpush.msra.mxu0 0.0
  %1464 = vmatpush.msra.mxu0 0.0
  %1465 = vmatpush.msra.mxu0 0.0
  %1466 = vmatpush.msra.mxu0 0.0
  %1467 = vmatpush.msra.mxu0 0.0
  %1468 = vmatpush.msra.mxu0 0.0
  %1469 = vmatpush.msra.mxu0 0.0
  %1470 = vmatpush.msra.mxu0 0.0
  %v1471 = vand.u32 %v50, 4294901760
  %1472 = vmatpush.msra.mxu0 %v1471
  %v1473 = vand.u32 %v49, 4294901760
  %1474 = vmatpush.msra.mxu0 %v1473
  %v1475 = vand.u32 %v48, 4294901760
  %1476 = vmatpush.msra.mxu0 %v1475
  %v1477 = vand.u32 %v47, 4294901760
  %1478 = vmatpush.msra.mxu0 %v1477
  %v1479 = vand.u32 %v1297, 4294901760
  %1480 = vmatmul.f32.gmra.mxu0 %v1479
  %v1481 = vpop.f32.mrf.mxu0
  %v1482 = vadd.f32 %v1457, %v1481
  %1483 = vdwg.mxu0
  %v1484 = vadd.f32 %v429, %v1482
  %v1485 = vmul.f32 %v1484, %v37
  %v1486 = vtanh.pop %v1485
  %v1487 = vadd.f32 %v1486, 1.0
  %v1488 = vmul.f32 %v1487, 0.5
  %v1489 = vsel %vm36, %v1486, %v1488
  %v1490 = vmul.f32 %v1489, %v1287
  %1492 = vrot.lane.b32.xlu0 %v1489, 64
  %v1493 = vpop.permute.xlu0 %1492
  %v1495 = vmul.f32 %v1489, %v1493
  %1497 = vrot.lane.b32.xlu0 %v1495, 32
  %v1498 = vpop.permute.xlu0 %1497
  %v1500 = vadd.f32 %v1490, %v1498
  %v1501 = vtanh.pop %v1500
  %1503 = vrot.lane.b32.xlu0 %v1501, 64
  %v1504 = vpop.permute.xlu0 %1503
  %v1506 = vmul.f32 %v1489, %v1504
  %1508 = vrot.lane.b32.xlu0 %v1506, 32
  %v1509 = vpop.permute.xlu0 %1508
  %v1510 = vsel %vm443, %v1509, 0
  %1512 = vmatpush.msra.mxu0 0.0
  %1513 = vmatpush.msra.mxu0 0.0
  %1514 = vmatpush.msra.mxu0 0.0
  %1515 = vmatpush.msra.mxu0 0.0
  %1516 = vmatpush.msra.mxu0 0.0
  %1517 = vmatpush.msra.mxu0 0.0
  %1518 = vmatpush.msra.mxu0 0.0
  %1519 = vmatpush.msra.mxu0 0.0
  %1520 = vmatpush.msra.mxu0 0.0
  %1521 = vmatpush.msra.mxu0 0.0
  %1522 = vmatpush.msra.mxu0 0.0
  %1523 = vmatpush.msra.mxu0 0.0
  %v1524 = vand.u32 %v50, 4294901760
  %1525 = vmatpush.msra.mxu0 %v1524
  %v1526 = vand.u32 %v49, 4294901760
  %1527 = vmatpush.msra.mxu0 %v1526
  %v1528 = vand.u32 %v48, 4294901760
  %1529 = vmatpush.msra.mxu0 %v1528
  %v1530 = vand.u32 %v47, 4294901760
  %1531 = vmatpush.msra.mxu0 %v1530
  %v1532 = vand.u32 %v1510, 4294901760
  %v1533 = vsub.f32 %v1510, %v1532
  %v1534 = vand.u32 %v1533, 4294901760
  %v1535 = vsub.f32 %v1533, %v1534
  %v1536 = vand.u32 %v1535, 4294901760
  %1537 = vmatmul.f32.gmra.mxu0 %v1536
  %v1538 = vpop.f32.mrf.mxu0
  %v1539 = vadd.f32 0.0, %v1538
  %1540 = vdwg.mxu0
  %1541 = vmatpush.msra.mxu0 0.0
  %1542 = vmatpush.msra.mxu0 0.0
  %1543 = vmatpush.msra.mxu0 0.0
  %1544 = vmatpush.msra.mxu0 0.0
  %1545 = vmatpush.msra.mxu0 0.0
  %1546 = vmatpush.msra.mxu0 0.0
  %1547 = vmatpush.msra.mxu0 0.0
  %1548 = vmatpush.msra.mxu0 0.0
  %1549 = vmatpush.msra.mxu0 0.0
  %1550 = vmatpush.msra.mxu0 0.0
  %1551 = vmatpush.msra.mxu0 0.0
  %1552 = vmatpush.msra.mxu0 0.0
  %v1553 = vand.u32 %v50, 4294901760
  %v1554 = vsub.f32 %v50, %v1553
  %v1555 = vand.u32 %v1554, 4294901760
  %v1556 = vsub.f32 %v1554, %v1555
  %v1557 = vand.u32 %v1556, 4294901760
  %1558 = vmatpush.msra.mxu0 %v1557
  %v1559 = vand.u32 %v49, 4294901760
  %v1560 = vsub.f32 %v49, %v1559
  %v1561 = vand.u32 %v1560, 4294901760
  %v1562 = vsub.f32 %v1560, %v1561
  %v1563 = vand.u32 %v1562, 4294901760
  %1564 = vmatpush.msra.mxu0 %v1563
  %v1565 = vand.u32 %v48, 4294901760
  %v1566 = vsub.f32 %v48, %v1565
  %v1567 = vand.u32 %v1566, 4294901760
  %v1568 = vsub.f32 %v1566, %v1567
  %v1569 = vand.u32 %v1568, 4294901760
  %1570 = vmatpush.msra.mxu0 %v1569
  %v1571 = vand.u32 %v47, 4294901760
  %v1572 = vsub.f32 %v47, %v1571
  %v1573 = vand.u32 %v1572, 4294901760
  %v1574 = vsub.f32 %v1572, %v1573
  %v1575 = vand.u32 %v1574, 4294901760
  %1576 = vmatpush.msra.mxu0 %v1575
  %v1577 = vand.u32 %v1510, 4294901760
  %1578 = vmatmul.f32.gmra.mxu0 %v1577
  %v1579 = vpop.f32.mrf.mxu0
  %v1580 = vadd.f32 %v1539, %v1579
  %1581 = vdwg.mxu0
  %1582 = vmatpush.msra.mxu0 0.0
  %1583 = vmatpush.msra.mxu0 0.0
  %1584 = vmatpush.msra.mxu0 0.0
  %1585 = vmatpush.msra.mxu0 0.0
  %1586 = vmatpush.msra.mxu0 0.0
  %1587 = vmatpush.msra.mxu0 0.0
  %1588 = vmatpush.msra.mxu0 0.0
  %1589 = vmatpush.msra.mxu0 0.0
  %1590 = vmatpush.msra.mxu0 0.0
  %1591 = vmatpush.msra.mxu0 0.0
  %1592 = vmatpush.msra.mxu0 0.0
  %1593 = vmatpush.msra.mxu0 0.0
  %v1594 = vand.u32 %v50, 4294901760
  %v1595 = vsub.f32 %v50, %v1594
  %1596 = vmatpush.msra.mxu0 %v1595
  %v1597 = vand.u32 %v49, 4294901760
  %v1598 = vsub.f32 %v49, %v1597
  %1599 = vmatpush.msra.mxu0 %v1598
  %v1600 = vand.u32 %v48, 4294901760
  %v1601 = vsub.f32 %v48, %v1600
  %1602 = vmatpush.msra.mxu0 %v1601
  %v1603 = vand.u32 %v47, 4294901760
  %v1604 = vsub.f32 %v47, %v1603
  %1605 = vmatpush.msra.mxu0 %v1604
  %v1606 = vand.u32 %v1510, 4294901760
  %v1607 = vsub.f32 %v1510, %v1606
  %1608 = vmatmul.f32.gmra.mxu0 %v1607
  %v1609 = vpop.f32.mrf.mxu0
  %v1610 = vadd.f32 %v1580, %v1609
  %1611 = vdwg.mxu0
  %1612 = vmatpush.msra.mxu0 0.0
  %1613 = vmatpush.msra.mxu0 0.0
  %1614 = vmatpush.msra.mxu0 0.0
  %1615 = vmatpush.msra.mxu0 0.0
  %1616 = vmatpush.msra.mxu0 0.0
  %1617 = vmatpush.msra.mxu0 0.0
  %1618 = vmatpush.msra.mxu0 0.0
  %1619 = vmatpush.msra.mxu0 0.0
  %1620 = vmatpush.msra.mxu0 0.0
  %1621 = vmatpush.msra.mxu0 0.0
  %1622 = vmatpush.msra.mxu0 0.0
  %1623 = vmatpush.msra.mxu0 0.0
  %v1624 = vand.u32 %v50, 4294901760
  %1625 = vmatpush.msra.mxu0 %v1624
  %v1626 = vand.u32 %v49, 4294901760
  %1627 = vmatpush.msra.mxu0 %v1626
  %v1628 = vand.u32 %v48, 4294901760
  %1629 = vmatpush.msra.mxu0 %v1628
  %v1630 = vand.u32 %v47, 4294901760
  %1631 = vmatpush.msra.mxu0 %v1630
  %v1632 = vand.u32 %v1510, 4294901760
  %v1633 = vsub.f32 %v1510, %v1632
  %v1634 = vand.u32 %v1633, 4294901760
  %1635 = vmatmul.f32.gmra.mxu0 %v1634
  %v1636 = vpop.f32.mrf.mxu0
  %v1637 = vadd.f32 %v1610, %v1636
  %1638 = vdwg.mxu0
  %1639 = vmatpush.msra.mxu0 0.0
  %1640 = vmatpush.msra.mxu0 0.0
  %1641 = vmatpush.msra.mxu0 0.0
  %1642 = vmatpush.msra.mxu0 0.0
  %1643 = vmatpush.msra.mxu0 0.0
  %1644 = vmatpush.msra.mxu0 0.0
  %1645 = vmatpush.msra.mxu0 0.0
  %1646 = vmatpush.msra.mxu0 0.0
  %1647 = vmatpush.msra.mxu0 0.0
  %1648 = vmatpush.msra.mxu0 0.0
  %1649 = vmatpush.msra.mxu0 0.0
  %1650 = vmatpush.msra.mxu0 0.0
  %v1651 = vand.u32 %v50, 4294901760
  %v1652 = vsub.f32 %v50, %v1651
  %v1653 = vand.u32 %v1652, 4294901760
  %1654 = vmatpush.msra.mxu0 %v1653
  %v1655 = vand.u32 %v49, 4294901760
  %v1656 = vsub.f32 %v49, %v1655
  %v1657 = vand.u32 %v1656, 4294901760
  %1658 = vmatpush.msra.mxu0 %v1657
  %v1659 = vand.u32 %v48, 4294901760
  %v1660 = vsub.f32 %v48, %v1659
  %v1661 = vand.u32 %v1660, 4294901760
  %1662 = vmatpush.msra.mxu0 %v1661
  %v1663 = vand.u32 %v47, 4294901760
  %v1664 = vsub.f32 %v47, %v1663
  %v1665 = vand.u32 %v1664, 4294901760
  %1666 = vmatpush.msra.mxu0 %v1665
  %v1667 = vand.u32 %v1510, 4294901760
  %1668 = vmatmul.f32.gmra.mxu0 %v1667
  %v1669 = vpop.f32.mrf.mxu0
  %v1670 = vadd.f32 %v1637, %v1669
  %1671 = vdwg.mxu0
  %1672 = vmatpush.msra.mxu0 0.0
  %1673 = vmatpush.msra.mxu0 0.0
  %1674 = vmatpush.msra.mxu0 0.0
  %1675 = vmatpush.msra.mxu0 0.0
  %1676 = vmatpush.msra.mxu0 0.0
  %1677 = vmatpush.msra.mxu0 0.0
  %1678 = vmatpush.msra.mxu0 0.0
  %1679 = vmatpush.msra.mxu0 0.0
  %1680 = vmatpush.msra.mxu0 0.0
  %1681 = vmatpush.msra.mxu0 0.0
  %1682 = vmatpush.msra.mxu0 0.0
  %1683 = vmatpush.msra.mxu0 0.0
  %v1684 = vand.u32 %v50, 4294901760
  %1685 = vmatpush.msra.mxu0 %v1684
  %v1686 = vand.u32 %v49, 4294901760
  %1687 = vmatpush.msra.mxu0 %v1686
  %v1688 = vand.u32 %v48, 4294901760
  %1689 = vmatpush.msra.mxu0 %v1688
  %v1690 = vand.u32 %v47, 4294901760
  %1691 = vmatpush.msra.mxu0 %v1690
  %v1692 = vand.u32 %v1510, 4294901760
  %1693 = vmatmul.f32.gmra.mxu0 %v1692
  %v1694 = vpop.f32.mrf.mxu0
  %v1695 = vadd.f32 %v1670, %v1694
  %1696 = vdwg.mxu0
  %v1697 = vadd.f32 %v433, %v1695
  %v1698 = vmul.f32 %v1697, %v37
  %v1699 = vtanh.pop %v1698
  %v1700 = vadd.f32 %v1699, 1.0
  %v1701 = vmul.f32 %v1700, 0.5
  %v1702 = vsel %vm36, %v1699, %v1701
  %v1703 = vmul.f32 %v1702, %v1500
  %1705 = vrot.lane.b32.xlu0 %v1702, 64
  %v1706 = vpop.permute.xlu0 %1705
  %v1708 = vmul.f32 %v1702, %v1706
  %1710 = vrot.lane.b32.xlu0 %v1708, 32
  %v1711 = vpop.permute.xlu0 %1710
  %v1713 = vadd.f32 %v1703, %v1711
  %v1714 = vtanh.pop %v1713
  %1716 = vrot.lane.b32.xlu0 %v1714, 64
  %v1717 = vpop.permute.xlu0 %1716
  %v1719 = vmul.f32 %v1702, %v1717
  %1721 = vrot.lane.b32.xlu0 %v1719, 32
  %v1722 = vpop.permute.xlu0 %1721
  %v1723 = vsel %vm443, %v1722, 0
  %1725 = vmatpush.msra.mxu0 0.0
  %1726 = vmatpush.msra.mxu0 0.0
  %1727 = vmatpush.msra.mxu0 0.0
  %1728 = vmatpush.msra.mxu0 0.0
  %1729 = vmatpush.msra.mxu0 0.0
  %1730 = vmatpush.msra.mxu0 0.0
  %1731 = vmatpush.msra.mxu0 0.0
  %1732 = vmatpush.msra.mxu0 0.0
  %1733 = vmatpush.msra.mxu0 0.0
  %1734 = vmatpush.msra.mxu0 0.0
  %1735 = vmatpush.msra.mxu0 0.0
  %1736 = vmatpush.msra.mxu0 0.0
  %v1737 = vand.u32 %v50, 4294901760
  %1738 = vmatpush.msra.mxu0 %v1737
  %v1739 = vand.u32 %v49, 4294901760
  %1740 = vmatpush.msra.mxu0 %v1739
  %v1741 = vand.u32 %v48, 4294901760
  %1742 = vmatpush.msra.mxu0 %v1741
  %v1743 = vand.u32 %v47, 4294901760
  %1744 = vmatpush.msra.mxu0 %v1743
  %v1745 = vand.u32 %v1723, 4294901760
  %v1746 = vsub.f32 %v1723, %v1745
  %v1747 = vand.u32 %v1746, 4294901760
  %v1748 = vsub.f32 %v1746, %v1747
  %v1749 = vand.u32 %v1748, 4294901760
  %1750 = vmatmul.f32.gmra.mxu0 %v1749
  %v1751 = vpop.f32.mrf.mxu0
  %v1752 = vadd.f32 0.0, %v1751
  %1753 = vdwg.mxu0
  %1754 = vmatpush.msra.mxu0 0.0
  %1755 = vmatpush.msra.mxu0 0.0
  %1756 = vmatpush.msra.mxu0 0.0
  %1757 = vmatpush.msra.mxu0 0.0
  %1758 = vmatpush.msra.mxu0 0.0
  %1759 = vmatpush.msra.mxu0 0.0
  %1760 = vmatpush.msra.mxu0 0.0
  %1761 = vmatpush.msra.mxu0 0.0
  %1762 = vmatpush.msra.mxu0 0.0
  %1763 = vmatpush.msra.mxu0 0.0
  %1764 = vmatpush.msra.mxu0 0.0
  %1765 = vmatpush.msra.mxu0 0.0
  %v1766 = vand.u32 %v50, 4294901760
  %v1767 = vsub.f32 %v50, %v1766
  %v1768 = vand.u32 %v1767, 4294901760
  %v1769 = vsub.f32 %v1767, %v1768
  %v1770 = vand.u32 %v1769, 4294901760
  %1771 = vmatpush.msra.mxu0 %v1770
  %v1772 = vand.u32 %v49, 4294901760
  %v1773 = vsub.f32 %v49, %v1772
  %v1774 = vand.u32 %v1773, 4294901760
  %v1775 = vsub.f32 %v1773, %v1774
  %v1776 = vand.u32 %v1775, 4294901760
  %1777 = vmatpush.msra.mxu0 %v1776
  %v1778 = vand.u32 %v48, 4294901760
  %v1779 = vsub.f32 %v48, %v1778
  %v1780 = vand.u32 %v1779, 4294901760
  %v1781 = vsub.f32 %v1779, %v1780
  %v1782 = vand.u32 %v1781, 4294901760
  %1783 = vmatpush.msra.mxu0 %v1782
  %v1784 = vand.u32 %v47, 4294901760
  %v1785 = vsub.f32 %v47, %v1784
  %v1786 = vand.u32 %v1785, 4294901760
  %v1787 = vsub.f32 %v1785, %v1786
  %v1788 = vand.u32 %v1787, 4294901760
  %1789 = vmatpush.msra.mxu0 %v1788
  %v1790 = vand.u32 %v1723, 4294901760
  %1791 = vmatmul.f32.gmra.mxu0 %v1790
  %v1792 = vpop.f32.mrf.mxu0
  %v1793 = vadd.f32 %v1752, %v1792
  %1794 = vdwg.mxu0
  %1795 = vmatpush.msra.mxu0 0.0
  %1796 = vmatpush.msra.mxu0 0.0
  %1797 = vmatpush.msra.mxu0 0.0
  %1798 = vmatpush.msra.mxu0 0.0
  %1799 = vmatpush.msra.mxu0 0.0
  %1800 = vmatpush.msra.mxu0 0.0
  %1801 = vmatpush.msra.mxu0 0.0
  %1802 = vmatpush.msra.mxu0 0.0
  %1803 = vmatpush.msra.mxu0 0.0
  %1804 = vmatpush.msra.mxu0 0.0
  %1805 = vmatpush.msra.mxu0 0.0
  %1806 = vmatpush.msra.mxu0 0.0
  %v1807 = vand.u32 %v50, 4294901760
  %v1808 = vsub.f32 %v50, %v1807
  %1809 = vmatpush.msra.mxu0 %v1808
  %v1810 = vand.u32 %v49, 4294901760
  %v1811 = vsub.f32 %v49, %v1810
  %1812 = vmatpush.msra.mxu0 %v1811
  %v1813 = vand.u32 %v48, 4294901760
  %v1814 = vsub.f32 %v48, %v1813
  %1815 = vmatpush.msra.mxu0 %v1814
  %v1816 = vand.u32 %v47, 4294901760
  %v1817 = vsub.f32 %v47, %v1816
  %1818 = vmatpush.msra.mxu0 %v1817
  %v1819 = vand.u32 %v1723, 4294901760
  %v1820 = vsub.f32 %v1723, %v1819
  %1821 = vmatmul.f32.gmra.mxu0 %v1820
  %v1822 = vpop.f32.mrf.mxu0
  %v1823 = vadd.f32 %v1793, %v1822
  %1824 = vdwg.mxu0
  %1825 = vmatpush.msra.mxu0 0.0
  %1826 = vmatpush.msra.mxu0 0.0
  %1827 = vmatpush.msra.mxu0 0.0
  %1828 = vmatpush.msra.mxu0 0.0
  %1829 = vmatpush.msra.mxu0 0.0
  %1830 = vmatpush.msra.mxu0 0.0
  %1831 = vmatpush.msra.mxu0 0.0
  %1832 = vmatpush.msra.mxu0 0.0
  %1833 = vmatpush.msra.mxu0 0.0
  %1834 = vmatpush.msra.mxu0 0.0
  %1835 = vmatpush.msra.mxu0 0.0
  %1836 = vmatpush.msra.mxu0 0.0
  %v1837 = vand.u32 %v50, 4294901760
  %1838 = vmatpush.msra.mxu0 %v1837
  %v1839 = vand.u32 %v49, 4294901760
  %1840 = vmatpush.msra.mxu0 %v1839
  %v1841 = vand.u32 %v48, 4294901760
  %1842 = vmatpush.msra.mxu0 %v1841
  %v1843 = vand.u32 %v47, 4294901760
  %1844 = vmatpush.msra.mxu0 %v1843
  %v1845 = vand.u32 %v1723, 4294901760
  %v1846 = vsub.f32 %v1723, %v1845
  %v1847 = vand.u32 %v1846, 4294901760
  %1848 = vmatmul.f32.gmra.mxu0 %v1847
  %v1849 = vpop.f32.mrf.mxu0
  %v1850 = vadd.f32 %v1823, %v1849
  %1851 = vdwg.mxu0
  %1852 = vmatpush.msra.mxu0 0.0
  %1853 = vmatpush.msra.mxu0 0.0
  %1854 = vmatpush.msra.mxu0 0.0
  %1855 = vmatpush.msra.mxu0 0.0
  %1856 = vmatpush.msra.mxu0 0.0
  %1857 = vmatpush.msra.mxu0 0.0
  %1858 = vmatpush.msra.mxu0 0.0
  %1859 = vmatpush.msra.mxu0 0.0
  %1860 = vmatpush.msra.mxu0 0.0
  %1861 = vmatpush.msra.mxu0 0.0
  %1862 = vmatpush.msra.mxu0 0.0
  %1863 = vmatpush.msra.mxu0 0.0
  %v1864 = vand.u32 %v50, 4294901760
  %v1865 = vsub.f32 %v50, %v1864
  %v1866 = vand.u32 %v1865, 4294901760
  %1867 = vmatpush.msra.mxu0 %v1866
  %v1868 = vand.u32 %v49, 4294901760
  %v1869 = vsub.f32 %v49, %v1868
  %v1870 = vand.u32 %v1869, 4294901760
  %1871 = vmatpush.msra.mxu0 %v1870
  %v1872 = vand.u32 %v48, 4294901760
  %v1873 = vsub.f32 %v48, %v1872
  %v1874 = vand.u32 %v1873, 4294901760
  %1875 = vmatpush.msra.mxu0 %v1874
  %v1876 = vand.u32 %v47, 4294901760
  %v1877 = vsub.f32 %v47, %v1876
  %v1878 = vand.u32 %v1877, 4294901760
  %1879 = vmatpush.msra.mxu0 %v1878
  %v1880 = vand.u32 %v1723, 4294901760
  %1881 = vmatmul.f32.gmra.mxu0 %v1880
  %v1882 = vpop.f32.mrf.mxu0
  %v1883 = vadd.f32 %v1850, %v1882
  %1884 = vdwg.mxu0
  %1885 = vmatpush.msra.mxu0 0.0
  %1886 = vmatpush.msra.mxu0 0.0
  %1887 = vmatpush.msra.mxu0 0.0
  %1888 = vmatpush.msra.mxu0 0.0
  %1889 = vmatpush.msra.mxu0 0.0
  %1890 = vmatpush.msra.mxu0 0.0
  %1891 = vmatpush.msra.mxu0 0.0
  %1892 = vmatpush.msra.mxu0 0.0
  %1893 = vmatpush.msra.mxu0 0.0
  %1894 = vmatpush.msra.mxu0 0.0
  %1895 = vmatpush.msra.mxu0 0.0
  %1896 = vmatpush.msra.mxu0 0.0
  %v1897 = vand.u32 %v50, 4294901760
  %1898 = vmatpush.msra.mxu0 %v1897
  %v1899 = vand.u32 %v49, 4294901760
  %1900 = vmatpush.msra.mxu0 %v1899
  %v1901 = vand.u32 %v48, 4294901760
  %1902 = vmatpush.msra.mxu0 %v1901
  %v1903 = vand.u32 %v47, 4294901760
  %1904 = vmatpush.msra.mxu0 %v1903
  %v1905 = vand.u32 %v1723, 4294901760
  %1906 = vmatmul.f32.gmra.mxu0 %v1905
  %v1907 = vpop.f32.mrf.mxu0
  %v1908 = vadd.f32 %v1883, %v1907
  %1909 = vdwg.mxu0
  %v1910 = vadd.f32 %v437, %v1908
  %v1911 = vmul.f32 %v1910, %v37
  %v1912 = vtanh.pop %v1911
  %v1913 = vadd.f32 %v1912, 1.0
  %v1914 = vmul.f32 %v1913, 0.5
  %v1915 = vsel %vm36, %v1912, %v1914
  %v1916 = vmul.f32 %v1915, %v1713
  %1918 = vrot.lane.b32.xlu0 %v1915, 64
  %v1919 = vpop.permute.xlu0 %1918
  %v1921 = vmul.f32 %v1915, %v1919
  %1923 = vrot.lane.b32.xlu0 %v1921, 32
  %v1924 = vpop.permute.xlu0 %1923
  %v1926 = vadd.f32 %v1916, %v1924
  %v1927 = vtanh.pop %v1926
  %1929 = vrot.lane.b32.xlu0 %v1927, 64
  %v1930 = vpop.permute.xlu0 %1929
  %v1932 = vmul.f32 %v1915, %v1930
  %1934 = vrot.lane.b32.xlu0 %v1932, 32
  %v1935 = vpop.permute.xlu0 %1934
  %v1936 = vsel %vm443, %v1935, 0
  %1938 = vmatpush.msra.mxu0 0.0
  %1939 = vmatpush.msra.mxu0 0.0
  %1940 = vmatpush.msra.mxu0 0.0
  %1941 = vmatpush.msra.mxu0 0.0
  %1942 = vmatpush.msra.mxu0 0.0
  %1943 = vmatpush.msra.mxu0 0.0
  %1944 = vmatpush.msra.mxu0 0.0
  %1945 = vmatpush.msra.mxu0 0.0
  %1946 = vmatpush.msra.mxu0 0.0
  %1947 = vmatpush.msra.mxu0 0.0
  %1948 = vmatpush.msra.mxu0 0.0
  %1949 = vmatpush.msra.mxu0 0.0
  %v1950 = vand.u32 %v50, 4294901760
  %1951 = vmatpush.msra.mxu0 %v1950
  %v1952 = vand.u32 %v49, 4294901760
  %1953 = vmatpush.msra.mxu0 %v1952
  %v1954 = vand.u32 %v48, 4294901760
  %1955 = vmatpush.msra.mxu0 %v1954
  %v1956 = vand.u32 %v47, 4294901760
  %1957 = vmatpush.msra.mxu0 %v1956
  %v1958 = vand.u32 %v1936, 4294901760
  %v1959 = vsub.f32 %v1936, %v1958
  %v1960 = vand.u32 %v1959, 4294901760
  %v1961 = vsub.f32 %v1959, %v1960
  %v1962 = vand.u32 %v1961, 4294901760
  %1963 = vmatmul.f32.gmra.mxu0 %v1962
  %v1964 = vpop.f32.mrf.mxu0
  %v1965 = vadd.f32 0.0, %v1964
  %1966 = vdwg.mxu0
  %1967 = vmatpush.msra.mxu0 0.0
  %1968 = vmatpush.msra.mxu0 0.0
  %1969 = vmatpush.msra.mxu0 0.0
  %1970 = vmatpush.msra.mxu0 0.0
  %1971 = vmatpush.msra.mxu0 0.0
  %1972 = vmatpush.msra.mxu0 0.0
  %1973 = vmatpush.msra.mxu0 0.0
  %1974 = vmatpush.msra.mxu0 0.0
  %1975 = vmatpush.msra.mxu0 0.0
  %1976 = vmatpush.msra.mxu0 0.0
  %1977 = vmatpush.msra.mxu0 0.0
  %1978 = vmatpush.msra.mxu0 0.0
  %v1979 = vand.u32 %v50, 4294901760
  %v1980 = vsub.f32 %v50, %v1979
  %v1981 = vand.u32 %v1980, 4294901760
  %v1982 = vsub.f32 %v1980, %v1981
  %v1983 = vand.u32 %v1982, 4294901760
  %1984 = vmatpush.msra.mxu0 %v1983
  %v1985 = vand.u32 %v49, 4294901760
  %v1986 = vsub.f32 %v49, %v1985
  %v1987 = vand.u32 %v1986, 4294901760
  %v1988 = vsub.f32 %v1986, %v1987
  %v1989 = vand.u32 %v1988, 4294901760
  %1990 = vmatpush.msra.mxu0 %v1989
  %v1991 = vand.u32 %v48, 4294901760
  %v1992 = vsub.f32 %v48, %v1991
  %v1993 = vand.u32 %v1992, 4294901760
  %v1994 = vsub.f32 %v1992, %v1993
  %v1995 = vand.u32 %v1994, 4294901760
  %1996 = vmatpush.msra.mxu0 %v1995
  %v1997 = vand.u32 %v47, 4294901760
  %v1998 = vsub.f32 %v47, %v1997
  %v1999 = vand.u32 %v1998, 4294901760
  %v2000 = vsub.f32 %v1998, %v1999
  %v2001 = vand.u32 %v2000, 4294901760
  %2002 = vmatpush.msra.mxu0 %v2001
  %v2003 = vand.u32 %v1936, 4294901760
  %2004 = vmatmul.f32.gmra.mxu0 %v2003
  %v2005 = vpop.f32.mrf.mxu0
  %v2006 = vadd.f32 %v1965, %v2005
  %2007 = vdwg.mxu0
  %2008 = vmatpush.msra.mxu0 0.0
  %2009 = vmatpush.msra.mxu0 0.0
  %2010 = vmatpush.msra.mxu0 0.0
  %2011 = vmatpush.msra.mxu0 0.0
  %2012 = vmatpush.msra.mxu0 0.0
  %2013 = vmatpush.msra.mxu0 0.0
  %2014 = vmatpush.msra.mxu0 0.0
  %2015 = vmatpush.msra.mxu0 0.0
  %2016 = vmatpush.msra.mxu0 0.0
  %2017 = vmatpush.msra.mxu0 0.0
  %2018 = vmatpush.msra.mxu0 0.0
  %2019 = vmatpush.msra.mxu0 0.0
  %v2020 = vand.u32 %v50, 4294901760
  %v2021 = vsub.f32 %v50, %v2020
  %2022 = vmatpush.msra.mxu0 %v2021
  %v2023 = vand.u32 %v49, 4294901760
  %v2024 = vsub.f32 %v49, %v2023
  %2025 = vmatpush.msra.mxu0 %v2024
  %v2026 = vand.u32 %v48, 4294901760
  %v2027 = vsub.f32 %v48, %v2026
  %2028 = vmatpush.msra.mxu0 %v2027
  %v2029 = vand.u32 %v47, 4294901760
  %v2030 = vsub.f32 %v47, %v2029
  %2031 = vmatpush.msra.mxu0 %v2030
  %v2032 = vand.u32 %v1936, 4294901760
  %v2033 = vsub.f32 %v1936, %v2032
  %2034 = vmatmul.f32.gmra.mxu0 %v2033
  %v2035 = vpop.f32.mrf.mxu0
  %v2036 = vadd.f32 %v2006, %v2035
  %2037 = vdwg.mxu0
  %2038 = vmatpush.msra.mxu0 0.0
  %2039 = vmatpush.msra.mxu0 0.0
  %2040 = vmatpush.msra.mxu0 0.0
  %2041 = vmatpush.msra.mxu0 0.0
  %2042 = vmatpush.msra.mxu0 0.0
  %2043 = vmatpush.msra.mxu0 0.0
  %2044 = vmatpush.msra.mxu0 0.0
  %2045 = vmatpush.msra.mxu0 0.0
  %2046 = vmatpush.msra.mxu0 0.0
  %2047 = vmatpush.msra.mxu0 0.0
  %2048 = vmatpush.msra.mxu0 0.0
  %2049 = vmatpush.msra.mxu0 0.0
  %v2050 = vand.u32 %v50, 4294901760
  %2051 = vmatpush.msra.mxu0 %v2050
  %v2052 = vand.u32 %v49, 4294901760
  %2053 = vmatpush.msra.mxu0 %v2052
  %v2054 = vand.u32 %v48, 4294901760
  %2055 = vmatpush.msra.mxu0 %v2054
  %v2056 = vand.u32 %v47, 4294901760
  %2057 = vmatpush.msra.mxu0 %v2056
  %v2058 = vand.u32 %v1936, 4294901760
  %v2059 = vsub.f32 %v1936, %v2058
  %v2060 = vand.u32 %v2059, 4294901760
  %2061 = vmatmul.f32.gmra.mxu0 %v2060
  %v2062 = vpop.f32.mrf.mxu0
  %v2063 = vadd.f32 %v2036, %v2062
  %2064 = vdwg.mxu0
  %2065 = vmatpush.msra.mxu0 0.0
  %2066 = vmatpush.msra.mxu0 0.0
  %2067 = vmatpush.msra.mxu0 0.0
  %2068 = vmatpush.msra.mxu0 0.0
  %2069 = vmatpush.msra.mxu0 0.0
  %2070 = vmatpush.msra.mxu0 0.0
  %2071 = vmatpush.msra.mxu0 0.0
  %2072 = vmatpush.msra.mxu0 0.0
  %2073 = vmatpush.msra.mxu0 0.0
  %2074 = vmatpush.msra.mxu0 0.0
  %2075 = vmatpush.msra.mxu0 0.0
  %2076 = vmatpush.msra.mxu0 0.0
  %v2077 = vand.u32 %v50, 4294901760
  %v2078 = vsub.f32 %v50, %v2077
  %v2079 = vand.u32 %v2078, 4294901760
  %2080 = vmatpush.msra.mxu0 %v2079
  %v2081 = vand.u32 %v49, 4294901760
  %v2082 = vsub.f32 %v49, %v2081
  %v2083 = vand.u32 %v2082, 4294901760
  %2084 = vmatpush.msra.mxu0 %v2083
  %v2085 = vand.u32 %v48, 4294901760
  %v2086 = vsub.f32 %v48, %v2085
  %v2087 = vand.u32 %v2086, 4294901760
  %2088 = vmatpush.msra.mxu0 %v2087
  %v2089 = vand.u32 %v47, 4294901760
  %v2090 = vsub.f32 %v47, %v2089
  %v2091 = vand.u32 %v2090, 4294901760
  %2092 = vmatpush.msra.mxu0 %v2091
  %v2093 = vand.u32 %v1936, 4294901760
  %2094 = vmatmul.f32.gmra.mxu0 %v2093
  %v2095 = vpop.f32.mrf.mxu0
  %v2096 = vadd.f32 %v2063, %v2095
  %2097 = vdwg.mxu0
  %2098 = vmatpush.msra.mxu0 0.0
  %2099 = vmatpush.msra.mxu0 0.0
  %2100 = vmatpush.msra.mxu0 0.0
  %2101 = vmatpush.msra.mxu0 0.0
  %2102 = vmatpush.msra.mxu0 0.0
  %2103 = vmatpush.msra.mxu0 0.0
  %2104 = vmatpush.msra.mxu0 0.0
  %2105 = vmatpush.msra.mxu0 0.0
  %2106 = vmatpush.msra.mxu0 0.0
  %2107 = vmatpush.msra.mxu0 0.0
  %2108 = vmatpush.msra.mxu0 0.0
  %2109 = vmatpush.msra.mxu0 0.0
  %v2110 = vand.u32 %v50, 4294901760
  %2111 = vmatpush.msra.mxu0 %v2110
  %v2112 = vand.u32 %v49, 4294901760
  %2113 = vmatpush.msra.mxu0 %v2112
  %v2114 = vand.u32 %v48, 4294901760
  %2115 = vmatpush.msra.mxu0 %v2114
  %v2116 = vand.u32 %v47, 4294901760
  %2117 = vmatpush.msra.mxu0 %v2116
  %v2118 = vand.u32 %v1936, 4294901760
  %2119 = vmatmul.f32.gmra.mxu0 %v2118
  %v2120 = vpop.f32.mrf.mxu0
  %v2121 = vadd.f32 %v2096, %v2120
  %2122 = vdwg.mxu0
  %v2123 = vadd.f32 %v441, %v2121
  %v2124 = vmul.f32 %v2123, %v37
  %v2125 = vtanh.pop %v2124
  %v2126 = vadd.f32 %v2125, 1.0
  %v2127 = vmul.f32 %v2126, 0.5
  %v2128 = vsel %vm36, %v2125, %v2127
  %v2129 = vmul.f32 %v2128, %v1926
  %2131 = vrot.lane.b32.xlu0 %v2128, 64
  %v2132 = vpop.permute.xlu0 %2131
  %v2134 = vmul.f32 %v2128, %v2132
  %2136 = vrot.lane.b32.xlu0 %v2134, 32
  %v2137 = vpop.permute.xlu0 %2136
  %v2139 = vadd.f32 %v2129, %v2137
  %v2140 = vtanh.pop %v2139
  %2142 = vrot.lane.b32.xlu0 %v2140, 64
  %v2143 = vpop.permute.xlu0 %2142
  %v2145 = vmul.f32 %v2128, %v2143
  %v2146 = vld [vmem:[%s4] sm:$0xff]
  %v2147 = vld [vmem:[%s4 + $0x8] sm:$0xff]
  %v2148 = vld [vmem:[%s4 + $0x10] sm:$0xff]
  %v2149 = vld [vmem:[%s4 + $0x18] sm:$0xff]
  %v2150 = vld [vmem:[%s5] sm:$0xff]
  %v2151 = vld [vmem:[%s5 + $0x8] sm:$0xff]
  %v2152 = vld [vmem:[%s5 + $0x10] sm:$0xff]
  %v2153 = vld [vmem:[%s5 + $0x18] sm:$0xff]
  %v2154 = vld [vmem:[%s6] sm:$0x1]
  %v2156 = vperm.slane %v2154, 0
  %2159 = vrot.lane.b32.xlu0 %v2145, 32
  %v2160 = vpop.permute.xlu0 %2159
  %v2161 = vsel %vm443, %v2160, 0
  %2163 = vmatpush.msra.mxu0 0.0
  %2164 = vmatpush.msra.mxu0 0.0
  %2165 = vmatpush.msra.mxu0 0.0
  %2166 = vmatpush.msra.mxu0 0.0
  %2167 = vmatpush.msra.mxu0 0.0
  %2168 = vmatpush.msra.mxu0 0.0
  %2169 = vmatpush.msra.mxu0 0.0
  %2170 = vmatpush.msra.mxu0 0.0
  %2171 = vmatpush.msra.mxu0 0.0
  %2172 = vmatpush.msra.mxu0 0.0
  %2173 = vmatpush.msra.mxu0 0.0
  %2174 = vmatpush.msra.mxu0 0.0
  %v2175 = vand.u32 %v2149, 4294901760
  %2176 = vmatpush.msra.mxu0 %v2175
  %v2177 = vand.u32 %v2148, 4294901760
  %2178 = vmatpush.msra.mxu0 %v2177
  %v2179 = vand.u32 %v2147, 4294901760
  %2180 = vmatpush.msra.mxu0 %v2179
  %v2181 = vand.u32 %v2146, 4294901760
  %2182 = vmatpush.msra.mxu0 %v2181
  %v2183 = vand.u32 %v658, 4294901760
  %v2184 = vsub.f32 %v658, %v2183
  %v2185 = vand.u32 %v2184, 4294901760
  %v2186 = vsub.f32 %v2184, %v2185
  %v2187 = vand.u32 %v2186, 4294901760
  %2188 = vmatmul.f32.gmra.mxu0 %v2187
  %v2189 = vpop.f32.mrf.mxu0
  %v2190 = vadd.f32 %v2156, %v2189
  %v2191 = vand.u32 %v871, 4294901760
  %v2192 = vsub.f32 %v871, %v2191
  %v2193 = vand.u32 %v2192, 4294901760
  %v2194 = vsub.f32 %v2192, %v2193
  %v2195 = vand.u32 %v2194, 4294901760
  %2196 = vmatmul.f32.gmra.mxu0 %v2195
  %v2197 = vpop.f32.mrf.mxu0
  %v2198 = vadd.f32 %v2156, %v2197
  %v2199 = vand.u32 %v1084, 4294901760
  %v2200 = vsub.f32 %v1084, %v2199
  %v2201 = vand.u32 %v2200, 4294901760
  %v2202 = vsub.f32 %v2200, %v2201
  %v2203 = vand.u32 %v2202, 4294901760
  %2204 = vmatmul.f32.gmra.mxu0 %v2203
  %v2205 = vpop.f32.mrf.mxu0
  %v2206 = vadd.f32 %v2156, %v2205
  %v2207 = vand.u32 %v1297, 4294901760
  %v2208 = vsub.f32 %v1297, %v2207
  %v2209 = vand.u32 %v2208, 4294901760
  %v2210 = vsub.f32 %v2208, %v2209
  %v2211 = vand.u32 %v2210, 4294901760
  %2212 = vmatmul.f32.gmra.mxu0 %v2211
  %v2213 = vpop.f32.mrf.mxu0
  %v2214 = vadd.f32 %v2156, %v2213
  %v2215 = vand.u32 %v1510, 4294901760
  %v2216 = vsub.f32 %v1510, %v2215
  %v2217 = vand.u32 %v2216, 4294901760
  %v2218 = vsub.f32 %v2216, %v2217
  %v2219 = vand.u32 %v2218, 4294901760
  %2220 = vmatmul.f32.gmra.mxu0 %v2219
  %v2221 = vpop.f32.mrf.mxu0
  %v2222 = vadd.f32 %v2156, %v2221
  %v2223 = vand.u32 %v1723, 4294901760
  %v2224 = vsub.f32 %v1723, %v2223
  %v2225 = vand.u32 %v2224, 4294901760
  %v2226 = vsub.f32 %v2224, %v2225
  %v2227 = vand.u32 %v2226, 4294901760
  %2228 = vmatmul.f32.gmra.mxu0 %v2227
  %v2229 = vpop.f32.mrf.mxu0
  %v2230 = vadd.f32 %v2156, %v2229
  %v2231 = vand.u32 %v1936, 4294901760
  %v2232 = vsub.f32 %v1936, %v2231
  %v2233 = vand.u32 %v2232, 4294901760
  %v2234 = vsub.f32 %v2232, %v2233
  %v2235 = vand.u32 %v2234, 4294901760
  %2236 = vmatmul.f32.gmra.mxu0 %v2235
  %v2237 = vpop.f32.mrf.mxu0
  %v2238 = vadd.f32 %v2156, %v2237
  %v2239 = vand.u32 %v2161, 4294901760
  %v2240 = vsub.f32 %v2161, %v2239
  %v2241 = vand.u32 %v2240, 4294901760
  %v2242 = vsub.f32 %v2240, %v2241
  %v2243 = vand.u32 %v2242, 4294901760
  %2244 = vmatmul.f32.gmra.mxu0 %v2243
  %v2245 = vpop.f32.mrf.mxu0
  %v2246 = vadd.f32 %v2156, %v2245
  %2247 = vdwg.mxu0
  %2248 = vmatpush.msra.mxu0 0.0
  %2249 = vmatpush.msra.mxu0 0.0
  %2250 = vmatpush.msra.mxu0 0.0
  %2251 = vmatpush.msra.mxu0 0.0
  %2252 = vmatpush.msra.mxu0 0.0
  %2253 = vmatpush.msra.mxu0 0.0
  %2254 = vmatpush.msra.mxu0 0.0
  %2255 = vmatpush.msra.mxu0 0.0
  %2256 = vmatpush.msra.mxu0 0.0
  %2257 = vmatpush.msra.mxu0 0.0
  %2258 = vmatpush.msra.mxu0 0.0
  %2259 = vmatpush.msra.mxu0 0.0
  %v2260 = vand.u32 %v2149, 4294901760
  %v2261 = vsub.f32 %v2149, %v2260
  %v2262 = vand.u32 %v2261, 4294901760
  %v2263 = vsub.f32 %v2261, %v2262
  %v2264 = vand.u32 %v2263, 4294901760
  %2265 = vmatpush.msra.mxu0 %v2264
  %v2266 = vand.u32 %v2148, 4294901760
  %v2267 = vsub.f32 %v2148, %v2266
  %v2268 = vand.u32 %v2267, 4294901760
  %v2269 = vsub.f32 %v2267, %v2268
  %v2270 = vand.u32 %v2269, 4294901760
  %2271 = vmatpush.msra.mxu0 %v2270
  %v2272 = vand.u32 %v2147, 4294901760
  %v2273 = vsub.f32 %v2147, %v2272
  %v2274 = vand.u32 %v2273, 4294901760
  %v2275 = vsub.f32 %v2273, %v2274
  %v2276 = vand.u32 %v2275, 4294901760
  %2277 = vmatpush.msra.mxu0 %v2276
  %v2278 = vand.u32 %v2146, 4294901760
  %v2279 = vsub.f32 %v2146, %v2278
  %v2280 = vand.u32 %v2279, 4294901760
  %v2281 = vsub.f32 %v2279, %v2280
  %v2282 = vand.u32 %v2281, 4294901760
  %2283 = vmatpush.msra.mxu0 %v2282
  %v2284 = vand.u32 %v658, 4294901760
  %2285 = vmatmul.f32.gmra.mxu0 %v2284
  %v2286 = vpop.f32.mrf.mxu0
  %v2287 = vadd.f32 %v2190, %v2286
  %v2288 = vand.u32 %v871, 4294901760
  %2289 = vmatmul.f32.gmra.mxu0 %v2288
  %v2290 = vpop.f32.mrf.mxu0
  %v2291 = vadd.f32 %v2198, %v2290
  %v2292 = vand.u32 %v1084, 4294901760
  %2293 = vmatmul.f32.gmra.mxu0 %v2292
  %v2294 = vpop.f32.mrf.mxu0
  %v2295 = vadd.f32 %v2206, %v2294
  %v2296 = vand.u32 %v1297, 4294901760
  %2297 = vmatmul.f32.gmra.mxu0 %v2296
  %v2298 = vpop.f32.mrf.mxu0
  %v2299 = vadd.f32 %v2214, %v2298
  %v2300 = vand.u32 %v1510, 4294901760
  %2301 = vmatmul.f32.gmra.mxu0 %v2300
  %v2302 = vpop.f32.mrf.mxu0
  %v2303 = vadd.f32 %v2222, %v2302
  %v2304 = vand.u32 %v1723, 4294901760
  %2305 = vmatmul.f32.gmra.mxu0 %v2304
  %v2306 = vpop.f32.mrf.mxu0
  %v2307 = vadd.f32 %v2230, %v2306
  %v2308 = vand.u32 %v1936, 4294901760
  %2309 = vmatmul.f32.gmra.mxu0 %v2308
  %v2310 = vpop.f32.mrf.mxu0
  %v2311 = vadd.f32 %v2238, %v2310
  %v2312 = vand.u32 %v2161, 4294901760
  %2313 = vmatmul.f32.gmra.mxu0 %v2312
  %v2314 = vpop.f32.mrf.mxu0
  %v2315 = vadd.f32 %v2246, %v2314
  %2316 = vdwg.mxu0
  %2317 = vmatpush.msra.mxu0 0.0
  %2318 = vmatpush.msra.mxu0 0.0
  %2319 = vmatpush.msra.mxu0 0.0
  %2320 = vmatpush.msra.mxu0 0.0
  %2321 = vmatpush.msra.mxu0 0.0
  %2322 = vmatpush.msra.mxu0 0.0
  %2323 = vmatpush.msra.mxu0 0.0
  %2324 = vmatpush.msra.mxu0 0.0
  %2325 = vmatpush.msra.mxu0 0.0
  %2326 = vmatpush.msra.mxu0 0.0
  %2327 = vmatpush.msra.mxu0 0.0
  %2328 = vmatpush.msra.mxu0 0.0
  %v2329 = vand.u32 %v2149, 4294901760
  %v2330 = vsub.f32 %v2149, %v2329
  %2331 = vmatpush.msra.mxu0 %v2330
  %v2332 = vand.u32 %v2148, 4294901760
  %v2333 = vsub.f32 %v2148, %v2332
  %2334 = vmatpush.msra.mxu0 %v2333
  %v2335 = vand.u32 %v2147, 4294901760
  %v2336 = vsub.f32 %v2147, %v2335
  %2337 = vmatpush.msra.mxu0 %v2336
  %v2338 = vand.u32 %v2146, 4294901760
  %v2339 = vsub.f32 %v2146, %v2338
  %2340 = vmatpush.msra.mxu0 %v2339
  %v2341 = vand.u32 %v658, 4294901760
  %v2342 = vsub.f32 %v658, %v2341
  %2343 = vmatmul.f32.gmra.mxu0 %v2342
  %v2344 = vpop.f32.mrf.mxu0
  %v2345 = vadd.f32 %v2287, %v2344
  %v2346 = vand.u32 %v871, 4294901760
  %v2347 = vsub.f32 %v871, %v2346
  %2348 = vmatmul.f32.gmra.mxu0 %v2347
  %v2349 = vpop.f32.mrf.mxu0
  %v2350 = vadd.f32 %v2291, %v2349
  %v2351 = vand.u32 %v1084, 4294901760
  %v2352 = vsub.f32 %v1084, %v2351
  %2353 = vmatmul.f32.gmra.mxu0 %v2352
  %v2354 = vpop.f32.mrf.mxu0
  %v2355 = vadd.f32 %v2295, %v2354
  %v2356 = vand.u32 %v1297, 4294901760
  %v2357 = vsub.f32 %v1297, %v2356
  %2358 = vmatmul.f32.gmra.mxu0 %v2357
  %v2359 = vpop.f32.mrf.mxu0
  %v2360 = vadd.f32 %v2299, %v2359
  %v2361 = vand.u32 %v1510, 4294901760
  %v2362 = vsub.f32 %v1510, %v2361
  %2363 = vmatmul.f32.gmra.mxu0 %v2362
  %v2364 = vpop.f32.mrf.mxu0
  %v2365 = vadd.f32 %v2303, %v2364
  %v2366 = vand.u32 %v1723, 4294901760
  %v2367 = vsub.f32 %v1723, %v2366
  %2368 = vmatmul.f32.gmra.mxu0 %v2367
  %v2369 = vpop.f32.mrf.mxu0
  %v2370 = vadd.f32 %v2307, %v2369
  %v2371 = vand.u32 %v1936, 4294901760
  %v2372 = vsub.f32 %v1936, %v2371
  %2373 = vmatmul.f32.gmra.mxu0 %v2372
  %v2374 = vpop.f32.mrf.mxu0
  %v2375 = vadd.f32 %v2311, %v2374
  %v2376 = vand.u32 %v2161, 4294901760
  %v2377 = vsub.f32 %v2161, %v2376
  %2378 = vmatmul.f32.gmra.mxu0 %v2377
  %v2379 = vpop.f32.mrf.mxu0
  %v2380 = vadd.f32 %v2315, %v2379
  %2381 = vdwg.mxu0
  %2382 = vmatpush.msra.mxu0 0.0
  %2383 = vmatpush.msra.mxu0 0.0
  %2384 = vmatpush.msra.mxu0 0.0
  %2385 = vmatpush.msra.mxu0 0.0
  %2386 = vmatpush.msra.mxu0 0.0
  %2387 = vmatpush.msra.mxu0 0.0
  %2388 = vmatpush.msra.mxu0 0.0
  %2389 = vmatpush.msra.mxu0 0.0
  %2390 = vmatpush.msra.mxu0 0.0
  %2391 = vmatpush.msra.mxu0 0.0
  %2392 = vmatpush.msra.mxu0 0.0
  %2393 = vmatpush.msra.mxu0 0.0
  %v2394 = vand.u32 %v2149, 4294901760
  %2395 = vmatpush.msra.mxu0 %v2394
  %v2396 = vand.u32 %v2148, 4294901760
  %2397 = vmatpush.msra.mxu0 %v2396
  %v2398 = vand.u32 %v2147, 4294901760
  %2399 = vmatpush.msra.mxu0 %v2398
  %v2400 = vand.u32 %v2146, 4294901760
  %2401 = vmatpush.msra.mxu0 %v2400
  %v2402 = vand.u32 %v658, 4294901760
  %v2403 = vsub.f32 %v658, %v2402
  %v2404 = vand.u32 %v2403, 4294901760
  %2405 = vmatmul.f32.gmra.mxu0 %v2404
  %v2406 = vpop.f32.mrf.mxu0
  %v2407 = vadd.f32 %v2345, %v2406
  %v2408 = vand.u32 %v871, 4294901760
  %v2409 = vsub.f32 %v871, %v2408
  %v2410 = vand.u32 %v2409, 4294901760
  %2411 = vmatmul.f32.gmra.mxu0 %v2410
  %v2412 = vpop.f32.mrf.mxu0
  %v2413 = vadd.f32 %v2350, %v2412
  %v2414 = vand.u32 %v1084, 4294901760
  %v2415 = vsub.f32 %v1084, %v2414
  %v2416 = vand.u32 %v2415, 4294901760
  %2417 = vmatmul.f32.gmra.mxu0 %v2416
  %v2418 = vpop.f32.mrf.mxu0
  %v2419 = vadd.f32 %v2355, %v2418
  %v2420 = vand.u32 %v1297, 4294901760
  %v2421 = vsub.f32 %v1297, %v2420
  %v2422 = vand.u32 %v2421, 4294901760
  %2423 = vmatmul.f32.gmra.mxu0 %v2422
  %v2424 = vpop.f32.mrf.mxu0
  %v2425 = vadd.f32 %v2360, %v2424
  %v2426 = vand.u32 %v1510, 4294901760
  %v2427 = vsub.f32 %v1510, %v2426
  %v2428 = vand.u32 %v2427, 4294901760
  %2429 = vmatmul.f32.gmra.mxu0 %v2428
  %v2430 = vpop.f32.mrf.mxu0
  %v2431 = vadd.f32 %v2365, %v2430
  %v2432 = vand.u32 %v1723, 4294901760
  %v2433 = vsub.f32 %v1723, %v2432
  %v2434 = vand.u32 %v2433, 4294901760
  %2435 = vmatmul.f32.gmra.mxu0 %v2434
  %v2436 = vpop.f32.mrf.mxu0
  %v2437 = vadd.f32 %v2370, %v2436
  %v2438 = vand.u32 %v1936, 4294901760
  %v2439 = vsub.f32 %v1936, %v2438
  %v2440 = vand.u32 %v2439, 4294901760
  %2441 = vmatmul.f32.gmra.mxu0 %v2440
  %v2442 = vpop.f32.mrf.mxu0
  %v2443 = vadd.f32 %v2375, %v2442
  %v2444 = vand.u32 %v2161, 4294901760
  %v2445 = vsub.f32 %v2161, %v2444
  %v2446 = vand.u32 %v2445, 4294901760
  %2447 = vmatmul.f32.gmra.mxu0 %v2446
  %v2448 = vpop.f32.mrf.mxu0
  %v2449 = vadd.f32 %v2380, %v2448
  %2450 = vdwg.mxu0
  %2451 = vmatpush.msra.mxu0 0.0
  %2452 = vmatpush.msra.mxu0 0.0
  %2453 = vmatpush.msra.mxu0 0.0
  %2454 = vmatpush.msra.mxu0 0.0
  %2455 = vmatpush.msra.mxu0 0.0
  %2456 = vmatpush.msra.mxu0 0.0
  %2457 = vmatpush.msra.mxu0 0.0
  %2458 = vmatpush.msra.mxu0 0.0
  %2459 = vmatpush.msra.mxu0 0.0
  %2460 = vmatpush.msra.mxu0 0.0
  %2461 = vmatpush.msra.mxu0 0.0
  %2462 = vmatpush.msra.mxu0 0.0
  %v2463 = vand.u32 %v2149, 4294901760
  %v2464 = vsub.f32 %v2149, %v2463
  %v2465 = vand.u32 %v2464, 4294901760
  %2466 = vmatpush.msra.mxu0 %v2465
  %v2467 = vand.u32 %v2148, 4294901760
  %v2468 = vsub.f32 %v2148, %v2467
  %v2469 = vand.u32 %v2468, 4294901760
  %2470 = vmatpush.msra.mxu0 %v2469
  %v2471 = vand.u32 %v2147, 4294901760
  %v2472 = vsub.f32 %v2147, %v2471
  %v2473 = vand.u32 %v2472, 4294901760
  %2474 = vmatpush.msra.mxu0 %v2473
  %v2475 = vand.u32 %v2146, 4294901760
  %v2476 = vsub.f32 %v2146, %v2475
  %v2477 = vand.u32 %v2476, 4294901760
  %2478 = vmatpush.msra.mxu0 %v2477
  %v2479 = vand.u32 %v658, 4294901760
  %2480 = vmatmul.f32.gmra.mxu0 %v2479
  %v2481 = vpop.f32.mrf.mxu0
  %v2482 = vadd.f32 %v2407, %v2481
  %v2483 = vand.u32 %v871, 4294901760
  %2484 = vmatmul.f32.gmra.mxu0 %v2483
  %v2485 = vpop.f32.mrf.mxu0
  %v2486 = vadd.f32 %v2413, %v2485
  %v2487 = vand.u32 %v1084, 4294901760
  %2488 = vmatmul.f32.gmra.mxu0 %v2487
  %v2489 = vpop.f32.mrf.mxu0
  %v2490 = vadd.f32 %v2419, %v2489
  %v2491 = vand.u32 %v1297, 4294901760
  %2492 = vmatmul.f32.gmra.mxu0 %v2491
  %v2493 = vpop.f32.mrf.mxu0
  %v2494 = vadd.f32 %v2425, %v2493
  %v2495 = vand.u32 %v1510, 4294901760
  %2496 = vmatmul.f32.gmra.mxu0 %v2495
  %v2497 = vpop.f32.mrf.mxu0
  %v2498 = vadd.f32 %v2431, %v2497
  %v2499 = vand.u32 %v1723, 4294901760
  %2500 = vmatmul.f32.gmra.mxu0 %v2499
  %v2501 = vpop.f32.mrf.mxu0
  %v2502 = vadd.f32 %v2437, %v2501
  %v2503 = vand.u32 %v1936, 4294901760
  %2504 = vmatmul.f32.gmra.mxu0 %v2503
  %v2505 = vpop.f32.mrf.mxu0
  %v2506 = vadd.f32 %v2443, %v2505
  %v2507 = vand.u32 %v2161, 4294901760
  %2508 = vmatmul.f32.gmra.mxu0 %v2507
  %v2509 = vpop.f32.mrf.mxu0
  %v2510 = vadd.f32 %v2449, %v2509
  %2511 = vdwg.mxu0
  %2512 = vmatpush.msra.mxu0 0.0
  %2513 = vmatpush.msra.mxu0 0.0
  %2514 = vmatpush.msra.mxu0 0.0
  %2515 = vmatpush.msra.mxu0 0.0
  %2516 = vmatpush.msra.mxu0 0.0
  %2517 = vmatpush.msra.mxu0 0.0
  %2518 = vmatpush.msra.mxu0 0.0
  %2519 = vmatpush.msra.mxu0 0.0
  %2520 = vmatpush.msra.mxu0 0.0
  %2521 = vmatpush.msra.mxu0 0.0
  %2522 = vmatpush.msra.mxu0 0.0
  %2523 = vmatpush.msra.mxu0 0.0
  %v2524 = vand.u32 %v2149, 4294901760
  %2525 = vmatpush.msra.mxu0 %v2524
  %v2526 = vand.u32 %v2148, 4294901760
  %2527 = vmatpush.msra.mxu0 %v2526
  %v2528 = vand.u32 %v2147, 4294901760
  %2529 = vmatpush.msra.mxu0 %v2528
  %v2530 = vand.u32 %v2146, 4294901760
  %2531 = vmatpush.msra.mxu0 %v2530
  %v2532 = vand.u32 %v658, 4294901760
  %2533 = vmatmul.f32.gmra.mxu0 %v2532
  %v2534 = vpop.f32.mrf.mxu0
  %v2535 = vadd.f32 %v2482, %v2534
  %v2536 = vand.u32 %v871, 4294901760
  %2537 = vmatmul.f32.gmra.mxu0 %v2536
  %v2538 = vpop.f32.mrf.mxu0
  %v2539 = vadd.f32 %v2486, %v2538
  %v2540 = vand.u32 %v1084, 4294901760
  %2541 = vmatmul.f32.gmra.mxu0 %v2540
  %v2542 = vpop.f32.mrf.mxu0
  %v2543 = vadd.f32 %v2490, %v2542
  %v2544 = vand.u32 %v1297, 4294901760
  %2545 = vmatmul.f32.gmra.mxu0 %v2544
  %v2546 = vpop.f32.mrf.mxu0
  %v2547 = vadd.f32 %v2494, %v2546
  %v2548 = vand.u32 %v1510, 4294901760
  %2549 = vmatmul.f32.gmra.mxu0 %v2548
  %v2550 = vpop.f32.mrf.mxu0
  %v2551 = vadd.f32 %v2498, %v2550
  %v2552 = vand.u32 %v1723, 4294901760
  %2553 = vmatmul.f32.gmra.mxu0 %v2552
  %v2554 = vpop.f32.mrf.mxu0
  %v2555 = vadd.f32 %v2502, %v2554
  %v2556 = vand.u32 %v1936, 4294901760
  %2557 = vmatmul.f32.gmra.mxu0 %v2556
  %v2558 = vpop.f32.mrf.mxu0
  %v2559 = vadd.f32 %v2506, %v2558
  %v2560 = vand.u32 %v2161, 4294901760
  %2561 = vmatmul.f32.gmra.mxu0 %v2560
  %v2562 = vpop.f32.mrf.mxu0
  %v2563 = vadd.f32 %v2510, %v2562
  %2564 = vdwg.mxu0
  %2565 = vmatpush.msra.mxu0 0.0
  %2566 = vmatpush.msra.mxu0 0.0
  %2567 = vmatpush.msra.mxu0 0.0
  %2568 = vmatpush.msra.mxu0 0.0
  %2569 = vmatpush.msra.mxu0 0.0
  %2570 = vmatpush.msra.mxu0 0.0
  %2571 = vmatpush.msra.mxu0 0.0
  %2572 = vmatpush.msra.mxu0 0.0
  %2573 = vmatpush.msra.mxu0 0.0
  %2574 = vmatpush.msra.mxu0 0.0
  %2575 = vmatpush.msra.mxu0 0.0
  %2576 = vmatpush.msra.mxu0 0.0
  %v2577 = vand.u32 %v2153, 4294901760
  %2578 = vmatpush.msra.mxu0 %v2577
  %v2579 = vand.u32 %v2152, 4294901760
  %2580 = vmatpush.msra.mxu0 %v2579
  %v2581 = vand.u32 %v2151, 4294901760
  %2582 = vmatpush.msra.mxu0 %v2581
  %v2583 = vand.u32 %v2150, 4294901760
  %2584 = vmatpush.msra.mxu0 %v2583
  %v2585 = vand.u32 %v445, 4294901760
  %v2586 = vsub.f32 %v445, %v2585
  %v2587 = vand.u32 %v2586, 4294901760
  %v2588 = vsub.f32 %v2586, %v2587
  %v2589 = vand.u32 %v2588, 4294901760
  %2590 = vmatmul.f32.gmra.mxu0 %v2589
  %v2591 = vpop.f32.mrf.mxu0
  %v2592 = vadd.f32 0.0, %v2591
  %2593 = vdwg.mxu0
  %2594 = vmatpush.msra.mxu0 0.0
  %2595 = vmatpush.msra.mxu0 0.0
  %2596 = vmatpush.msra.mxu0 0.0
  %2597 = vmatpush.msra.mxu0 0.0
  %2598 = vmatpush.msra.mxu0 0.0
  %2599 = vmatpush.msra.mxu0 0.0
  %2600 = vmatpush.msra.mxu0 0.0
  %2601 = vmatpush.msra.mxu0 0.0
  %2602 = vmatpush.msra.mxu0 0.0
  %2603 = vmatpush.msra.mxu0 0.0
  %2604 = vmatpush.msra.mxu0 0.0
  %2605 = vmatpush.msra.mxu0 0.0
  %v2606 = vand.u32 %v2153, 4294901760
  %v2607 = vsub.f32 %v2153, %v2606
  %v2608 = vand.u32 %v2607, 4294901760
  %v2609 = vsub.f32 %v2607, %v2608
  %v2610 = vand.u32 %v2609, 4294901760
  %2611 = vmatpush.msra.mxu0 %v2610
  %v2612 = vand.u32 %v2152, 4294901760
  %v2613 = vsub.f32 %v2152, %v2612
  %v2614 = vand.u32 %v2613, 4294901760
  %v2615 = vsub.f32 %v2613, %v2614
  %v2616 = vand.u32 %v2615, 4294901760
  %2617 = vmatpush.msra.mxu0 %v2616
  %v2618 = vand.u32 %v2151, 4294901760
  %v2619 = vsub.f32 %v2151, %v2618
  %v2620 = vand.u32 %v2619, 4294901760
  %v2621 = vsub.f32 %v2619, %v2620
  %v2622 = vand.u32 %v2621, 4294901760
  %2623 = vmatpush.msra.mxu0 %v2622
  %v2624 = vand.u32 %v2150, 4294901760
  %v2625 = vsub.f32 %v2150, %v2624
  %v2626 = vand.u32 %v2625, 4294901760
  %v2627 = vsub.f32 %v2625, %v2626
  %v2628 = vand.u32 %v2627, 4294901760
  %2629 = vmatpush.msra.mxu0 %v2628
  %v2630 = vand.u32 %v445, 4294901760
  %2631 = vmatmul.f32.gmra.mxu0 %v2630
  %v2632 = vpop.f32.mrf.mxu0
  %v2633 = vadd.f32 %v2592, %v2632
  %2634 = vdwg.mxu0
  %2635 = vmatpush.msra.mxu0 0.0
  %2636 = vmatpush.msra.mxu0 0.0
  %2637 = vmatpush.msra.mxu0 0.0
  %2638 = vmatpush.msra.mxu0 0.0
  %2639 = vmatpush.msra.mxu0 0.0
  %2640 = vmatpush.msra.mxu0 0.0
  %2641 = vmatpush.msra.mxu0 0.0
  %2642 = vmatpush.msra.mxu0 0.0
  %2643 = vmatpush.msra.mxu0 0.0
  %2644 = vmatpush.msra.mxu0 0.0
  %2645 = vmatpush.msra.mxu0 0.0
  %2646 = vmatpush.msra.mxu0 0.0
  %v2647 = vand.u32 %v2153, 4294901760
  %v2648 = vsub.f32 %v2153, %v2647
  %2649 = vmatpush.msra.mxu0 %v2648
  %v2650 = vand.u32 %v2152, 4294901760
  %v2651 = vsub.f32 %v2152, %v2650
  %2652 = vmatpush.msra.mxu0 %v2651
  %v2653 = vand.u32 %v2151, 4294901760
  %v2654 = vsub.f32 %v2151, %v2653
  %2655 = vmatpush.msra.mxu0 %v2654
  %v2656 = vand.u32 %v2150, 4294901760
  %v2657 = vsub.f32 %v2150, %v2656
  %2658 = vmatpush.msra.mxu0 %v2657
  %v2659 = vand.u32 %v445, 4294901760
  %v2660 = vsub.f32 %v445, %v2659
  %2661 = vmatmul.f32.gmra.mxu0 %v2660
  %v2662 = vpop.f32.mrf.mxu0
  %v2663 = vadd.f32 %v2633, %v2662
  %2664 = vdwg.mxu0
  %2665 = vmatpush.msra.mxu0 0.0
  %2666 = vmatpush.msra.mxu0 0.0
  %2667 = vmatpush.msra.mxu0 0.0
  %2668 = vmatpush.msra.mxu0 0.0
  %2669 = vmatpush.msra.mxu0 0.0
  %2670 = vmatpush.msra.mxu0 0.0
  %2671 = vmatpush.msra.mxu0 0.0
  %2672 = vmatpush.msra.mxu0 0.0
  %2673 = vmatpush.msra.mxu0 0.0
  %2674 = vmatpush.msra.mxu0 0.0
  %2675 = vmatpush.msra.mxu0 0.0
  %2676 = vmatpush.msra.mxu0 0.0
  %v2677 = vand.u32 %v2153, 4294901760
  %2678 = vmatpush.msra.mxu0 %v2677
  %v2679 = vand.u32 %v2152, 4294901760
  %2680 = vmatpush.msra.mxu0 %v2679
  %v2681 = vand.u32 %v2151, 4294901760
  %2682 = vmatpush.msra.mxu0 %v2681
  %v2683 = vand.u32 %v2150, 4294901760
  %2684 = vmatpush.msra.mxu0 %v2683
  %v2685 = vand.u32 %v445, 4294901760
  %v2686 = vsub.f32 %v445, %v2685
  %v2687 = vand.u32 %v2686, 4294901760
  %2688 = vmatmul.f32.gmra.mxu0 %v2687
  %v2689 = vpop.f32.mrf.mxu0
  %v2690 = vadd.f32 %v2663, %v2689
  %2691 = vdwg.mxu0
  %2692 = vmatpush.msra.mxu0 0.0
  %2693 = vmatpush.msra.mxu0 0.0
  %2694 = vmatpush.msra.mxu0 0.0
  %2695 = vmatpush.msra.mxu0 0.0
  %2696 = vmatpush.msra.mxu0 0.0
  %2697 = vmatpush.msra.mxu0 0.0
  %2698 = vmatpush.msra.mxu0 0.0
  %2699 = vmatpush.msra.mxu0 0.0
  %2700 = vmatpush.msra.mxu0 0.0
  %2701 = vmatpush.msra.mxu0 0.0
  %2702 = vmatpush.msra.mxu0 0.0
  %2703 = vmatpush.msra.mxu0 0.0
  %v2704 = vand.u32 %v2153, 4294901760
  %v2705 = vsub.f32 %v2153, %v2704
  %v2706 = vand.u32 %v2705, 4294901760
  %2707 = vmatpush.msra.mxu0 %v2706
  %v2708 = vand.u32 %v2152, 4294901760
  %v2709 = vsub.f32 %v2152, %v2708
  %v2710 = vand.u32 %v2709, 4294901760
  %2711 = vmatpush.msra.mxu0 %v2710
  %v2712 = vand.u32 %v2151, 4294901760
  %v2713 = vsub.f32 %v2151, %v2712
  %v2714 = vand.u32 %v2713, 4294901760
  %2715 = vmatpush.msra.mxu0 %v2714
  %v2716 = vand.u32 %v2150, 4294901760
  %v2717 = vsub.f32 %v2150, %v2716
  %v2718 = vand.u32 %v2717, 4294901760
  %2719 = vmatpush.msra.mxu0 %v2718
  %v2720 = vand.u32 %v445, 4294901760
  %2721 = vmatmul.f32.gmra.mxu0 %v2720
  %v2722 = vpop.f32.mrf.mxu0
  %v2723 = vadd.f32 %v2690, %v2722
  %2724 = vdwg.mxu0
  %2725 = vmatpush.msra.mxu0 0.0
  %2726 = vmatpush.msra.mxu0 0.0
  %2727 = vmatpush.msra.mxu0 0.0
  %2728 = vmatpush.msra.mxu0 0.0
  %2729 = vmatpush.msra.mxu0 0.0
  %2730 = vmatpush.msra.mxu0 0.0
  %2731 = vmatpush.msra.mxu0 0.0
  %2732 = vmatpush.msra.mxu0 0.0
  %2733 = vmatpush.msra.mxu0 0.0
  %2734 = vmatpush.msra.mxu0 0.0
  %2735 = vmatpush.msra.mxu0 0.0
  %2736 = vmatpush.msra.mxu0 0.0
  %v2737 = vand.u32 %v2153, 4294901760
  %2738 = vmatpush.msra.mxu0 %v2737
  %v2739 = vand.u32 %v2152, 4294901760
  %2740 = vmatpush.msra.mxu0 %v2739
  %v2741 = vand.u32 %v2151, 4294901760
  %2742 = vmatpush.msra.mxu0 %v2741
  %v2743 = vand.u32 %v2150, 4294901760
  %2744 = vmatpush.msra.mxu0 %v2743
  %v2745 = vand.u32 %v445, 4294901760
  %2746 = vmatmul.f32.gmra.mxu0 %v2745
  %v2747 = vpop.f32.mrf.mxu0
  %v2748 = vadd.f32 %v2723, %v2747
  %2749 = vdwg.mxu0
  %v2750 = vadd.f32 %v2535, %v2748
  %v2751 = vmul.f32 %v2750, %v37
  %v2752 = vtanh.pop %v2751
  %v2753 = vadd.f32 %v2752, 1.0
  %v2754 = vmul.f32 %v2753, 0.5
  %v2755 = vsel %vm36, %v2752, %v2754
  %v2756 = vmul.f32 %v2755, 0.0
  %2758 = vrot.lane.b32.xlu0 %v2755, 64
  %v2759 = vpop.permute.xlu0 %2758
  %v2761 = vmul.f32 %v2755, %v2759
  %2763 = vrot.lane.b32.xlu0 %v2761, 32
  %v2764 = vpop.permute.xlu0 %2763
  %v2766 = vadd.f32 %v2756, %v2764
  %v2767 = vtanh.pop %v2766
  %2769 = vrot.lane.b32.xlu0 %v2767, 64
  %v2770 = vpop.permute.xlu0 %2769
  %v2772 = vmul.f32 %v2755, %v2770
  %2774 = vrot.lane.b32.xlu0 %v2772, 32
  %v2775 = vpop.permute.xlu0 %2774
  %v2776 = vsel %vm443, %v2775, 0
  %2778 = vmatpush.msra.mxu0 0.0
  %2779 = vmatpush.msra.mxu0 0.0
  %2780 = vmatpush.msra.mxu0 0.0
  %2781 = vmatpush.msra.mxu0 0.0
  %2782 = vmatpush.msra.mxu0 0.0
  %2783 = vmatpush.msra.mxu0 0.0
  %2784 = vmatpush.msra.mxu0 0.0
  %2785 = vmatpush.msra.mxu0 0.0
  %2786 = vmatpush.msra.mxu0 0.0
  %2787 = vmatpush.msra.mxu0 0.0
  %2788 = vmatpush.msra.mxu0 0.0
  %2789 = vmatpush.msra.mxu0 0.0
  %v2790 = vand.u32 %v2153, 4294901760
  %2791 = vmatpush.msra.mxu0 %v2790
  %v2792 = vand.u32 %v2152, 4294901760
  %2793 = vmatpush.msra.mxu0 %v2792
  %v2794 = vand.u32 %v2151, 4294901760
  %2795 = vmatpush.msra.mxu0 %v2794
  %v2796 = vand.u32 %v2150, 4294901760
  %2797 = vmatpush.msra.mxu0 %v2796
  %v2798 = vand.u32 %v2776, 4294901760
  %v2799 = vsub.f32 %v2776, %v2798
  %v2800 = vand.u32 %v2799, 4294901760
  %v2801 = vsub.f32 %v2799, %v2800
  %v2802 = vand.u32 %v2801, 4294901760
  %2803 = vmatmul.f32.gmra.mxu0 %v2802
  %v2804 = vpop.f32.mrf.mxu0
  %v2805 = vadd.f32 0.0, %v2804
  %2806 = vdwg.mxu0
  %2807 = vmatpush.msra.mxu0 0.0
  %2808 = vmatpush.msra.mxu0 0.0
  %2809 = vmatpush.msra.mxu0 0.0
  %2810 = vmatpush.msra.mxu0 0.0
  %2811 = vmatpush.msra.mxu0 0.0
  %2812 = vmatpush.msra.mxu0 0.0
  %2813 = vmatpush.msra.mxu0 0.0
  %2814 = vmatpush.msra.mxu0 0.0
  %2815 = vmatpush.msra.mxu0 0.0
  %2816 = vmatpush.msra.mxu0 0.0
  %2817 = vmatpush.msra.mxu0 0.0
  %2818 = vmatpush.msra.mxu0 0.0
  %v2819 = vand.u32 %v2153, 4294901760
  %v2820 = vsub.f32 %v2153, %v2819
  %v2821 = vand.u32 %v2820, 4294901760
  %v2822 = vsub.f32 %v2820, %v2821
  %v2823 = vand.u32 %v2822, 4294901760
  %2824 = vmatpush.msra.mxu0 %v2823
  %v2825 = vand.u32 %v2152, 4294901760
  %v2826 = vsub.f32 %v2152, %v2825
  %v2827 = vand.u32 %v2826, 4294901760
  %v2828 = vsub.f32 %v2826, %v2827
  %v2829 = vand.u32 %v2828, 4294901760
  %2830 = vmatpush.msra.mxu0 %v2829
  %v2831 = vand.u32 %v2151, 4294901760
  %v2832 = vsub.f32 %v2151, %v2831
  %v2833 = vand.u32 %v2832, 4294901760
  %v2834 = vsub.f32 %v2832, %v2833
  %v2835 = vand.u32 %v2834, 4294901760
  %2836 = vmatpush.msra.mxu0 %v2835
  %v2837 = vand.u32 %v2150, 4294901760
  %v2838 = vsub.f32 %v2150, %v2837
  %v2839 = vand.u32 %v2838, 4294901760
  %v2840 = vsub.f32 %v2838, %v2839
  %v2841 = vand.u32 %v2840, 4294901760
  %2842 = vmatpush.msra.mxu0 %v2841
  %v2843 = vand.u32 %v2776, 4294901760
  %2844 = vmatmul.f32.gmra.mxu0 %v2843
  %v2845 = vpop.f32.mrf.mxu0
  %v2846 = vadd.f32 %v2805, %v2845
  %2847 = vdwg.mxu0
  %2848 = vmatpush.msra.mxu0 0.0
  %2849 = vmatpush.msra.mxu0 0.0
  %2850 = vmatpush.msra.mxu0 0.0
  %2851 = vmatpush.msra.mxu0 0.0
  %2852 = vmatpush.msra.mxu0 0.0
  %2853 = vmatpush.msra.mxu0 0.0
  %2854 = vmatpush.msra.mxu0 0.0
  %2855 = vmatpush.msra.mxu0 0.0
  %2856 = vmatpush.msra.mxu0 0.0
  %2857 = vmatpush.msra.mxu0 0.0
  %2858 = vmatpush.msra.mxu0 0.0
  %2859 = vmatpush.msra.mxu0 0.0
  %v2860 = vand.u32 %v2153, 4294901760
  %v2861 = vsub.f32 %v2153, %v2860
  %2862 = vmatpush.msra.mxu0 %v2861
  %v2863 = vand.u32 %v2152, 4294901760
  %v2864 = vsub.f32 %v2152, %v2863
  %2865 = vmatpush.msra.mxu0 %v2864
  %v2866 = vand.u32 %v2151, 4294901760
  %v2867 = vsub.f32 %v2151, %v2866
  %2868 = vmatpush.msra.mxu0 %v2867
  %v2869 = vand.u32 %v2150, 4294901760
  %v2870 = vsub.f32 %v2150, %v2869
  %2871 = vmatpush.msra.mxu0 %v2870
  %v2872 = vand.u32 %v2776, 4294901760
  %v2873 = vsub.f32 %v2776, %v2872
  %2874 = vmatmul.f32.gmra.mxu0 %v2873
  %v2875 = vpop.f32.mrf.mxu0
  %v2876 = vadd.f32 %v2846, %v2875
  %2877 = vdwg.mxu0
  %2878 = vmatpush.msra.mxu0 0.0
  %2879 = vmatpush.msra.mxu0 0.0
  %2880 = vmatpush.msra.mxu0 0.0
  %2881 = vmatpush.msra.mxu0 0.0
  %2882 = vmatpush.msra.mxu0 0.0
  %2883 = vmatpush.msra.mxu0 0.0
  %2884 = vmatpush.msra.mxu0 0.0
  %2885 = vmatpush.msra.mxu0 0.0
  %2886 = vmatpush.msra.mxu0 0.0
  %2887 = vmatpush.msra.mxu0 0.0
  %2888 = vmatpush.msra.mxu0 0.0
  %2889 = vmatpush.msra.mxu0 0.0
  %v2890 = vand.u32 %v2153, 4294901760
  %2891 = vmatpush.msra.mxu0 %v2890
  %v2892 = vand.u32 %v2152, 4294901760
  %2893 = vmatpush.msra.mxu0 %v2892
  %v2894 = vand.u32 %v2151, 4294901760
  %2895 = vmatpush.msra.mxu0 %v2894
  %v2896 = vand.u32 %v2150, 4294901760
  %2897 = vmatpush.msra.mxu0 %v2896
  %v2898 = vand.u32 %v2776, 4294901760
  %v2899 = vsub.f32 %v2776, %v2898
  %v2900 = vand.u32 %v2899, 4294901760
  %2901 = vmatmul.f32.gmra.mxu0 %v2900
  %v2902 = vpop.f32.mrf.mxu0
  %v2903 = vadd.f32 %v2876, %v2902
  %2904 = vdwg.mxu0
  %2905 = vmatpush.msra.mxu0 0.0
  %2906 = vmatpush.msra.mxu0 0.0
  %2907 = vmatpush.msra.mxu0 0.0
  %2908 = vmatpush.msra.mxu0 0.0
  %2909 = vmatpush.msra.mxu0 0.0
  %2910 = vmatpush.msra.mxu0 0.0
  %2911 = vmatpush.msra.mxu0 0.0
  %2912 = vmatpush.msra.mxu0 0.0
  %2913 = vmatpush.msra.mxu0 0.0
  %2914 = vmatpush.msra.mxu0 0.0
  %2915 = vmatpush.msra.mxu0 0.0
  %2916 = vmatpush.msra.mxu0 0.0
  %v2917 = vand.u32 %v2153, 4294901760
  %v2918 = vsub.f32 %v2153, %v2917
  %v2919 = vand.u32 %v2918, 4294901760
  %2920 = vmatpush.msra.mxu0 %v2919
  %v2921 = vand.u32 %v2152, 4294901760
  %v2922 = vsub.f32 %v2152, %v2921
  %v2923 = vand.u32 %v2922, 4294901760
  %2924 = vmatpush.msra.mxu0 %v2923
  %v2925 = vand.u32 %v2151, 4294901760
  %v2926 = vsub.f32 %v2151, %v2925
  %v2927 = vand.u32 %v2926, 4294901760
  %2928 = vmatpush.msra.mxu0 %v2927
  %v2929 = vand.u32 %v2150, 4294901760
  %v2930 = vsub.f32 %v2150, %v2929
  %v2931 = vand.u32 %v2930, 4294901760
  %2932 = vmatpush.msra.mxu0 %v2931
  %v2933 = vand.u32 %v2776, 4294901760
  %2934 = vmatmul.f32.gmra.mxu0 %v2933
  %v2935 = vpop.f32.mrf.mxu0
  %v2936 = vadd.f32 %v2903, %v2935
  %2937 = vdwg.mxu0
  %2938 = vmatpush.msra.mxu0 0.0
  %2939 = vmatpush.msra.mxu0 0.0
  %2940 = vmatpush.msra.mxu0 0.0
  %2941 = vmatpush.msra.mxu0 0.0
  %2942 = vmatpush.msra.mxu0 0.0
  %2943 = vmatpush.msra.mxu0 0.0
  %2944 = vmatpush.msra.mxu0 0.0
  %2945 = vmatpush.msra.mxu0 0.0
  %2946 = vmatpush.msra.mxu0 0.0
  %2947 = vmatpush.msra.mxu0 0.0
  %2948 = vmatpush.msra.mxu0 0.0
  %2949 = vmatpush.msra.mxu0 0.0
  %v2950 = vand.u32 %v2153, 4294901760
  %2951 = vmatpush.msra.mxu0 %v2950
  %v2952 = vand.u32 %v2152, 4294901760
  %2953 = vmatpush.msra.mxu0 %v2952
  %v2954 = vand.u32 %v2151, 4294901760
  %2955 = vmatpush.msra.mxu0 %v2954
  %v2956 = vand.u32 %v2150, 4294901760
  %2957 = vmatpush.msra.mxu0 %v2956
  %v2958 = vand.u32 %v2776, 4294901760
  %2959 = vmatmul.f32.gmra.mxu0 %v2958
  %v2960 = vpop.f32.mrf.mxu0
  %v2961 = vadd.f32 %v2936, %v2960
  %2962 = vdwg.mxu0
  %v2963 = vadd.f32 %v2539, %v2961
  %v2964 = vmul.f32 %v2963, %v37
  %v2965 = vtanh.pop %v2964
  %v2966 = vadd.f32 %v2965, 1.0
  %v2967 = vmul.f32 %v2966, 0.5
  %v2968 = vsel %vm36, %v2965, %v2967
  %v2969 = vmul.f32 %v2968, %v2766
  %2971 = vrot.lane.b32.xlu0 %v2968, 64
  %v2972 = vpop.permute.xlu0 %2971
  %v2974 = vmul.f32 %v2968, %v2972
  %2976 = vrot.lane.b32.xlu0 %v2974, 32
  %v2977 = vpop.permute.xlu0 %2976
  %v2979 = vadd.f32 %v2969, %v2977
  %v2980 = vtanh.pop %v2979
  %2982 = vrot.lane.b32.xlu0 %v2980, 64
  %v2983 = vpop.permute.xlu0 %2982
  %v2985 = vmul.f32 %v2968, %v2983
  %2987 = vrot.lane.b32.xlu0 %v2985, 32
  %v2988 = vpop.permute.xlu0 %2987
  %v2989 = vsel %vm443, %v2988, 0
  %2991 = vmatpush.msra.mxu0 0.0
  %2992 = vmatpush.msra.mxu0 0.0
  %2993 = vmatpush.msra.mxu0 0.0
  %2994 = vmatpush.msra.mxu0 0.0
  %2995 = vmatpush.msra.mxu0 0.0
  %2996 = vmatpush.msra.mxu0 0.0
  %2997 = vmatpush.msra.mxu0 0.0
  %2998 = vmatpush.msra.mxu0 0.0
  %2999 = vmatpush.msra.mxu0 0.0
  %3000 = vmatpush.msra.mxu0 0.0
  %3001 = vmatpush.msra.mxu0 0.0
  %3002 = vmatpush.msra.mxu0 0.0
  %v3003 = vand.u32 %v2153, 4294901760
  %3004 = vmatpush.msra.mxu0 %v3003
  %v3005 = vand.u32 %v2152, 4294901760
  %3006 = vmatpush.msra.mxu0 %v3005
  %v3007 = vand.u32 %v2151, 4294901760
  %3008 = vmatpush.msra.mxu0 %v3007
  %v3009 = vand.u32 %v2150, 4294901760
  %3010 = vmatpush.msra.mxu0 %v3009
  %v3011 = vand.u32 %v2989, 4294901760
  %v3012 = vsub.f32 %v2989, %v3011
  %v3013 = vand.u32 %v3012, 4294901760
  %v3014 = vsub.f32 %v3012, %v3013
  %v3015 = vand.u32 %v3014, 4294901760
  %3016 = vmatmul.f32.gmra.mxu0 %v3015
  %v3017 = vpop.f32.mrf.mxu0
  %v3018 = vadd.f32 0.0, %v3017
  %3019 = vdwg.mxu0
  %3020 = vmatpush.msra.mxu0 0.0
  %3021 = vmatpush.msra.mxu0 0.0
  %3022 = vmatpush.msra.mxu0 0.0
  %3023 = vmatpush.msra.mxu0 0.0
  %3024 = vmatpush.msra.mxu0 0.0
  %3025 = vmatpush.msra.mxu0 0.0
  %3026 = vmatpush.msra.mxu0 0.0
  %3027 = vmatpush.msra.mxu0 0.0
  %3028 = vmatpush.msra.mxu0 0.0
  %3029 = vmatpush.msra.mxu0 0.0
  %3030 = vmatpush.msra.mxu0 0.0
  %3031 = vmatpush.msra.mxu0 0.0
  %v3032 = vand.u32 %v2153, 4294901760
  %v3033 = vsub.f32 %v2153, %v3032
  %v3034 = vand.u32 %v3033, 4294901760
  %v3035 = vsub.f32 %v3033, %v3034
  %v3036 = vand.u32 %v3035, 4294901760
  %3037 = vmatpush.msra.mxu0 %v3036
  %v3038 = vand.u32 %v2152, 4294901760
  %v3039 = vsub.f32 %v2152, %v3038
  %v3040 = vand.u32 %v3039, 4294901760
  %v3041 = vsub.f32 %v3039, %v3040
  %v3042 = vand.u32 %v3041, 4294901760
  %3043 = vmatpush.msra.mxu0 %v3042
  %v3044 = vand.u32 %v2151, 4294901760
  %v3045 = vsub.f32 %v2151, %v3044
  %v3046 = vand.u32 %v3045, 4294901760
  %v3047 = vsub.f32 %v3045, %v3046
  %v3048 = vand.u32 %v3047, 4294901760
  %3049 = vmatpush.msra.mxu0 %v3048
  %v3050 = vand.u32 %v2150, 4294901760
  %v3051 = vsub.f32 %v2150, %v3050
  %v3052 = vand.u32 %v3051, 4294901760
  %v3053 = vsub.f32 %v3051, %v3052
  %v3054 = vand.u32 %v3053, 4294901760
  %3055 = vmatpush.msra.mxu0 %v3054
  %v3056 = vand.u32 %v2989, 4294901760
  %3057 = vmatmul.f32.gmra.mxu0 %v3056
  %v3058 = vpop.f32.mrf.mxu0
  %v3059 = vadd.f32 %v3018, %v3058
  %3060 = vdwg.mxu0
  %3061 = vmatpush.msra.mxu0 0.0
  %3062 = vmatpush.msra.mxu0 0.0
  %3063 = vmatpush.msra.mxu0 0.0
  %3064 = vmatpush.msra.mxu0 0.0
  %3065 = vmatpush.msra.mxu0 0.0
  %3066 = vmatpush.msra.mxu0 0.0
  %3067 = vmatpush.msra.mxu0 0.0
  %3068 = vmatpush.msra.mxu0 0.0
  %3069 = vmatpush.msra.mxu0 0.0
  %3070 = vmatpush.msra.mxu0 0.0
  %3071 = vmatpush.msra.mxu0 0.0
  %3072 = vmatpush.msra.mxu0 0.0
  %v3073 = vand.u32 %v2153, 4294901760
  %v3074 = vsub.f32 %v2153, %v3073
  %3075 = vmatpush.msra.mxu0 %v3074
  %v3076 = vand.u32 %v2152, 4294901760
  %v3077 = vsub.f32 %v2152, %v3076
  %3078 = vmatpush.msra.mxu0 %v3077
  %v3079 = vand.u32 %v2151, 4294901760
  %v3080 = vsub.f32 %v2151, %v3079
  %3081 = vmatpush.msra.mxu0 %v3080
  %v3082 = vand.u32 %v2150, 4294901760
  %v3083 = vsub.f32 %v2150, %v3082
  %3084 = vmatpush.msra.mxu0 %v3083
  %v3085 = vand.u32 %v2989, 4294901760
  %v3086 = vsub.f32 %v2989, %v3085
  %3087 = vmatmul.f32.gmra.mxu0 %v3086
  %v3088 = vpop.f32.mrf.mxu0
  %v3089 = vadd.f32 %v3059, %v3088
  %3090 = vdwg.mxu0
  %3091 = vmatpush.msra.mxu0 0.0
  %3092 = vmatpush.msra.mxu0 0.0
  %3093 = vmatpush.msra.mxu0 0.0
  %3094 = vmatpush.msra.mxu0 0.0
  %3095 = vmatpush.msra.mxu0 0.0
  %3096 = vmatpush.msra.mxu0 0.0
  %3097 = vmatpush.msra.mxu0 0.0
  %3098 = vmatpush.msra.mxu0 0.0
  %3099 = vmatpush.msra.mxu0 0.0
  %3100 = vmatpush.msra.mxu0 0.0
  %3101 = vmatpush.msra.mxu0 0.0
  %3102 = vmatpush.msra.mxu0 0.0
  %v3103 = vand.u32 %v2153, 4294901760
  %3104 = vmatpush.msra.mxu0 %v3103
  %v3105 = vand.u32 %v2152, 4294901760
  %3106 = vmatpush.msra.mxu0 %v3105
  %v3107 = vand.u32 %v2151, 4294901760
  %3108 = vmatpush.msra.mxu0 %v3107
  %v3109 = vand.u32 %v2150, 4294901760
  %3110 = vmatpush.msra.mxu0 %v3109
  %v3111 = vand.u32 %v2989, 4294901760
  %v3112 = vsub.f32 %v2989, %v3111
  %v3113 = vand.u32 %v3112, 4294901760
  %3114 = vmatmul.f32.gmra.mxu0 %v3113
  %v3115 = vpop.f32.mrf.mxu0
  %v3116 = vadd.f32 %v3089, %v3115
  %3117 = vdwg.mxu0
  %3118 = vmatpush.msra.mxu0 0.0
  %3119 = vmatpush.msra.mxu0 0.0
  %3120 = vmatpush.msra.mxu0 0.0
  %3121 = vmatpush.msra.mxu0 0.0
  %3122 = vmatpush.msra.mxu0 0.0
  %3123 = vmatpush.msra.mxu0 0.0
  %3124 = vmatpush.msra.mxu0 0.0
  %3125 = vmatpush.msra.mxu0 0.0
  %3126 = vmatpush.msra.mxu0 0.0
  %3127 = vmatpush.msra.mxu0 0.0
  %3128 = vmatpush.msra.mxu0 0.0
  %3129 = vmatpush.msra.mxu0 0.0
  %v3130 = vand.u32 %v2153, 4294901760
  %v3131 = vsub.f32 %v2153, %v3130
  %v3132 = vand.u32 %v3131, 4294901760
  %3133 = vmatpush.msra.mxu0 %v3132
  %v3134 = vand.u32 %v2152, 4294901760
  %v3135 = vsub.f32 %v2152, %v3134
  %v3136 = vand.u32 %v3135, 4294901760
  %3137 = vmatpush.msra.mxu0 %v3136
  %v3138 = vand.u32 %v2151, 4294901760
  %v3139 = vsub.f32 %v2151, %v3138
  %v3140 = vand.u32 %v3139, 4294901760
  %3141 = vmatpush.msra.mxu0 %v3140
  %v3142 = vand.u32 %v2150, 4294901760
  %v3143 = vsub.f32 %v2150, %v3142
  %v3144 = vand.u32 %v3143, 4294901760
  %3145 = vmatpush.msra.mxu0 %v3144
  %v3146 = vand.u32 %v2989, 4294901760
  %3147 = vmatmul.f32.gmra.mxu0 %v3146
  %v3148 = vpop.f32.mrf.mxu0
  %v3149 = vadd.f32 %v3116, %v3148
  %3150 = vdwg.mxu0
  %3151 = vmatpush.msra.mxu0 0.0
  %3152 = vmatpush.msra.mxu0 0.0
  %3153 = vmatpush.msra.mxu0 0.0
  %3154 = vmatpush.msra.mxu0 0.0
  %3155 = vmatpush.msra.mxu0 0.0
  %3156 = vmatpush.msra.mxu0 0.0
  %3157 = vmatpush.msra.mxu0 0.0
  %3158 = vmatpush.msra.mxu0 0.0
  %3159 = vmatpush.msra.mxu0 0.0
  %3160 = vmatpush.msra.mxu0 0.0
  %3161 = vmatpush.msra.mxu0 0.0
  %3162 = vmatpush.msra.mxu0 0.0
  %v3163 = vand.u32 %v2153, 4294901760
  %3164 = vmatpush.msra.mxu0 %v3163
  %v3165 = vand.u32 %v2152, 4294901760
  %3166 = vmatpush.msra.mxu0 %v3165
  %v3167 = vand.u32 %v2151, 4294901760
  %3168 = vmatpush.msra.mxu0 %v3167
  %v3169 = vand.u32 %v2150, 4294901760
  %3170 = vmatpush.msra.mxu0 %v3169
  %v3171 = vand.u32 %v2989, 4294901760
  %3172 = vmatmul.f32.gmra.mxu0 %v3171
  %v3173 = vpop.f32.mrf.mxu0
  %v3174 = vadd.f32 %v3149, %v3173
  %3175 = vdwg.mxu0
  %v3176 = vadd.f32 %v2543, %v3174
  %v3177 = vmul.f32 %v3176, %v37
  %v3178 = vtanh.pop %v3177
  %v3179 = vadd.f32 %v3178, 1.0
  %v3180 = vmul.f32 %v3179, 0.5
  %v3181 = vsel %vm36, %v3178, %v3180
  %v3182 = vmul.f32 %v3181, %v2979
  %3184 = vrot.lane.b32.xlu0 %v3181, 64
  %v3185 = vpop.permute.xlu0 %3184
  %v3187 = vmul.f32 %v3181, %v3185
  %3189 = vrot.lane.b32.xlu0 %v3187, 32
  %v3190 = vpop.permute.xlu0 %3189
  %v3192 = vadd.f32 %v3182, %v3190
  %v3193 = vtanh.pop %v3192
  %3195 = vrot.lane.b32.xlu0 %v3193, 64
  %v3196 = vpop.permute.xlu0 %3195
  %v3198 = vmul.f32 %v3181, %v3196
  %3200 = vrot.lane.b32.xlu0 %v3198, 32
  %v3201 = vpop.permute.xlu0 %3200
  %v3202 = vsel %vm443, %v3201, 0
  %3204 = vmatpush.msra.mxu0 0.0
  %3205 = vmatpush.msra.mxu0 0.0
  %3206 = vmatpush.msra.mxu0 0.0
  %3207 = vmatpush.msra.mxu0 0.0
  %3208 = vmatpush.msra.mxu0 0.0
  %3209 = vmatpush.msra.mxu0 0.0
  %3210 = vmatpush.msra.mxu0 0.0
  %3211 = vmatpush.msra.mxu0 0.0
  %3212 = vmatpush.msra.mxu0 0.0
  %3213 = vmatpush.msra.mxu0 0.0
  %3214 = vmatpush.msra.mxu0 0.0
  %3215 = vmatpush.msra.mxu0 0.0
  %v3216 = vand.u32 %v2153, 4294901760
  %3217 = vmatpush.msra.mxu0 %v3216
  %v3218 = vand.u32 %v2152, 4294901760
  %3219 = vmatpush.msra.mxu0 %v3218
  %v3220 = vand.u32 %v2151, 4294901760
  %3221 = vmatpush.msra.mxu0 %v3220
  %v3222 = vand.u32 %v2150, 4294901760
  %3223 = vmatpush.msra.mxu0 %v3222
  %v3224 = vand.u32 %v3202, 4294901760
  %v3225 = vsub.f32 %v3202, %v3224
  %v3226 = vand.u32 %v3225, 4294901760
  %v3227 = vsub.f32 %v3225, %v3226
  %v3228 = vand.u32 %v3227, 4294901760
  %3229 = vmatmul.f32.gmra.mxu0 %v3228
  %v3230 = vpop.f32.mrf.mxu0
  %v3231 = vadd.f32 0.0, %v3230
  %3232 = vdwg.mxu0
  %3233 = vmatpush.msra.mxu0 0.0
  %3234 = vmatpush.msra.mxu0 0.0
  %3235 = vmatpush.msra.mxu0 0.0
  %3236 = vmatpush.msra.mxu0 0.0
  %3237 = vmatpush.msra.mxu0 0.0
  %3238 = vmatpush.msra.mxu0 0.0
  %3239 = vmatpush.msra.mxu0 0.0
  %3240 = vmatpush.msra.mxu0 0.0
  %3241 = vmatpush.msra.mxu0 0.0
  %3242 = vmatpush.msra.mxu0 0.0
  %3243 = vmatpush.msra.mxu0 0.0
  %3244 = vmatpush.msra.mxu0 0.0
  %v3245 = vand.u32 %v2153, 4294901760
  %v3246 = vsub.f32 %v2153, %v3245
  %v3247 = vand.u32 %v3246, 4294901760
  %v3248 = vsub.f32 %v3246, %v3247
  %v3249 = vand.u32 %v3248, 4294901760
  %3250 = vmatpush.msra.mxu0 %v3249
  %v3251 = vand.u32 %v2152, 4294901760
  %v3252 = vsub.f32 %v2152, %v3251
  %v3253 = vand.u32 %v3252, 4294901760
  %v3254 = vsub.f32 %v3252, %v3253
  %v3255 = vand.u32 %v3254, 4294901760
  %3256 = vmatpush.msra.mxu0 %v3255
  %v3257 = vand.u32 %v2151, 4294901760
  %v3258 = vsub.f32 %v2151, %v3257
  %v3259 = vand.u32 %v3258, 4294901760
  %v3260 = vsub.f32 %v3258, %v3259
  %v3261 = vand.u32 %v3260, 4294901760
  %3262 = vmatpush.msra.mxu0 %v3261
  %v3263 = vand.u32 %v2150, 4294901760
  %v3264 = vsub.f32 %v2150, %v3263
  %v3265 = vand.u32 %v3264, 4294901760
  %v3266 = vsub.f32 %v3264, %v3265
  %v3267 = vand.u32 %v3266, 4294901760
  %3268 = vmatpush.msra.mxu0 %v3267
  %v3269 = vand.u32 %v3202, 4294901760
  %3270 = vmatmul.f32.gmra.mxu0 %v3269
  %v3271 = vpop.f32.mrf.mxu0
  %v3272 = vadd.f32 %v3231, %v3271
  %3273 = vdwg.mxu0
  %3274 = vmatpush.msra.mxu0 0.0
  %3275 = vmatpush.msra.mxu0 0.0
  %3276 = vmatpush.msra.mxu0 0.0
  %3277 = vmatpush.msra.mxu0 0.0
  %3278 = vmatpush.msra.mxu0 0.0
  %3279 = vmatpush.msra.mxu0 0.0
  %3280 = vmatpush.msra.mxu0 0.0
  %3281 = vmatpush.msra.mxu0 0.0
  %3282 = vmatpush.msra.mxu0 0.0
  %3283 = vmatpush.msra.mxu0 0.0
  %3284 = vmatpush.msra.mxu0 0.0
  %3285 = vmatpush.msra.mxu0 0.0
  %v3286 = vand.u32 %v2153, 4294901760
  %v3287 = vsub.f32 %v2153, %v3286
  %3288 = vmatpush.msra.mxu0 %v3287
  %v3289 = vand.u32 %v2152, 4294901760
  %v3290 = vsub.f32 %v2152, %v3289
  %3291 = vmatpush.msra.mxu0 %v3290
  %v3292 = vand.u32 %v2151, 4294901760
  %v3293 = vsub.f32 %v2151, %v3292
  %3294 = vmatpush.msra.mxu0 %v3293
  %v3295 = vand.u32 %v2150, 4294901760
  %v3296 = vsub.f32 %v2150, %v3295
  %3297 = vmatpush.msra.mxu0 %v3296
  %v3298 = vand.u32 %v3202, 4294901760
  %v3299 = vsub.f32 %v3202, %v3298
  %3300 = vmatmul.f32.gmra.mxu0 %v3299
  %v3301 = vpop.f32.mrf.mxu0
  %v3302 = vadd.f32 %v3272, %v3301
  %3303 = vdwg.mxu0
  %3304 = vmatpush.msra.mxu0 0.0
  %3305 = vmatpush.msra.mxu0 0.0
  %3306 = vmatpush.msra.mxu0 0.0
  %3307 = vmatpush.msra.mxu0 0.0
  %3308 = vmatpush.msra.mxu0 0.0
  %3309 = vmatpush.msra.mxu0 0.0
  %3310 = vmatpush.msra.mxu0 0.0
  %3311 = vmatpush.msra.mxu0 0.0
  %3312 = vmatpush.msra.mxu0 0.0
  %3313 = vmatpush.msra.mxu0 0.0
  %3314 = vmatpush.msra.mxu0 0.0
  %3315 = vmatpush.msra.mxu0 0.0
  %v3316 = vand.u32 %v2153, 4294901760
  %3317 = vmatpush.msra.mxu0 %v3316
  %v3318 = vand.u32 %v2152, 4294901760
  %3319 = vmatpush.msra.mxu0 %v3318
  %v3320 = vand.u32 %v2151, 4294901760
  %3321 = vmatpush.msra.mxu0 %v3320
  %v3322 = vand.u32 %v2150, 4294901760
  %3323 = vmatpush.msra.mxu0 %v3322
  %v3324 = vand.u32 %v3202, 4294901760
  %v3325 = vsub.f32 %v3202, %v3324
  %v3326 = vand.u32 %v3325, 4294901760
  %3327 = vmatmul.f32.gmra.mxu0 %v3326
  %v3328 = vpop.f32.mrf.mxu0
  %v3329 = vadd.f32 %v3302, %v3328
  %3330 = vdwg.mxu0
  %3331 = vmatpush.msra.mxu0 0.0
  %3332 = vmatpush.msra.mxu0 0.0
  %3333 = vmatpush.msra.mxu0 0.0
  %3334 = vmatpush.msra.mxu0 0.0
  %3335 = vmatpush.msra.mxu0 0.0
  %3336 = vmatpush.msra.mxu0 0.0
  %3337 = vmatpush.msra.mxu0 0.0
  %3338 = vmatpush.msra.mxu0 0.0
  %3339 = vmatpush.msra.mxu0 0.0
  %3340 = vmatpush.msra.mxu0 0.0
  %3341 = vmatpush.msra.mxu0 0.0
  %3342 = vmatpush.msra.mxu0 0.0
  %v3343 = vand.u32 %v2153, 4294901760
  %v3344 = vsub.f32 %v2153, %v3343
  %v3345 = vand.u32 %v3344, 4294901760
  %3346 = vmatpush.msra.mxu0 %v3345
  %v3347 = vand.u32 %v2152, 4294901760
  %v3348 = vsub.f32 %v2152, %v3347
  %v3349 = vand.u32 %v3348, 4294901760
  %3350 = vmatpush.msra.mxu0 %v3349
  %v3351 = vand.u32 %v2151, 4294901760
  %v3352 = vsub.f32 %v2151, %v3351
  %v3353 = vand.u32 %v3352, 4294901760
  %3354 = vmatpush.msra.mxu0 %v3353
  %v3355 = vand.u32 %v2150, 4294901760
  %v3356 = vsub.f32 %v2150, %v3355
  %v3357 = vand.u32 %v3356, 4294901760
  %3358 = vmatpush.msra.mxu0 %v3357
  %v3359 = vand.u32 %v3202, 4294901760
  %3360 = vmatmul.f32.gmra.mxu0 %v3359
  %v3361 = vpop.f32.mrf.mxu0
  %v3362 = vadd.f32 %v3329, %v3361
  %3363 = vdwg.mxu0
  %3364 = vmatpush.msra.mxu0 0.0
  %3365 = vmatpush.msra.mxu0 0.0
  %3366 = vmatpush.msra.mxu0 0.0
  %3367 = vmatpush.msra.mxu0 0.0
  %3368 = vmatpush.msra.mxu0 0.0
  %3369 = vmatpush.msra.mxu0 0.0
  %3370 = vmatpush.msra.mxu0 0.0
  %3371 = vmatpush.msra.mxu0 0.0
  %3372 = vmatpush.msra.mxu0 0.0
  %3373 = vmatpush.msra.mxu0 0.0
  %3374 = vmatpush.msra.mxu0 0.0
  %3375 = vmatpush.msra.mxu0 0.0
  %v3376 = vand.u32 %v2153, 4294901760
  %3377 = vmatpush.msra.mxu0 %v3376
  %v3378 = vand.u32 %v2152, 4294901760
  %3379 = vmatpush.msra.mxu0 %v3378
  %v3380 = vand.u32 %v2151, 4294901760
  %3381 = vmatpush.msra.mxu0 %v3380
  %v3382 = vand.u32 %v2150, 4294901760
  %3383 = vmatpush.msra.mxu0 %v3382
  %v3384 = vand.u32 %v3202, 4294901760
  %3385 = vmatmul.f32.gmra.mxu0 %v3384
  %v3386 = vpop.f32.mrf.mxu0
  %v3387 = vadd.f32 %v3362, %v3386
  %3388 = vdwg.mxu0
  %v3389 = vadd.f32 %v2547, %v3387
  %v3390 = vmul.f32 %v3389, %v37
  %v3391 = vtanh.pop %v3390
  %v3392 = vadd.f32 %v3391, 1.0
  %v3393 = vmul.f32 %v3392, 0.5
  %v3394 = vsel %vm36, %v3391, %v3393
  %v3395 = vmul.f32 %v3394, %v3192
  %3397 = vrot.lane.b32.xlu0 %v3394, 64
  %v3398 = vpop.permute.xlu0 %3397
  %v3400 = vmul.f32 %v3394, %v3398
  %3402 = vrot.lane.b32.xlu0 %v3400, 32
  %v3403 = vpop.permute.xlu0 %3402
  %v3405 = vadd.f32 %v3395, %v3403
  %v3406 = vtanh.pop %v3405
  %3408 = vrot.lane.b32.xlu0 %v3406, 64
  %v3409 = vpop.permute.xlu0 %3408
  %v3411 = vmul.f32 %v3394, %v3409
  %3413 = vrot.lane.b32.xlu0 %v3411, 32
  %v3414 = vpop.permute.xlu0 %3413
  %v3415 = vsel %vm443, %v3414, 0
  %3417 = vmatpush.msra.mxu0 0.0
  %3418 = vmatpush.msra.mxu0 0.0
  %3419 = vmatpush.msra.mxu0 0.0
  %3420 = vmatpush.msra.mxu0 0.0
  %3421 = vmatpush.msra.mxu0 0.0
  %3422 = vmatpush.msra.mxu0 0.0
  %3423 = vmatpush.msra.mxu0 0.0
  %3424 = vmatpush.msra.mxu0 0.0
  %3425 = vmatpush.msra.mxu0 0.0
  %3426 = vmatpush.msra.mxu0 0.0
  %3427 = vmatpush.msra.mxu0 0.0
  %3428 = vmatpush.msra.mxu0 0.0
  %v3429 = vand.u32 %v2153, 4294901760
  %3430 = vmatpush.msra.mxu0 %v3429
  %v3431 = vand.u32 %v2152, 4294901760
  %3432 = vmatpush.msra.mxu0 %v3431
  %v3433 = vand.u32 %v2151, 4294901760
  %3434 = vmatpush.msra.mxu0 %v3433
  %v3435 = vand.u32 %v2150, 4294901760
  %3436 = vmatpush.msra.mxu0 %v3435
  %v3437 = vand.u32 %v3415, 4294901760
  %v3438 = vsub.f32 %v3415, %v3437
  %v3439 = vand.u32 %v3438, 4294901760
  %v3440 = vsub.f32 %v3438, %v3439
  %v3441 = vand.u32 %v3440, 4294901760
  %3442 = vmatmul.f32.gmra.mxu0 %v3441
  %v3443 = vpop.f32.mrf.mxu0
  %v3444 = vadd.f32 0.0, %v3443
  %3445 = vdwg.mxu0
  %3446 = vmatpush.msra.mxu0 0.0
  %3447 = vmatpush.msra.mxu0 0.0
  %3448 = vmatpush.msra.mxu0 0.0
  %3449 = vmatpush.msra.mxu0 0.0
  %3450 = vmatpush.msra.mxu0 0.0
  %3451 = vmatpush.msra.mxu0 0.0
  %3452 = vmatpush.msra.mxu0 0.0
  %3453 = vmatpush.msra.mxu0 0.0
  %3454 = vmatpush.msra.mxu0 0.0
  %3455 = vmatpush.msra.mxu0 0.0
  %3456 = vmatpush.msra.mxu0 0.0
  %3457 = vmatpush.msra.mxu0 0.0
  %v3458 = vand.u32 %v2153, 4294901760
  %v3459 = vsub.f32 %v2153, %v3458
  %v3460 = vand.u32 %v3459, 4294901760
  %v3461 = vsub.f32 %v3459, %v3460
  %v3462 = vand.u32 %v3461, 4294901760
  %3463 = vmatpush.msra.mxu0 %v3462
  %v3464 = vand.u32 %v2152, 4294901760
  %v3465 = vsub.f32 %v2152, %v3464
  %v3466 = vand.u32 %v3465, 4294901760
  %v3467 = vsub.f32 %v3465, %v3466
  %v3468 = vand.u32 %v3467, 4294901760
  %3469 = vmatpush.msra.mxu0 %v3468
  %v3470 = vand.u32 %v2151, 4294901760
  %v3471 = vsub.f32 %v2151, %v3470
  %v3472 = vand.u32 %v3471, 4294901760
  %v3473 = vsub.f32 %v3471, %v3472
  %v3474 = vand.u32 %v3473, 4294901760
  %3475 = vmatpush.msra.mxu0 %v3474
  %v3476 = vand.u32 %v2150, 4294901760
  %v3477 = vsub.f32 %v2150, %v3476
  %v3478 = vand.u32 %v3477, 4294901760
  %v3479 = vsub.f32 %v3477, %v3478
  %v3480 = vand.u32 %v3479, 4294901760
  %3481 = vmatpush.msra.mxu0 %v3480
  %v3482 = vand.u32 %v3415, 4294901760
  %3483 = vmatmul.f32.gmra.mxu0 %v3482
  %v3484 = vpop.f32.mrf.mxu0
  %v3485 = vadd.f32 %v3444, %v3484
  %3486 = vdwg.mxu0
  %3487 = vmatpush.msra.mxu0 0.0
  %3488 = vmatpush.msra.mxu0 0.0
  %3489 = vmatpush.msra.mxu0 0.0
  %3490 = vmatpush.msra.mxu0 0.0
  %3491 = vmatpush.msra.mxu0 0.0
  %3492 = vmatpush.msra.mxu0 0.0
  %3493 = vmatpush.msra.mxu0 0.0
  %3494 = vmatpush.msra.mxu0 0.0
  %3495 = vmatpush.msra.mxu0 0.0
  %3496 = vmatpush.msra.mxu0 0.0
  %3497 = vmatpush.msra.mxu0 0.0
  %3498 = vmatpush.msra.mxu0 0.0
  %v3499 = vand.u32 %v2153, 4294901760
  %v3500 = vsub.f32 %v2153, %v3499
  %3501 = vmatpush.msra.mxu0 %v3500
  %v3502 = vand.u32 %v2152, 4294901760
  %v3503 = vsub.f32 %v2152, %v3502
  %3504 = vmatpush.msra.mxu0 %v3503
  %v3505 = vand.u32 %v2151, 4294901760
  %v3506 = vsub.f32 %v2151, %v3505
  %3507 = vmatpush.msra.mxu0 %v3506
  %v3508 = vand.u32 %v2150, 4294901760
  %v3509 = vsub.f32 %v2150, %v3508
  %3510 = vmatpush.msra.mxu0 %v3509
  %v3511 = vand.u32 %v3415, 4294901760
  %v3512 = vsub.f32 %v3415, %v3511
  %3513 = vmatmul.f32.gmra.mxu0 %v3512
  %v3514 = vpop.f32.mrf.mxu0
  %v3515 = vadd.f32 %v3485, %v3514
  %3516 = vdwg.mxu0
  %3517 = vmatpush.msra.mxu0 0.0
  %3518 = vmatpush.msra.mxu0 0.0
  %3519 = vmatpush.msra.mxu0 0.0
  %3520 = vmatpush.msra.mxu0 0.0
  %3521 = vmatpush.msra.mxu0 0.0
  %3522 = vmatpush.msra.mxu0 0.0
  %3523 = vmatpush.msra.mxu0 0.0
  %3524 = vmatpush.msra.mxu0 0.0
  %3525 = vmatpush.msra.mxu0 0.0
  %3526 = vmatpush.msra.mxu0 0.0
  %3527 = vmatpush.msra.mxu0 0.0
  %3528 = vmatpush.msra.mxu0 0.0
  %v3529 = vand.u32 %v2153, 4294901760
  %3530 = vmatpush.msra.mxu0 %v3529
  %v3531 = vand.u32 %v2152, 4294901760
  %3532 = vmatpush.msra.mxu0 %v3531
  %v3533 = vand.u32 %v2151, 4294901760
  %3534 = vmatpush.msra.mxu0 %v3533
  %v3535 = vand.u32 %v2150, 4294901760
  %3536 = vmatpush.msra.mxu0 %v3535
  %v3537 = vand.u32 %v3415, 4294901760
  %v3538 = vsub.f32 %v3415, %v3537
  %v3539 = vand.u32 %v3538, 4294901760
  %3540 = vmatmul.f32.gmra.mxu0 %v3539
  %v3541 = vpop.f32.mrf.mxu0
  %v3542 = vadd.f32 %v3515, %v3541
  %3543 = vdwg.mxu0
  %3544 = vmatpush.msra.mxu0 0.0
  %3545 = vmatpush.msra.mxu0 0.0
  %3546 = vmatpush.msra.mxu0 0.0
  %3547 = vmatpush.msra.mxu0 0.0
  %3548 = vmatpush.msra.mxu0 0.0
  %3549 = vmatpush.msra.mxu0 0.0
  %3550 = vmatpush.msra.mxu0 0.0
  %3551 = vmatpush.msra.mxu0 0.0
  %3552 = vmatpush.msra.mxu0 0.0
  %3553 = vmatpush.msra.mxu0 0.0
  %3554 = vmatpush.msra.mxu0 0.0
  %3555 = vmatpush.msra.mxu0 0.0
  %v3556 = vand.u32 %v2153, 4294901760
  %v3557 = vsub.f32 %v2153, %v3556
  %v3558 = vand.u32 %v3557, 4294901760
  %3559 = vmatpush.msra.mxu0 %v3558
  %v3560 = vand.u32 %v2152, 4294901760
  %v3561 = vsub.f32 %v2152, %v3560
  %v3562 = vand.u32 %v3561, 4294901760
  %3563 = vmatpush.msra.mxu0 %v3562
  %v3564 = vand.u32 %v2151, 4294901760
  %v3565 = vsub.f32 %v2151, %v3564
  %v3566 = vand.u32 %v3565, 4294901760
  %3567 = vmatpush.msra.mxu0 %v3566
  %v3568 = vand.u32 %v2150, 4294901760
  %v3569 = vsub.f32 %v2150, %v3568
  %v3570 = vand.u32 %v3569, 4294901760
  %3571 = vmatpush.msra.mxu0 %v3570
  %v3572 = vand.u32 %v3415, 4294901760
  %3573 = vmatmul.f32.gmra.mxu0 %v3572
  %v3574 = vpop.f32.mrf.mxu0
  %v3575 = vadd.f32 %v3542, %v3574
  %3576 = vdwg.mxu0
  %3577 = vmatpush.msra.mxu0 0.0
  %3578 = vmatpush.msra.mxu0 0.0
  %3579 = vmatpush.msra.mxu0 0.0
  %3580 = vmatpush.msra.mxu0 0.0
  %3581 = vmatpush.msra.mxu0 0.0
  %3582 = vmatpush.msra.mxu0 0.0
  %3583 = vmatpush.msra.mxu0 0.0
  %3584 = vmatpush.msra.mxu0 0.0
  %3585 = vmatpush.msra.mxu0 0.0
  %3586 = vmatpush.msra.mxu0 0.0
  %3587 = vmatpush.msra.mxu0 0.0
  %3588 = vmatpush.msra.mxu0 0.0
  %v3589 = vand.u32 %v2153, 4294901760
  %3590 = vmatpush.msra.mxu0 %v3589
  %v3591 = vand.u32 %v2152, 4294901760
  %3592 = vmatpush.msra.mxu0 %v3591
  %v3593 = vand.u32 %v2151, 4294901760
  %3594 = vmatpush.msra.mxu0 %v3593
  %v3595 = vand.u32 %v2150, 4294901760
  %3596 = vmatpush.msra.mxu0 %v3595
  %v3597 = vand.u32 %v3415, 4294901760
  %3598 = vmatmul.f32.gmra.mxu0 %v3597
  %v3599 = vpop.f32.mrf.mxu0
  %v3600 = vadd.f32 %v3575, %v3599
  %3601 = vdwg.mxu0
  %v3602 = vadd.f32 %v2551, %v3600
  %v3603 = vmul.f32 %v3602, %v37
  %v3604 = vtanh.pop %v3603
  %v3605 = vadd.f32 %v3604, 1.0
  %v3606 = vmul.f32 %v3605, 0.5
  %v3607 = vsel %vm36, %v3604, %v3606
  %v3608 = vmul.f32 %v3607, %v3405
  %3610 = vrot.lane.b32.xlu0 %v3607, 64
  %v3611 = vpop.permute.xlu0 %3610
  %v3613 = vmul.f32 %v3607, %v3611
  %3615 = vrot.lane.b32.xlu0 %v3613, 32
  %v3616 = vpop.permute.xlu0 %3615
  %v3618 = vadd.f32 %v3608, %v3616
  %v3619 = vtanh.pop %v3618
  %3621 = vrot.lane.b32.xlu0 %v3619, 64
  %v3622 = vpop.permute.xlu0 %3621
  %v3624 = vmul.f32 %v3607, %v3622
  %3626 = vrot.lane.b32.xlu0 %v3624, 32
  %v3627 = vpop.permute.xlu0 %3626
  %v3628 = vsel %vm443, %v3627, 0
  %3630 = vmatpush.msra.mxu0 0.0
  %3631 = vmatpush.msra.mxu0 0.0
  %3632 = vmatpush.msra.mxu0 0.0
  %3633 = vmatpush.msra.mxu0 0.0
  %3634 = vmatpush.msra.mxu0 0.0
  %3635 = vmatpush.msra.mxu0 0.0
  %3636 = vmatpush.msra.mxu0 0.0
  %3637 = vmatpush.msra.mxu0 0.0
  %3638 = vmatpush.msra.mxu0 0.0
  %3639 = vmatpush.msra.mxu0 0.0
  %3640 = vmatpush.msra.mxu0 0.0
  %3641 = vmatpush.msra.mxu0 0.0
  %v3642 = vand.u32 %v2153, 4294901760
  %3643 = vmatpush.msra.mxu0 %v3642
  %v3644 = vand.u32 %v2152, 4294901760
  %3645 = vmatpush.msra.mxu0 %v3644
  %v3646 = vand.u32 %v2151, 4294901760
  %3647 = vmatpush.msra.mxu0 %v3646
  %v3648 = vand.u32 %v2150, 4294901760
  %3649 = vmatpush.msra.mxu0 %v3648
  %v3650 = vand.u32 %v3628, 4294901760
  %v3651 = vsub.f32 %v3628, %v3650
  %v3652 = vand.u32 %v3651, 4294901760
  %v3653 = vsub.f32 %v3651, %v3652
  %v3654 = vand.u32 %v3653, 4294901760
  %3655 = vmatmul.f32.gmra.mxu0 %v3654
  %v3656 = vpop.f32.mrf.mxu0
  %v3657 = vadd.f32 0.0, %v3656
  %3658 = vdwg.mxu0
  %3659 = vmatpush.msra.mxu0 0.0
  %3660 = vmatpush.msra.mxu0 0.0
  %3661 = vmatpush.msra.mxu0 0.0
  %3662 = vmatpush.msra.mxu0 0.0
  %3663 = vmatpush.msra.mxu0 0.0
  %3664 = vmatpush.msra.mxu0 0.0
  %3665 = vmatpush.msra.mxu0 0.0
  %3666 = vmatpush.msra.mxu0 0.0
  %3667 = vmatpush.msra.mxu0 0.0
  %3668 = vmatpush.msra.mxu0 0.0
  %3669 = vmatpush.msra.mxu0 0.0
  %3670 = vmatpush.msra.mxu0 0.0
  %v3671 = vand.u32 %v2153, 4294901760
  %v3672 = vsub.f32 %v2153, %v3671
  %v3673 = vand.u32 %v3672, 4294901760
  %v3674 = vsub.f32 %v3672, %v3673
  %v3675 = vand.u32 %v3674, 4294901760
  %3676 = vmatpush.msra.mxu0 %v3675
  %v3677 = vand.u32 %v2152, 4294901760
  %v3678 = vsub.f32 %v2152, %v3677
  %v3679 = vand.u32 %v3678, 4294901760
  %v3680 = vsub.f32 %v3678, %v3679
  %v3681 = vand.u32 %v3680, 4294901760
  %3682 = vmatpush.msra.mxu0 %v3681
  %v3683 = vand.u32 %v2151, 4294901760
  %v3684 = vsub.f32 %v2151, %v3683
  %v3685 = vand.u32 %v3684, 4294901760
  %v3686 = vsub.f32 %v3684, %v3685
  %v3687 = vand.u32 %v3686, 4294901760
  %3688 = vmatpush.msra.mxu0 %v3687
  %v3689 = vand.u32 %v2150, 4294901760
  %v3690 = vsub.f32 %v2150, %v3689
  %v3691 = vand.u32 %v3690, 4294901760
  %v3692 = vsub.f32 %v3690, %v3691
  %v3693 = vand.u32 %v3692, 4294901760
  %3694 = vmatpush.msra.mxu0 %v3693
  %v3695 = vand.u32 %v3628, 4294901760
  %3696 = vmatmul.f32.gmra.mxu0 %v3695
  %v3697 = vpop.f32.mrf.mxu0
  %v3698 = vadd.f32 %v3657, %v3697
  %3699 = vdwg.mxu0
  %3700 = vmatpush.msra.mxu0 0.0
  %3701 = vmatpush.msra.mxu0 0.0
  %3702 = vmatpush.msra.mxu0 0.0
  %3703 = vmatpush.msra.mxu0 0.0
  %3704 = vmatpush.msra.mxu0 0.0
  %3705 = vmatpush.msra.mxu0 0.0
  %3706 = vmatpush.msra.mxu0 0.0
  %3707 = vmatpush.msra.mxu0 0.0
  %3708 = vmatpush.msra.mxu0 0.0
  %3709 = vmatpush.msra.mxu0 0.0
  %3710 = vmatpush.msra.mxu0 0.0
  %3711 = vmatpush.msra.mxu0 0.0
  %v3712 = vand.u32 %v2153, 4294901760
  %v3713 = vsub.f32 %v2153, %v3712
  %3714 = vmatpush.msra.mxu0 %v3713
  %v3715 = vand.u32 %v2152, 4294901760
  %v3716 = vsub.f32 %v2152, %v3715
  %3717 = vmatpush.msra.mxu0 %v3716
  %v3718 = vand.u32 %v2151, 4294901760
  %v3719 = vsub.f32 %v2151, %v3718
  %3720 = vmatpush.msra.mxu0 %v3719
  %v3721 = vand.u32 %v2150, 4294901760
  %v3722 = vsub.f32 %v2150, %v3721
  %3723 = vmatpush.msra.mxu0 %v3722
  %v3724 = vand.u32 %v3628, 4294901760
  %v3725 = vsub.f32 %v3628, %v3724
  %3726 = vmatmul.f32.gmra.mxu0 %v3725
  %v3727 = vpop.f32.mrf.mxu0
  %v3728 = vadd.f32 %v3698, %v3727
  %3729 = vdwg.mxu0
  %3730 = vmatpush.msra.mxu0 0.0
  %3731 = vmatpush.msra.mxu0 0.0
  %3732 = vmatpush.msra.mxu0 0.0
  %3733 = vmatpush.msra.mxu0 0.0
  %3734 = vmatpush.msra.mxu0 0.0
  %3735 = vmatpush.msra.mxu0 0.0
  %3736 = vmatpush.msra.mxu0 0.0
  %3737 = vmatpush.msra.mxu0 0.0
  %3738 = vmatpush.msra.mxu0 0.0
  %3739 = vmatpush.msra.mxu0 0.0
  %3740 = vmatpush.msra.mxu0 0.0
  %3741 = vmatpush.msra.mxu0 0.0
  %v3742 = vand.u32 %v2153, 4294901760
  %3743 = vmatpush.msra.mxu0 %v3742
  %v3744 = vand.u32 %v2152, 4294901760
  %3745 = vmatpush.msra.mxu0 %v3744
  %v3746 = vand.u32 %v2151, 4294901760
  %3747 = vmatpush.msra.mxu0 %v3746
  %v3748 = vand.u32 %v2150, 4294901760
  %3749 = vmatpush.msra.mxu0 %v3748
  %v3750 = vand.u32 %v3628, 4294901760
  %v3751 = vsub.f32 %v3628, %v3750
  %v3752 = vand.u32 %v3751, 4294901760
  %3753 = vmatmul.f32.gmra.mxu0 %v3752
  %v3754 = vpop.f32.mrf.mxu0
  %v3755 = vadd.f32 %v3728, %v3754
  %3756 = vdwg.mxu0
  %3757 = vmatpush.msra.mxu0 0.0
  %3758 = vmatpush.msra.mxu0 0.0
  %3759 = vmatpush.msra.mxu0 0.0
  %3760 = vmatpush.msra.mxu0 0.0
  %3761 = vmatpush.msra.mxu0 0.0
  %3762 = vmatpush.msra.mxu0 0.0
  %3763 = vmatpush.msra.mxu0 0.0
  %3764 = vmatpush.msra.mxu0 0.0
  %3765 = vmatpush.msra.mxu0 0.0
  %3766 = vmatpush.msra.mxu0 0.0
  %3767 = vmatpush.msra.mxu0 0.0
  %3768 = vmatpush.msra.mxu0 0.0
  %v3769 = vand.u32 %v2153, 4294901760
  %v3770 = vsub.f32 %v2153, %v3769
  %v3771 = vand.u32 %v3770, 4294901760
  %3772 = vmatpush.msra.mxu0 %v3771
  %v3773 = vand.u32 %v2152, 4294901760
  %v3774 = vsub.f32 %v2152, %v3773
  %v3775 = vand.u32 %v3774, 4294901760
  %3776 = vmatpush.msra.mxu0 %v3775
  %v3777 = vand.u32 %v2151, 4294901760
  %v3778 = vsub.f32 %v2151, %v3777
  %v3779 = vand.u32 %v3778, 4294901760
  %3780 = vmatpush.msra.mxu0 %v3779
  %v3781 = vand.u32 %v2150, 4294901760
  %v3782 = vsub.f32 %v2150, %v3781
  %v3783 = vand.u32 %v3782, 4294901760
  %3784 = vmatpush.msra.mxu0 %v3783
  %v3785 = vand.u32 %v3628, 4294901760
  %3786 = vmatmul.f32.gmra.mxu0 %v3785
  %v3787 = vpop.f32.mrf.mxu0
  %v3788 = vadd.f32 %v3755, %v3787
  %3789 = vdwg.mxu0
  %3790 = vmatpush.msra.mxu0 0.0
  %3791 = vmatpush.msra.mxu0 0.0
  %3792 = vmatpush.msra.mxu0 0.0
  %3793 = vmatpush.msra.mxu0 0.0
  %3794 = vmatpush.msra.mxu0 0.0
  %3795 = vmatpush.msra.mxu0 0.0
  %3796 = vmatpush.msra.mxu0 0.0
  %3797 = vmatpush.msra.mxu0 0.0
  %3798 = vmatpush.msra.mxu0 0.0
  %3799 = vmatpush.msra.mxu0 0.0
  %3800 = vmatpush.msra.mxu0 0.0
  %3801 = vmatpush.msra.mxu0 0.0
  %v3802 = vand.u32 %v2153, 4294901760
  %3803 = vmatpush.msra.mxu0 %v3802
  %v3804 = vand.u32 %v2152, 4294901760
  %3805 = vmatpush.msra.mxu0 %v3804
  %v3806 = vand.u32 %v2151, 4294901760
  %3807 = vmatpush.msra.mxu0 %v3806
  %v3808 = vand.u32 %v2150, 4294901760
  %3809 = vmatpush.msra.mxu0 %v3808
  %v3810 = vand.u32 %v3628, 4294901760
  %3811 = vmatmul.f32.gmra.mxu0 %v3810
  %v3812 = vpop.f32.mrf.mxu0
  %v3813 = vadd.f32 %v3788, %v3812
  %3814 = vdwg.mxu0
  %v3815 = vadd.f32 %v2555, %v3813
  %v3816 = vmul.f32 %v3815, %v37
  %v3817 = vtanh.pop %v3816
  %v3818 = vadd.f32 %v3817, 1.0
  %v3819 = vmul.f32 %v3818, 0.5
  %v3820 = vsel %vm36, %v3817, %v3819
  %v3821 = vmul.f32 %v3820, %v3618
  %3823 = vrot.lane.b32.xlu0 %v3820, 64
  %v3824 = vpop.permute.xlu0 %3823
  %v3826 = vmul.f32 %v3820, %v3824
  %3828 = vrot.lane.b32.xlu0 %v3826, 32
  %v3829 = vpop.permute.xlu0 %3828
  %v3831 = vadd.f32 %v3821, %v3829
  %v3832 = vtanh.pop %v3831
  %3834 = vrot.lane.b32.xlu0 %v3832, 64
  %v3835 = vpop.permute.xlu0 %3834
  %v3837 = vmul.f32 %v3820, %v3835
  %3839 = vrot.lane.b32.xlu0 %v3837, 32
  %v3840 = vpop.permute.xlu0 %3839
  %v3841 = vsel %vm443, %v3840, 0
  %3843 = vmatpush.msra.mxu0 0.0
  %3844 = vmatpush.msra.mxu0 0.0
  %3845 = vmatpush.msra.mxu0 0.0
  %3846 = vmatpush.msra.mxu0 0.0
  %3847 = vmatpush.msra.mxu0 0.0
  %3848 = vmatpush.msra.mxu0 0.0
  %3849 = vmatpush.msra.mxu0 0.0
  %3850 = vmatpush.msra.mxu0 0.0
  %3851 = vmatpush.msra.mxu0 0.0
  %3852 = vmatpush.msra.mxu0 0.0
  %3853 = vmatpush.msra.mxu0 0.0
  %3854 = vmatpush.msra.mxu0 0.0
  %v3855 = vand.u32 %v2153, 4294901760
  %3856 = vmatpush.msra.mxu0 %v3855
  %v3857 = vand.u32 %v2152, 4294901760
  %3858 = vmatpush.msra.mxu0 %v3857
  %v3859 = vand.u32 %v2151, 4294901760
  %3860 = vmatpush.msra.mxu0 %v3859
  %v3861 = vand.u32 %v2150, 4294901760
  %3862 = vmatpush.msra.mxu0 %v3861
  %v3863 = vand.u32 %v3841, 4294901760
  %v3864 = vsub.f32 %v3841, %v3863
  %v3865 = vand.u32 %v3864, 4294901760
  %v3866 = vsub.f32 %v3864, %v3865
  %v3867 = vand.u32 %v3866, 4294901760
  %3868 = vmatmul.f32.gmra.mxu0 %v3867
  %v3869 = vpop.f32.mrf.mxu0
  %v3870 = vadd.f32 0.0, %v3869
  %3871 = vdwg.mxu0
  %3872 = vmatpush.msra.mxu0 0.0
  %3873 = vmatpush.msra.mxu0 0.0
  %3874 = vmatpush.msra.mxu0 0.0
  %3875 = vmatpush.msra.mxu0 0.0
  %3876 = vmatpush.msra.mxu0 0.0
  %3877 = vmatpush.msra.mxu0 0.0
  %3878 = vmatpush.msra.mxu0 0.0
  %3879 = vmatpush.msra.mxu0 0.0
  %3880 = vmatpush.msra.mxu0 0.0
  %3881 = vmatpush.msra.mxu0 0.0
  %3882 = vmatpush.msra.mxu0 0.0
  %3883 = vmatpush.msra.mxu0 0.0
  %v3884 = vand.u32 %v2153, 4294901760
  %v3885 = vsub.f32 %v2153, %v3884
  %v3886 = vand.u32 %v3885, 4294901760
  %v3887 = vsub.f32 %v3885, %v3886
  %v3888 = vand.u32 %v3887, 4294901760
  %3889 = vmatpush.msra.mxu0 %v3888
  %v3890 = vand.u32 %v2152, 4294901760
  %v3891 = vsub.f32 %v2152, %v3890
  %v3892 = vand.u32 %v3891, 4294901760
  %v3893 = vsub.f32 %v3891, %v3892
  %v3894 = vand.u32 %v3893, 4294901760
  %3895 = vmatpush.msra.mxu0 %v3894
  %v3896 = vand.u32 %v2151, 4294901760
  %v3897 = vsub.f32 %v2151, %v3896
  %v3898 = vand.u32 %v3897, 4294901760
  %v3899 = vsub.f32 %v3897, %v3898
  %v3900 = vand.u32 %v3899, 4294901760
  %3901 = vmatpush.msra.mxu0 %v3900
  %v3902 = vand.u32 %v2150, 4294901760
  %v3903 = vsub.f32 %v2150, %v3902
  %v3904 = vand.u32 %v3903, 4294901760
  %v3905 = vsub.f32 %v3903, %v3904
  %v3906 = vand.u32 %v3905, 4294901760
  %3907 = vmatpush.msra.mxu0 %v3906
  %v3908 = vand.u32 %v3841, 4294901760
  %3909 = vmatmul.f32.gmra.mxu0 %v3908
  %v3910 = vpop.f32.mrf.mxu0
  %v3911 = vadd.f32 %v3870, %v3910
  %3912 = vdwg.mxu0
  %3913 = vmatpush.msra.mxu0 0.0
  %3914 = vmatpush.msra.mxu0 0.0
  %3915 = vmatpush.msra.mxu0 0.0
  %3916 = vmatpush.msra.mxu0 0.0
  %3917 = vmatpush.msra.mxu0 0.0
  %3918 = vmatpush.msra.mxu0 0.0
  %3919 = vmatpush.msra.mxu0 0.0
  %3920 = vmatpush.msra.mxu0 0.0
  %3921 = vmatpush.msra.mxu0 0.0
  %3922 = vmatpush.msra.mxu0 0.0
  %3923 = vmatpush.msra.mxu0 0.0
  %3924 = vmatpush.msra.mxu0 0.0
  %v3925 = vand.u32 %v2153, 4294901760
  %v3926 = vsub.f32 %v2153, %v3925
  %3927 = vmatpush.msra.mxu0 %v3926
  %v3928 = vand.u32 %v2152, 4294901760
  %v3929 = vsub.f32 %v2152, %v3928
  %3930 = vmatpush.msra.mxu0 %v3929
  %v3931 = vand.u32 %v2151, 4294901760
  %v3932 = vsub.f32 %v2151, %v3931
  %3933 = vmatpush.msra.mxu0 %v3932
  %v3934 = vand.u32 %v2150, 4294901760
  %v3935 = vsub.f32 %v2150, %v3934
  %3936 = vmatpush.msra.mxu0 %v3935
  %v3937 = vand.u32 %v3841, 4294901760
  %v3938 = vsub.f32 %v3841, %v3937
  %3939 = vmatmul.f32.gmra.mxu0 %v3938
  %v3940 = vpop.f32.mrf.mxu0
  %v3941 = vadd.f32 %v3911, %v3940
  %3942 = vdwg.mxu0
  %3943 = vmatpush.msra.mxu0 0.0
  %3944 = vmatpush.msra.mxu0 0.0
  %3945 = vmatpush.msra.mxu0 0.0
  %3946 = vmatpush.msra.mxu0 0.0
  %3947 = vmatpush.msra.mxu0 0.0
  %3948 = vmatpush.msra.mxu0 0.0
  %3949 = vmatpush.msra.mxu0 0.0
  %3950 = vmatpush.msra.mxu0 0.0
  %3951 = vmatpush.msra.mxu0 0.0
  %3952 = vmatpush.msra.mxu0 0.0
  %3953 = vmatpush.msra.mxu0 0.0
  %3954 = vmatpush.msra.mxu0 0.0
  %v3955 = vand.u32 %v2153, 4294901760
  %3956 = vmatpush.msra.mxu0 %v3955
  %v3957 = vand.u32 %v2152, 4294901760
  %3958 = vmatpush.msra.mxu0 %v3957
  %v3959 = vand.u32 %v2151, 4294901760
  %3960 = vmatpush.msra.mxu0 %v3959
  %v3961 = vand.u32 %v2150, 4294901760
  %3962 = vmatpush.msra.mxu0 %v3961
  %v3963 = vand.u32 %v3841, 4294901760
  %v3964 = vsub.f32 %v3841, %v3963
  %v3965 = vand.u32 %v3964, 4294901760
  %3966 = vmatmul.f32.gmra.mxu0 %v3965
  %v3967 = vpop.f32.mrf.mxu0
  %v3968 = vadd.f32 %v3941, %v3967
  %3969 = vdwg.mxu0
  %3970 = vmatpush.msra.mxu0 0.0
  %3971 = vmatpush.msra.mxu0 0.0
  %3972 = vmatpush.msra.mxu0 0.0
  %3973 = vmatpush.msra.mxu0 0.0
  %3974 = vmatpush.msra.mxu0 0.0
  %3975 = vmatpush.msra.mxu0 0.0
  %3976 = vmatpush.msra.mxu0 0.0
  %3977 = vmatpush.msra.mxu0 0.0
  %3978 = vmatpush.msra.mxu0 0.0
  %3979 = vmatpush.msra.mxu0 0.0
  %3980 = vmatpush.msra.mxu0 0.0
  %3981 = vmatpush.msra.mxu0 0.0
  %v3982 = vand.u32 %v2153, 4294901760
  %v3983 = vsub.f32 %v2153, %v3982
  %v3984 = vand.u32 %v3983, 4294901760
  %3985 = vmatpush.msra.mxu0 %v3984
  %v3986 = vand.u32 %v2152, 4294901760
  %v3987 = vsub.f32 %v2152, %v3986
  %v3988 = vand.u32 %v3987, 4294901760
  %3989 = vmatpush.msra.mxu0 %v3988
  %v3990 = vand.u32 %v2151, 4294901760
  %v3991 = vsub.f32 %v2151, %v3990
  %v3992 = vand.u32 %v3991, 4294901760
  %3993 = vmatpush.msra.mxu0 %v3992
  %v3994 = vand.u32 %v2150, 4294901760
  %v3995 = vsub.f32 %v2150, %v3994
  %v3996 = vand.u32 %v3995, 4294901760
  %3997 = vmatpush.msra.mxu0 %v3996
  %v3998 = vand.u32 %v3841, 4294901760
  %3999 = vmatmul.f32.gmra.mxu0 %v3998
  %v4000 = vpop.f32.mrf.mxu0
  %v4001 = vadd.f32 %v3968, %v4000
  %4002 = vdwg.mxu0
  %4003 = vmatpush.msra.mxu0 0.0
  %4004 = vmatpush.msra.mxu0 0.0
  %4005 = vmatpush.msra.mxu0 0.0
  %4006 = vmatpush.msra.mxu0 0.0
  %4007 = vmatpush.msra.mxu0 0.0
  %4008 = vmatpush.msra.mxu0 0.0
  %4009 = vmatpush.msra.mxu0 0.0
  %4010 = vmatpush.msra.mxu0 0.0
  %4011 = vmatpush.msra.mxu0 0.0
  %4012 = vmatpush.msra.mxu0 0.0
  %4013 = vmatpush.msra.mxu0 0.0
  %4014 = vmatpush.msra.mxu0 0.0
  %v4015 = vand.u32 %v2153, 4294901760
  %4016 = vmatpush.msra.mxu0 %v4015
  %v4017 = vand.u32 %v2152, 4294901760
  %4018 = vmatpush.msra.mxu0 %v4017
  %v4019 = vand.u32 %v2151, 4294901760
  %4020 = vmatpush.msra.mxu0 %v4019
  %v4021 = vand.u32 %v2150, 4294901760
  %4022 = vmatpush.msra.mxu0 %v4021
  %v4023 = vand.u32 %v3841, 4294901760
  %4024 = vmatmul.f32.gmra.mxu0 %v4023
  %v4025 = vpop.f32.mrf.mxu0
  %v4026 = vadd.f32 %v4001, %v4025
  %4027 = vdwg.mxu0
  %v4028 = vadd.f32 %v2559, %v4026
  %v4029 = vmul.f32 %v4028, %v37
  %v4030 = vtanh.pop %v4029
  %v4031 = vadd.f32 %v4030, 1.0
  %v4032 = vmul.f32 %v4031, 0.5
  %v4033 = vsel %vm36, %v4030, %v4032
  %v4034 = vmul.f32 %v4033, %v3831
  %4036 = vrot.lane.b32.xlu0 %v4033, 64
  %v4037 = vpop.permute.xlu0 %4036
  %v4039 = vmul.f32 %v4033, %v4037
  %4041 = vrot.lane.b32.xlu0 %v4039, 32
  %v4042 = vpop.permute.xlu0 %4041
  %v4044 = vadd.f32 %v4034, %v4042
  %v4045 = vtanh.pop %v4044
  %4047 = vrot.lane.b32.xlu0 %v4045, 64
  %v4048 = vpop.permute.xlu0 %4047
  %v4050 = vmul.f32 %v4033, %v4048
  %4052 = vrot.lane.b32.xlu0 %v4050, 32
  %v4053 = vpop.permute.xlu0 %4052
  %v4054 = vsel %vm443, %v4053, 0
  %4056 = vmatpush.msra.mxu0 0.0
  %4057 = vmatpush.msra.mxu0 0.0
  %4058 = vmatpush.msra.mxu0 0.0
  %4059 = vmatpush.msra.mxu0 0.0
  %4060 = vmatpush.msra.mxu0 0.0
  %4061 = vmatpush.msra.mxu0 0.0
  %4062 = vmatpush.msra.mxu0 0.0
  %4063 = vmatpush.msra.mxu0 0.0
  %4064 = vmatpush.msra.mxu0 0.0
  %4065 = vmatpush.msra.mxu0 0.0
  %4066 = vmatpush.msra.mxu0 0.0
  %4067 = vmatpush.msra.mxu0 0.0
  %v4068 = vand.u32 %v2153, 4294901760
  %4069 = vmatpush.msra.mxu0 %v4068
  %v4070 = vand.u32 %v2152, 4294901760
  %4071 = vmatpush.msra.mxu0 %v4070
  %v4072 = vand.u32 %v2151, 4294901760
  %4073 = vmatpush.msra.mxu0 %v4072
  %v4074 = vand.u32 %v2150, 4294901760
  %4075 = vmatpush.msra.mxu0 %v4074
  %v4076 = vand.u32 %v4054, 4294901760
  %v4077 = vsub.f32 %v4054, %v4076
  %v4078 = vand.u32 %v4077, 4294901760
  %v4079 = vsub.f32 %v4077, %v4078
  %v4080 = vand.u32 %v4079, 4294901760
  %4081 = vmatmul.f32.gmra.mxu0 %v4080
  %v4082 = vpop.f32.mrf.mxu0
  %v4083 = vadd.f32 0.0, %v4082
  %4084 = vdwg.mxu0
  %4085 = vmatpush.msra.mxu0 0.0
  %4086 = vmatpush.msra.mxu0 0.0
  %4087 = vmatpush.msra.mxu0 0.0
  %4088 = vmatpush.msra.mxu0 0.0
  %4089 = vmatpush.msra.mxu0 0.0
  %4090 = vmatpush.msra.mxu0 0.0
  %4091 = vmatpush.msra.mxu0 0.0
  %4092 = vmatpush.msra.mxu0 0.0
  %4093 = vmatpush.msra.mxu0 0.0
  %4094 = vmatpush.msra.mxu0 0.0
  %4095 = vmatpush.msra.mxu0 0.0
  %4096 = vmatpush.msra.mxu0 0.0
  %v4097 = vand.u32 %v2153, 4294901760
  %v4098 = vsub.f32 %v2153, %v4097
  %v4099 = vand.u32 %v4098, 4294901760
  %v4100 = vsub.f32 %v4098, %v4099
  %v4101 = vand.u32 %v4100, 4294901760
  %4102 = vmatpush.msra.mxu0 %v4101
  %v4103 = vand.u32 %v2152, 4294901760
  %v4104 = vsub.f32 %v2152, %v4103
  %v4105 = vand.u32 %v4104, 4294901760
  %v4106 = vsub.f32 %v4104, %v4105
  %v4107 = vand.u32 %v4106, 4294901760
  %4108 = vmatpush.msra.mxu0 %v4107
  %v4109 = vand.u32 %v2151, 4294901760
  %v4110 = vsub.f32 %v2151, %v4109
  %v4111 = vand.u32 %v4110, 4294901760
  %v4112 = vsub.f32 %v4110, %v4111
  %v4113 = vand.u32 %v4112, 4294901760
  %4114 = vmatpush.msra.mxu0 %v4113
  %v4115 = vand.u32 %v2150, 4294901760
  %v4116 = vsub.f32 %v2150, %v4115
  %v4117 = vand.u32 %v4116, 4294901760
  %v4118 = vsub.f32 %v4116, %v4117
  %v4119 = vand.u32 %v4118, 4294901760
  %4120 = vmatpush.msra.mxu0 %v4119
  %v4121 = vand.u32 %v4054, 4294901760
  %4122 = vmatmul.f32.gmra.mxu0 %v4121
  %v4123 = vpop.f32.mrf.mxu0
  %v4124 = vadd.f32 %v4083, %v4123
  %4125 = vdwg.mxu0
  %4126 = vmatpush.msra.mxu0 0.0
  %4127 = vmatpush.msra.mxu0 0.0
  %4128 = vmatpush.msra.mxu0 0.0
  %4129 = vmatpush.msra.mxu0 0.0
  %4130 = vmatpush.msra.mxu0 0.0
  %4131 = vmatpush.msra.mxu0 0.0
  %4132 = vmatpush.msra.mxu0 0.0
  %4133 = vmatpush.msra.mxu0 0.0
  %4134 = vmatpush.msra.mxu0 0.0
  %4135 = vmatpush.msra.mxu0 0.0
  %4136 = vmatpush.msra.mxu0 0.0
  %4137 = vmatpush.msra.mxu0 0.0
  %v4138 = vand.u32 %v2153, 4294901760
  %v4139 = vsub.f32 %v2153, %v4138
  %4140 = vmatpush.msra.mxu0 %v4139
  %v4141 = vand.u32 %v2152, 4294901760
  %v4142 = vsub.f32 %v2152, %v4141
  %4143 = vmatpush.msra.mxu0 %v4142
  %v4144 = vand.u32 %v2151, 4294901760
  %v4145 = vsub.f32 %v2151, %v4144
  %4146 = vmatpush.msra.mxu0 %v4145
  %v4147 = vand.u32 %v2150, 4294901760
  %v4148 = vsub.f32 %v2150, %v4147
  %4149 = vmatpush.msra.mxu0 %v4148
  %v4150 = vand.u32 %v4054, 4294901760
  %v4151 = vsub.f32 %v4054, %v4150
  %4152 = vmatmul.f32.gmra.mxu0 %v4151
  %v4153 = vpop.f32.mrf.mxu0
  %v4154 = vadd.f32 %v4124, %v4153
  %4155 = vdwg.mxu0
  %4156 = vmatpush.msra.mxu0 0.0
  %4157 = vmatpush.msra.mxu0 0.0
  %4158 = vmatpush.msra.mxu0 0.0
  %4159 = vmatpush.msra.mxu0 0.0
  %4160 = vmatpush.msra.mxu0 0.0
  %4161 = vmatpush.msra.mxu0 0.0
  %4162 = vmatpush.msra.mxu0 0.0
  %4163 = vmatpush.msra.mxu0 0.0
  %4164 = vmatpush.msra.mxu0 0.0
  %4165 = vmatpush.msra.mxu0 0.0
  %4166 = vmatpush.msra.mxu0 0.0
  %4167 = vmatpush.msra.mxu0 0.0
  %v4168 = vand.u32 %v2153, 4294901760
  %4169 = vmatpush.msra.mxu0 %v4168
  %v4170 = vand.u32 %v2152, 4294901760
  %4171 = vmatpush.msra.mxu0 %v4170
  %v4172 = vand.u32 %v2151, 4294901760
  %4173 = vmatpush.msra.mxu0 %v4172
  %v4174 = vand.u32 %v2150, 4294901760
  %4175 = vmatpush.msra.mxu0 %v4174
  %v4176 = vand.u32 %v4054, 4294901760
  %v4177 = vsub.f32 %v4054, %v4176
  %v4178 = vand.u32 %v4177, 4294901760
  %4179 = vmatmul.f32.gmra.mxu0 %v4178
  %v4180 = vpop.f32.mrf.mxu0
  %v4181 = vadd.f32 %v4154, %v4180
  %4182 = vdwg.mxu0
  %4183 = vmatpush.msra.mxu0 0.0
  %4184 = vmatpush.msra.mxu0 0.0
  %4185 = vmatpush.msra.mxu0 0.0
  %4186 = vmatpush.msra.mxu0 0.0
  %4187 = vmatpush.msra.mxu0 0.0
  %4188 = vmatpush.msra.mxu0 0.0
  %4189 = vmatpush.msra.mxu0 0.0
  %4190 = vmatpush.msra.mxu0 0.0
  %4191 = vmatpush.msra.mxu0 0.0
  %4192 = vmatpush.msra.mxu0 0.0
  %4193 = vmatpush.msra.mxu0 0.0
  %4194 = vmatpush.msra.mxu0 0.0
  %v4195 = vand.u32 %v2153, 4294901760
  %v4196 = vsub.f32 %v2153, %v4195
  %v4197 = vand.u32 %v4196, 4294901760
  %4198 = vmatpush.msra.mxu0 %v4197
  %v4199 = vand.u32 %v2152, 4294901760
  %v4200 = vsub.f32 %v2152, %v4199
  %v4201 = vand.u32 %v4200, 4294901760
  %4202 = vmatpush.msra.mxu0 %v4201
  %v4203 = vand.u32 %v2151, 4294901760
  %v4204 = vsub.f32 %v2151, %v4203
  %v4205 = vand.u32 %v4204, 4294901760
  %4206 = vmatpush.msra.mxu0 %v4205
  %v4207 = vand.u32 %v2150, 4294901760
  %v4208 = vsub.f32 %v2150, %v4207
  %v4209 = vand.u32 %v4208, 4294901760
  %4210 = vmatpush.msra.mxu0 %v4209
  %v4211 = vand.u32 %v4054, 4294901760
  %4212 = vmatmul.f32.gmra.mxu0 %v4211
  %v4213 = vpop.f32.mrf.mxu0
  %v4214 = vadd.f32 %v4181, %v4213
  %4215 = vdwg.mxu0
  %4216 = vmatpush.msra.mxu0 0.0
  %4217 = vmatpush.msra.mxu0 0.0
  %4218 = vmatpush.msra.mxu0 0.0
  %4219 = vmatpush.msra.mxu0 0.0
  %4220 = vmatpush.msra.mxu0 0.0
  %4221 = vmatpush.msra.mxu0 0.0
  %4222 = vmatpush.msra.mxu0 0.0
  %4223 = vmatpush.msra.mxu0 0.0
  %4224 = vmatpush.msra.mxu0 0.0
  %4225 = vmatpush.msra.mxu0 0.0
  %4226 = vmatpush.msra.mxu0 0.0
  %4227 = vmatpush.msra.mxu0 0.0
  %v4228 = vand.u32 %v2153, 4294901760
  %4229 = vmatpush.msra.mxu0 %v4228
  %v4230 = vand.u32 %v2152, 4294901760
  %4231 = vmatpush.msra.mxu0 %v4230
  %v4232 = vand.u32 %v2151, 4294901760
  %4233 = vmatpush.msra.mxu0 %v4232
  %v4234 = vand.u32 %v2150, 4294901760
  %4235 = vmatpush.msra.mxu0 %v4234
  %v4236 = vand.u32 %v4054, 4294901760
  %4237 = vmatmul.f32.gmra.mxu0 %v4236
  %v4238 = vpop.f32.mrf.mxu0
  %v4239 = vadd.f32 %v4214, %v4238
  %4240 = vdwg.mxu0
  %v4241 = vadd.f32 %v2563, %v4239
  %v4242 = vmul.f32 %v4241, %v37
  %v4243 = vtanh.pop %v4242
  %v4244 = vadd.f32 %v4243, 1.0
  %v4245 = vmul.f32 %v4244, 0.5
  %v4246 = vsel %vm36, %v4243, %v4245
  %v4247 = vmul.f32 %v4246, %v4044
  %4249 = vrot.lane.b32.xlu0 %v4246, 64
  %v4250 = vpop.permute.xlu0 %4249
  %v4252 = vmul.f32 %v4246, %v4250
  %4254 = vrot.lane.b32.xlu0 %v4252, 32
  %v4255 = vpop.permute.xlu0 %4254
  %v4257 = vadd.f32 %v4247, %v4255
  %v4258 = vtanh.pop %v4257
  %4260 = vrot.lane.b32.xlu0 %v4258, 64
  %v4261 = vpop.permute.xlu0 %4260
  %v4263 = vmul.f32 %v4246, %v4261
  %v4264 = vld [vmem:[%s7] sm:$0xff]
  %v4265 = vld [vmem:[%s7 + $0x8] sm:$0xff]
  %v4266 = vld [vmem:[%s7 + $0x10] sm:$0xff]
  %v4267 = vld [vmem:[%s7 + $0x18] sm:$0xff]
  %v4268 = vld [vmem:[%s8] sm:$0x1]
  %v4270 = vperm.slane %v4268, 0
  %4273 = vrot.lane.b32.xlu0 %v4263, 32
  %v4274 = vpop.permute.xlu0 %4273
  %v4275 = vsel %vm443, %v4274, 0
  %4277 = vmatpush.msra.mxu0 0.0
  %4278 = vmatpush.msra.mxu0 0.0
  %4279 = vmatpush.msra.mxu0 0.0
  %4280 = vmatpush.msra.mxu0 0.0
  %4281 = vmatpush.msra.mxu0 0.0
  %4282 = vmatpush.msra.mxu0 0.0
  %4283 = vmatpush.msra.mxu0 0.0
  %4284 = vmatpush.msra.mxu0 0.0
  %4285 = vmatpush.msra.mxu0 0.0
  %4286 = vmatpush.msra.mxu0 0.0
  %4287 = vmatpush.msra.mxu0 0.0
  %4288 = vmatpush.msra.mxu0 0.0
  %v4289 = vand.u32 %v4267, 4294901760
  %4290 = vmatpush.msra.mxu0 %v4289
  %v4291 = vand.u32 %v4266, 4294901760
  %4292 = vmatpush.msra.mxu0 %v4291
  %v4293 = vand.u32 %v4265, 4294901760
  %4294 = vmatpush.msra.mxu0 %v4293
  %v4295 = vand.u32 %v4264, 4294901760
  %4296 = vmatpush.msra.mxu0 %v4295
  %v4297 = vand.u32 %v4275, 4294901760
  %v4298 = vsub.f32 %v4275, %v4297
  %v4299 = vand.u32 %v4298, 4294901760
  %v4300 = vsub.f32 %v4298, %v4299
  %v4301 = vand.u32 %v4300, 4294901760
  %4302 = vmatmul.f32.gmra.mxu0 %v4301
  %v4303 = vpop.f32.mrf.mxu0
  %v4304 = vadd.f32 %v4270, %v4303
  %4305 = vdwg.mxu0
  %4306 = vmatpush.msra.mxu0 0.0
  %4307 = vmatpush.msra.mxu0 0.0
  %4308 = vmatpush.msra.mxu0 0.0
  %4309 = vmatpush.msra.mxu0 0.0
  %4310 = vmatpush.msra.mxu0 0.0
  %4311 = vmatpush.msra.mxu0 0.0
  %4312 = vmatpush.msra.mxu0 0.0
  %4313 = vmatpush.msra.mxu0 0.0
  %4314 = vmatpush.msra.mxu0 0.0
  %4315 = vmatpush.msra.mxu0 0.0
  %4316 = vmatpush.msra.mxu0 0.0
  %4317 = vmatpush.msra.mxu0 0.0
  %v4318 = vand.u32 %v4267, 4294901760
  %v4319 = vsub.f32 %v4267, %v4318
  %v4320 = vand.u32 %v4319, 4294901760
  %v4321 = vsub.f32 %v4319, %v4320
  %v4322 = vand.u32 %v4321, 4294901760
  %4323 = vmatpush.msra.mxu0 %v4322
  %v4324 = vand.u32 %v4266, 4294901760
  %v4325 = vsub.f32 %v4266, %v4324
  %v4326 = vand.u32 %v4325, 4294901760
  %v4327 = vsub.f32 %v4325, %v4326
  %v4328 = vand.u32 %v4327, 4294901760
  %4329 = vmatpush.msra.mxu0 %v4328
  %v4330 = vand.u32 %v4265, 4294901760
  %v4331 = vsub.f32 %v4265, %v4330
  %v4332 = vand.u32 %v4331, 4294901760
  %v4333 = vsub.f32 %v4331, %v4332
  %v4334 = vand.u32 %v4333, 4294901760
  %4335 = vmatpush.msra.mxu0 %v4334
  %v4336 = vand.u32 %v4264, 4294901760
  %v4337 = vsub.f32 %v4264, %v4336
  %v4338 = vand.u32 %v4337, 4294901760
  %v4339 = vsub.f32 %v4337, %v4338
  %v4340 = vand.u32 %v4339, 4294901760
  %4341 = vmatpush.msra.mxu0 %v4340
  %v4342 = vand.u32 %v4275, 4294901760
  %4343 = vmatmul.f32.gmra.mxu0 %v4342
  %v4344 = vpop.f32.mrf.mxu0
  %v4345 = vadd.f32 %v4304, %v4344
  %4346 = vdwg.mxu0
  %4347 = vmatpush.msra.mxu0 0.0
  %4348 = vmatpush.msra.mxu0 0.0
  %4349 = vmatpush.msra.mxu0 0.0
  %4350 = vmatpush.msra.mxu0 0.0
  %4351 = vmatpush.msra.mxu0 0.0
  %4352 = vmatpush.msra.mxu0 0.0
  %4353 = vmatpush.msra.mxu0 0.0
  %4354 = vmatpush.msra.mxu0 0.0
  %4355 = vmatpush.msra.mxu0 0.0
  %4356 = vmatpush.msra.mxu0 0.0
  %4357 = vmatpush.msra.mxu0 0.0
  %4358 = vmatpush.msra.mxu0 0.0
  %v4359 = vand.u32 %v4267, 4294901760
  %v4360 = vsub.f32 %v4267, %v4359
  %4361 = vmatpush.msra.mxu0 %v4360
  %v4362 = vand.u32 %v4266, 4294901760
  %v4363 = vsub.f32 %v4266, %v4362
  %4364 = vmatpush.msra.mxu0 %v4363
  %v4365 = vand.u32 %v4265, 4294901760
  %v4366 = vsub.f32 %v4265, %v4365
  %4367 = vmatpush.msra.mxu0 %v4366
  %v4368 = vand.u32 %v4264, 4294901760
  %v4369 = vsub.f32 %v4264, %v4368
  %4370 = vmatpush.msra.mxu0 %v4369
  %v4371 = vand.u32 %v4275, 4294901760
  %v4372 = vsub.f32 %v4275, %v4371
  %4373 = vmatmul.f32.gmra.mxu0 %v4372
  %v4374 = vpop.f32.mrf.mxu0
  %v4375 = vadd.f32 %v4345, %v4374
  %4376 = vdwg.mxu0
  %4377 = vmatpush.msra.mxu0 0.0
  %4378 = vmatpush.msra.mxu0 0.0
  %4379 = vmatpush.msra.mxu0 0.0
  %4380 = vmatpush.msra.mxu0 0.0
  %4381 = vmatpush.msra.mxu0 0.0
  %4382 = vmatpush.msra.mxu0 0.0
  %4383 = vmatpush.msra.mxu0 0.0
  %4384 = vmatpush.msra.mxu0 0.0
  %4385 = vmatpush.msra.mxu0 0.0
  %4386 = vmatpush.msra.mxu0 0.0
  %4387 = vmatpush.msra.mxu0 0.0
  %4388 = vmatpush.msra.mxu0 0.0
  %v4389 = vand.u32 %v4267, 4294901760
  %4390 = vmatpush.msra.mxu0 %v4389
  %v4391 = vand.u32 %v4266, 4294901760
  %4392 = vmatpush.msra.mxu0 %v4391
  %v4393 = vand.u32 %v4265, 4294901760
  %4394 = vmatpush.msra.mxu0 %v4393
  %v4395 = vand.u32 %v4264, 4294901760
  %4396 = vmatpush.msra.mxu0 %v4395
  %v4397 = vand.u32 %v4275, 4294901760
  %v4398 = vsub.f32 %v4275, %v4397
  %v4399 = vand.u32 %v4398, 4294901760
  %4400 = vmatmul.f32.gmra.mxu0 %v4399
  %v4401 = vpop.f32.mrf.mxu0
  %v4402 = vadd.f32 %v4375, %v4401
  %4403 = vdwg.mxu0
  %4404 = vmatpush.msra.mxu0 0.0
  %4405 = vmatpush.msra.mxu0 0.0
  %4406 = vmatpush.msra.mxu0 0.0
  %4407 = vmatpush.msra.mxu0 0.0
  %4408 = vmatpush.msra.mxu0 0.0
  %4409 = vmatpush.msra.mxu0 0.0
  %4410 = vmatpush.msra.mxu0 0.0
  %4411 = vmatpush.msra.mxu0 0.0
  %4412 = vmatpush.msra.mxu0 0.0
  %4413 = vmatpush.msra.mxu0 0.0
  %4414 = vmatpush.msra.mxu0 0.0
  %4415 = vmatpush.msra.mxu0 0.0
  %v4416 = vand.u32 %v4267, 4294901760
  %v4417 = vsub.f32 %v4267, %v4416
  %v4418 = vand.u32 %v4417, 4294901760
  %4419 = vmatpush.msra.mxu0 %v4418
  %v4420 = vand.u32 %v4266, 4294901760
  %v4421 = vsub.f32 %v4266, %v4420
  %v4422 = vand.u32 %v4421, 4294901760
  %4423 = vmatpush.msra.mxu0 %v4422
  %v4424 = vand.u32 %v4265, 4294901760
  %v4425 = vsub.f32 %v4265, %v4424
  %v4426 = vand.u32 %v4425, 4294901760
  %4427 = vmatpush.msra.mxu0 %v4426
  %v4428 = vand.u32 %v4264, 4294901760
  %v4429 = vsub.f32 %v4264, %v4428
  %v4430 = vand.u32 %v4429, 4294901760
  %4431 = vmatpush.msra.mxu0 %v4430
  %v4432 = vand.u32 %v4275, 4294901760
  %4433 = vmatmul.f32.gmra.mxu0 %v4432
  %v4434 = vpop.f32.mrf.mxu0
  %v4435 = vadd.f32 %v4402, %v4434
  %4436 = vdwg.mxu0
  %4437 = vmatpush.msra.mxu0 0.0
  %4438 = vmatpush.msra.mxu0 0.0
  %4439 = vmatpush.msra.mxu0 0.0
  %4440 = vmatpush.msra.mxu0 0.0
  %4441 = vmatpush.msra.mxu0 0.0
  %4442 = vmatpush.msra.mxu0 0.0
  %4443 = vmatpush.msra.mxu0 0.0
  %4444 = vmatpush.msra.mxu0 0.0
  %4445 = vmatpush.msra.mxu0 0.0
  %4446 = vmatpush.msra.mxu0 0.0
  %4447 = vmatpush.msra.mxu0 0.0
  %4448 = vmatpush.msra.mxu0 0.0
  %v4449 = vand.u32 %v4267, 4294901760
  %4450 = vmatpush.msra.mxu0 %v4449
  %v4451 = vand.u32 %v4266, 4294901760
  %4452 = vmatpush.msra.mxu0 %v4451
  %v4453 = vand.u32 %v4265, 4294901760
  %4454 = vmatpush.msra.mxu0 %v4453
  %v4455 = vand.u32 %v4264, 4294901760
  %4456 = vmatpush.msra.mxu0 %v4455
  %v4457 = vand.u32 %v4275, 4294901760
  %4458 = vmatmul.f32.gmra.mxu0 %v4457
  %v4459 = vpop.f32.mrf.mxu0
  %v4460 = vadd.f32 %v4435, %v4459
  %4461 = vdwg.mxu0
  %vm4462 = vcmp.eq.s32.totalorder %v33, 0
  %v4463 = vxor.u32 %v4460, 2147483648
  %v4464 = vmul.f32 %v4463, 1.442695
  %v4465 = vpow.pop %v4464
  %v4466 = vadd.f32 %v4465, 1.0
  %v4467 = vrcp.pop %v4466
  %v4468 = vmul.f32 %v4466, %v4467
  %v4469 = vsub.f32 1.0, %v4468
  %v4470 = vmul.f32 %v4467, %v4469
  %v4471 = vadd.f32 %v4467, %v4470
  %vm4472 = vweird.f32 %v4466
  %vm4473 = vweird.f32 %v4467
  %vm4474 = vmor %vm4472, %vm4473
  %v4475 = vsel %vm4474, %v4467, %v4471
  %v4476 = vand.u32 2147483647, %v4466
  %vm4477 = vcmp.eq.f32.partialorder %v4476, 8.507059e+37
  %v4478 = vand.u32 %v4466, 2147483648
  %v4479 = vor.u32 1.1754944e-38, %v4478
  %v4480 = vsel %vm4477, %v4479, %v4475
  %v4481 = vmul.f32 1.0, %v4480
  %v4482 = vsel %vm4462, %v4481, %v4460
  %vm4483 = vcmask 15360
  %4484 = vst.msk [vmem:[%s9] sm:$0xff] %vm4483, %v4482
  // Predicated region
  $region38: #{stock_lstm_forward.1} parent=0 // pred_check
    _
  $region39: #{stock_lstm_forward.1} parent=0 // pred_check_branch
    %4486 = sbr.rel (0) target = $region41
  $region40: #{stock_lstm_forward.1} parent=0 // pred_region
    _
  $region41: #{stock_lstm_forward.1} parent=0 // pred_fallthru
    _
  // Predicated region
  $region42: #{stock_lstm_forward.1} parent=0 // pred_check
    _
  $region43: #{stock_lstm_forward.1} parent=0 // pred_check_branch
    %4488 = sbr.rel (0) target = $region45
  $region44: #{stock_lstm_forward.1} parent=0 // pred_region
    _
  $region45: #{stock_lstm_forward.1} parent=0 // pred_fallthru
    _

</llo_original>
